<compile_context>
chip_gen: v7x
topology: tpu7x:2x2x1
jax: 0.10.0
libtpu: 0.0.40
codegen_flags: <defaults>
</compile_context>

<pallas_src>
import functools

import jax
import jax.numpy as jnp
from jax.experimental import pallas as pl
from jax.experimental.pallas import tpu as pltpu

_EPS = 1e-5  # PyTorch InstanceNorm2d default


# ---------------------------------------------------------------------------
# In-kernel helpers (traced inside the Pallas body)
# ---------------------------------------------------------------------------
def _reflect_pad_into(xp_ref, img):
    """Write img (H, W, C) into xp_ref (H+2, W+2, C) with a 1-px reflection halo.

    Matches PyTorch ReflectionPad2d(1).  Assumes H >= 3 and W >= 3.
    """
    H, W, _ = img.shape
    v = img.astype(xp_ref.dtype)
    xp_ref[1:H + 1, 1:W + 1, :] = v                         # interior
    xp_ref[0:1, 1:W + 1, :] = v[1:2, :, :]                  # top row    <- x[1]
    xp_ref[H + 1:H + 2, 1:W + 1, :] = v[H - 2:H - 1, :, :]  # bottom row <- x[H-2]
    # columns after rows, so corners come out right
    xp_ref[:, 0:1, :] = xp_ref[:, 2:3, :]                   # left  col <- col 2
    xp_ref[:, W + 1:W + 2, :] = xp_ref[:, W - 1:W, :]       # right col <- col W-1


def _conv3x3(xp_ref, w_ref, H, W, C, k_fold):
    """3x3 "valid" conv over the padded scratch.  Returns f32 (H*W, C).

    k_fold == 9 : single matmul, K = 9*C (weights (9C, C))  -> v6e / v7x.
    k_fold == 1 : 9 per-tap matmuls, K = C (weights (9, C, C)) -> v5e.
    No bias: it is cancelled by the following InstanceNorm.
    """
    if k_fold == 9:
        taps = [xp_ref[ky:ky + H, kx:kx + W, :]
                for ky in range(3) for kx in range(3)]
        slab = jnp.concatenate(taps, axis=-1).reshape(H * W, 9 * C)
        return jnp.dot(slab, w_ref[...], preferred_element_type=jnp.float32)

    acc = jnp.zeros((H * W, C), jnp.float32)
    t = 0
    for ky in range(3):
        for kx in range(3):
            tap = xp_ref[ky:ky + H, kx:kx + W, :].reshape(H * W, C)
            acc = acc + jnp.dot(tap, w_ref[t],
                                preferred_element_type=jnp.float32)
            t += 1
    return acc


def _instance_norm(y, gamma, beta, inv_hw):
    """y: (H*W, C) f32.  Fused stats (sum + sumsq) and a single FMA normalize."""
    s = jnp.sum(y, axis=0, keepdims=True)
    ss = jnp.sum(y * y, axis=0, keepdims=True)
    mean = s * inv_hw
    var = jnp.maximum(ss * inv_hw - mean * mean, 0.0)
    scale = gamma * jax.lax.rsqrt(var + _EPS)
    shift = beta - mean * scale
    return y * scale + shift


# ---------------------------------------------------------------------------
# Fused Pallas kernel: one batch image per grid step, everything stays in VMEM
# ---------------------------------------------------------------------------
def residual_block_kernel(x_ref, w1_ref, g1_ref, bt1_ref,
                          w2_ref, g2_ref, bt2_ref,
                          o_ref, xp_ref, *, k_fold):
    H, W, C = x_ref.shape
    inv_hw = jnp.float32(1.0 / (H * W))

    # ---- stage 1: reflect-pad -> conv3x3 -> InstanceNorm -> ReLU -------------
    _reflect_pad_into(xp_ref, x_ref[...])
    y = _conv3x3(xp_ref, w1_ref, H, W, C, k_fold)
    y = _instance_norm(y, g1_ref[...], bt1_ref[...], inv_hw)
    y = jnp.maximum(y, 0.0)

    # ---- stage 2: reflect-pad -> conv3x3 -> InstanceNorm -> residual add -----
    # NOTE: stage-1 activation is cast to the matmul dtype when written into
    # the scratch; this is the only extra quantization versus the reference.
    _reflect_pad_into(xp_ref, y.reshape(H, W, C))           # scratch reused
    y = _conv3x3(xp_ref, w2_ref, H, W, C, k_fold)
    y = _instance_norm(y, g2_ref[...], bt2_ref[...], inv_hw)
    # residual: re-read x_ref here (already VMEM-resident) instead of holding
    # a full f32 copy live across both conv stages.
    o_ref[...] = (y.reshape(H, W, C) + x_ref[...]).astype(o_ref.dtype)


# ---------------------------------------------------------------------------
# Wrapper helpers
# ---------------------------------------------------------------------------
def _prep_conv_weight(w, mm_dtype, k_fold):
    """(3, 3, Cin, Cout) HWIO -> (9*Cin, Cout) if k_fold==9, else (9, Cin, Cout)."""
    kh, kw, ci, co = w.shape
    if k_fold == 9:
        return w.reshape(kh * kw * ci, co).astype(mm_dtype)
    return w.reshape(kh * kw, ci, co).astype(mm_dtype)


def _tpu_vmem_capacity_bytes(default=64 * 1024 * 1024):
    """Physical VMEM per core; conservative 64 MiB fallback (v7x-safe)."""
    try:
        return int(pltpu.get_tpu_info().vmem_capacity_bytes)
    except Exception:
        return default


def _default_k_fold():
    """K folding per MXU depth: per-tap K=C on v5e (128-deep), K=9C otherwise."""
    try:
        info = pltpu.get_tpu_info()
        if "v5" in repr(info).lower():
            return 1
    except Exception:
        pass
    return 9


def _vmem_limit_bytes(H, W, C, mm_bytes, k_fold):
    f32 = 4
    img = H * W * C * f32
    pad = (H + 2) * (W + 2) * C * mm_bytes
    slab = H * W * (9 if k_fold == 9 else 1) * C * mm_bytes
    acc = H * W * C * f32
    wts = 2 * 9 * C * C * mm_bytes
    # in x2 + out x2 double buffers + padded scratch + slab + f32 temps + weights + slack
    est = 2 * img + 2 * img + pad + slab + 2 * acc + wts + (2 << 20)
    cap = int(0.9 * _tpu_vmem_capacity_bytes())   # never exceed physical VMEM (v7x: 64 MiB)
    return int(min(max(2 * est, 32 * 1024 * 1024), cap))


@functools.partial(jax.jit, static_argnames=("matmul_dtype", "k_fold"))
def residual_block_forward(x_nchw, params, *, matmul_dtype=jnp.bfloat16,
                           k_fold=None):
    """x_nchw: (N, C, H, W) float32 -> (N, C, H, W) float32 (PyTorch semantics)."""
    if k_fold is None:
        k_fold = _default_k_fold()

    x = jnp.transpose(x_nchw, (0, 2, 3, 1)).astype(jnp.float32)  # NHWC
    N, H, W, C = x.shape

    w1 = _prep_conv_weight(params["w1"], matmul_dtype, k_fold)
    w2 = _prep_conv_weight(params["w2"], matmul_dtype, k_fold)
    # conv biases b1/b2 are intentionally NOT plumbed: cancelled by InstanceNorm.
    g1 = params["g1"].reshape(1, C).astype(jnp.float32)
    bt1 = params["bt1"].reshape(1, C).astype(jnp.float32)
    g2 = params["g2"].reshape(1, C).astype(jnp.float32)
    bt2 = params["bt2"].reshape(1, C).astype(jnp.float32)

    img_spec = pl.BlockSpec((None, H, W, C), lambda n: (n, 0, 0, 0))
    if k_fold == 9:
        w_spec = pl.BlockSpec((9 * C, C), lambda n: (0, 0))
    else:
        w_spec = pl.BlockSpec((9, C, C), lambda n: (0, 0, 0))
    vec_spec = pl.BlockSpec((1, C), lambda n: (0, 0))

    mm_bytes = jnp.dtype(matmul_dtype).itemsize
    cparams = pltpu.CompilerParams(
        dimension_semantics=("parallel",),
        vmem_limit_bytes=_vmem_limit_bytes(H, W, C, mm_bytes, k_fold),
    )
    cost = pl.CostEstimate(
        flops=2 * 2 * 9 * H * W * C * C * N,          # 2 stages, 2 flops/MAC
        transcendentals=2 * N * C,                    # rsqrt per channel/stage
        bytes_accessed=2 * N * H * W * C * 4 + 2 * 9 * C * C * mm_bytes,
    )

    kernel = functools.partial(residual_block_kernel, k_fold=k_fold)

    out = pl.pallas_call(
        kernel,
        grid=(N,),
        in_specs=[img_spec,
                  w_spec, vec_spec, vec_spec,
                  w_spec, vec_spec, vec_spec],
        out_specs=img_spec,
        out_shape=jax.ShapeDtypeStruct((N, H, W, C), jnp.float32),
        scratch_shapes=[pltpu.VMEM((H + 2, W + 2, C), matmul_dtype)],
        compiler_params=cparams,
        cost_estimate=cost,
    )(x, w1, g1, bt1, w2, g2, bt2)

    return jnp.transpose(out, (0, 3, 1, 2))  # back to NCHW


# ---------------------------------------------------------------------------
# Pure-JAX reference (correctness checking only; keeps the conv biases to
# demonstrate they are exactly cancelled by InstanceNorm)
# ---------------------------------------------------------------------------
def _ref_reflect_pad(x):
    return jnp.pad(x, ((0, 0), (1, 1), (1, 1), (0, 0)), mode="reflect")


def _ref_conv3x3(x, w, b):
    xp = _ref_reflect_pad(x)
    y = jax.lax.conv_general_dilated(
        xp, w, window_strides=(1, 1), padding="VALID",
        dimension_numbers=("NHWC", "HWIO", "NHWC"),
        precision=jax.lax.Precision.HIGHEST,
    )
    return y + b.reshape(1, 1, 1, -1)


def _ref_instance_norm(y, g, b):
    mean = jnp.mean(y, axis=(1, 2), keepdims=True)
    var = jnp.mean((y - mean) ** 2, axis=(1, 2), keepdims=True)
    return (y - mean) * jax.lax.rsqrt(var + _EPS) * g.reshape(1, 1, 1, -1) \
        + b.reshape(1, 1, 1, -1)


def residual_block_reference(x_nchw, params):
    x = jnp.transpose(x_nchw, (0, 2, 3, 1)).astype(jnp.float32)
    y = _ref_conv3x3(x, params["w1"], params["b1"])
    y = _ref_instance_norm(y, params["g1"], params["bt1"])
    y = jnp.maximum(y, 0.0)
    y = _ref_conv3x3(y, params["w2"], params["b2"])
    y = _ref_instance_norm(y, params["g2"], params["bt2"])
    return jnp.transpose(y + x, (0, 3, 1, 2))


# ---------------------------------------------------------------------------
def init_params(key, channels):
    ks = jax.random.split(key, 8)
    C = channels
    return {
        "w1": 0.1 * jax.random.normal(ks[0], (3, 3, C, C), jnp.float32),
        "b1": 0.1 * jax.random.normal(ks[1], (C,), jnp.float32),
        "g1": 1.0 + 0.1 * jax.random.normal(ks[2], (C,), jnp.float32),
        "bt1": 0.1 * jax.random.normal(ks[3], (C,), jnp.float32),
        "w2": 0.1 * jax.random.normal(ks[4], (3, 3, C, C), jnp.float32),
        "b2": 0.1 * jax.random.normal(ks[5], (C,), jnp.float32),
        "g2": 1.0 + 0.1 * jax.random.normal(ks[6], (C,), jnp.float32),
        "bt2": 0.1 * jax.random.normal(ks[7], (C,), jnp.float32),
    }


if __name__ == "__main__":
    key = jax.random.PRNGKey(0)
    k_x, k_p = jax.random.split(key)

    N, C, H, W = 2, 4, 16, 16  # small, deterministic
    x = jax.random.normal(k_x, (N, C, H, W), jnp.float32)
    params = init_params(k_p, C)

    ref = residual_block_reference(x, params)

    # f32 matmul path, single K=9C matmul: tight tolerance (proves the fused
    # structure -- including the dropped conv bias -- is exact).
    out_f32 = jax.block_until_ready(
        residual_block_forward(x, params, matmul_dtype=jnp.float32, k_fold=9))
    assert out_f32.shape == (N, C, H, W)
    err_f32 = float(jnp.max(jnp.abs(out_f32 - ref)))
    assert jnp.allclose(out_f32, ref, atol=1e-4, rtol=1e-4), (
        f"f32/k9 path max abs err = {err_f32}")

    # f32 matmul path, per-tap K=C accumulation (v5e code path).
    out_k1 = jax.block_until_ready(
        residual_block_forward(x, params, matmul_dtype=jnp.float32, k_fold=1))
    err_k1 = float(jnp.max(jnp.abs(out_k1 - ref)))
    assert jnp.allclose(out_k1, ref, atol=1e-4, rtol=1e-4), (
        f"f32/k1 path max abs err = {err_k1}")

    # bf16 matmul path (default, auto k_fold): f32 accumulation / stats.
    out_bf16 = jax.block_until_ready(residual_block_forward(x, params))
    assert out_bf16.shape == (N, C, H, W)
    err_bf16 = float(jnp.max(jnp.abs(out_bf16 - ref)))
    assert jnp.allclose(out_bf16, ref, atol=5e-2, rtol=5e-2), (
        f"bf16 path max abs err = {err_bf16}")

    print("KERNEL_OK")
</pallas_src>

<mosaic_0001>
module attributes {stable_mosaic.version = 11 : i64} {
  func.func @residual_block_kernel(%arg0: i32, %arg1: memref<1x16x16x4xf32, #tpu.memory_space<vmem>>, %arg2: memref<36x4xf32, #tpu.memory_space<vmem>>, %arg3: memref<1x4xf32, #tpu.memory_space<vmem>>, %arg4: memref<1x4xf32, #tpu.memory_space<vmem>>, %arg5: memref<36x4xf32, #tpu.memory_space<vmem>>, %arg6: memref<1x4xf32, #tpu.memory_space<vmem>>, %arg7: memref<1x4xf32, #tpu.memory_space<vmem>>, %arg8: memref<1x16x16x4xf32, #tpu.memory_space<vmem>>, %arg9: memref<18x18x4xf32, #tpu.memory_space<vmem>>) attributes {dimension_semantics = [#tpu.dimension_semantics<parallel>], iteration_bounds = array<i64: 2>, scalar_prefetch = 0 : i64, scratch_operands = 1 : i64, tpu.core_type = #tpu.core_type<tc>, window_params = [{transform_indices = @transform_0, window_bounds = array<i64: 1, 16, 16, 4>}, {pipeline_mode = #tpu.pipeline_mode<synchronous>, transform_indices = @transform_1, window_bounds = array<i64: 36, 4>}, {pipeline_mode = #tpu.pipeline_mode<synchronous>, transform_indices = @transform_2, window_bounds = array<i64: 1, 4>}, {pipeline_mode = #tpu.pipeline_mode<synchronous>, transform_indices = @transform_3, window_bounds = array<i64: 1, 4>}, {pipeline_mode = #tpu.pipeline_mode<synchronous>, transform_indices = @transform_4, window_bounds = array<i64: 36, 4>}, {pipeline_mode = #tpu.pipeline_mode<synchronous>, transform_indices = @transform_5, window_bounds = array<i64: 1, 4>}, {pipeline_mode = #tpu.pipeline_mode<synchronous>, transform_indices = @transform_6, window_bounds = array<i64: 1, 4>}, {transform_indices = @transform_7, window_bounds = array<i64: 1, 16, 16, 4>}]} {
    %c0 = arith.constant 0 : index
    %c0_0 = arith.constant 0 : index
    %c0_1 = arith.constant 0 : index
    %c0_2 = arith.constant 0 : index
    %0 = vector.load %arg1[%c0, %c0_0, %c0_1, %c0_2] : memref<1x16x16x4xf32, #tpu.memory_space<vmem>>, vector<1x16x16x4xf32>
    %1 = vector.shape_cast %0 : vector<1x16x16x4xf32> to vector<16x16x4xf32>
    %c1 = arith.constant 1 : index
    %c1_3 = arith.constant 1 : index
    %c0_4 = arith.constant 0 : index
    %2 = vector.load %arg9[%c1, %c1_3, %c0_4] : memref<18x18x4xf32, #tpu.memory_space<vmem>>, vector<16x16x4xf32>
    tpu.vector_store %arg9[%c1, %c1_3, %c0_4], %1 {strides = array<i32>} : memref<18x18x4xf32, #tpu.memory_space<vmem>>, vector<16x16x4xf32>,
    %3 = vector.extract_strided_slice %1 {offsets = [1, 0, 0], sizes = [1, 16, 4], strides = [1, 1, 1]} : vector<16x16x4xf32> to vector<1x16x4xf32>
    %c0_5 = arith.constant 0 : index
    %c1_6 = arith.constant 1 : index
    %c0_7 = arith.constant 0 : index
    %4 = vector.load %arg9[%c0_5, %c1_6, %c0_7] : memref<18x18x4xf32, #tpu.memory_space<vmem>>, vector<1x16x4xf32>
    tpu.vector_store %arg9[%c0_5, %c1_6, %c0_7], %3 {strides = array<i32>} : memref<18x18x4xf32, #tpu.memory_space<vmem>>, vector<1x16x4xf32>,
    %5 = vector.extract_strided_slice %1 {offsets = [14, 0, 0], sizes = [1, 16, 4], strides = [1, 1, 1]} : vector<16x16x4xf32> to vector<1x16x4xf32>
    %c17 = arith.constant 17 : index
    %c1_8 = arith.constant 1 : index
    %c0_9 = arith.constant 0 : index
    %6 = vector.load %arg9[%c17, %c1_8, %c0_9] : memref<18x18x4xf32, #tpu.memory_space<vmem>>, vector<1x16x4xf32>
    tpu.vector_store %arg9[%c17, %c1_8, %c0_9], %5 {strides = array<i32>} : memref<18x18x4xf32, #tpu.memory_space<vmem>>, vector<1x16x4xf32>,
    %c0_10 = arith.constant 0 : index
    %c2 = arith.constant 2 : index
    %c0_11 = arith.constant 0 : index
    %7 = vector.load %arg9[%c0_10, %c2, %c0_11] : memref<18x18x4xf32, #tpu.memory_space<vmem>>, vector<18x1x4xf32>
    %c0_12 = arith.constant 0 : index
    %c0_13 = arith.constant 0 : index
    %c0_14 = arith.constant 0 : index
    %8 = vector.load %arg9[%c0_12, %c0_13, %c0_14] : memref<18x18x4xf32, #tpu.memory_space<vmem>>, vector<18x1x4xf32>
    tpu.vector_store %arg9[%c0_12, %c0_13, %c0_14], %7 {strides = array<i32>} : memref<18x18x4xf32, #tpu.memory_space<vmem>>, vector<18x1x4xf32>,
    %c0_15 = arith.constant 0 : index
    %c15 = arith.constant 15 : index
    %c0_16 = arith.constant 0 : index
    %9 = vector.load %arg9[%c0_15, %c15, %c0_16] : memref<18x18x4xf32, #tpu.memory_space<vmem>>, vector<18x1x4xf32>
    %c0_17 = arith.constant 0 : index
    %c17_18 = arith.constant 17 : index
    %c0_19 = arith.constant 0 : index
    %10 = vector.load %arg9[%c0_17, %c17_18, %c0_19] : memref<18x18x4xf32, #tpu.memory_space<vmem>>, vector<18x1x4xf32>
    tpu.vector_store %arg9[%c0_17, %c17_18, %c0_19], %9 {strides = array<i32>} : memref<18x18x4xf32, #tpu.memory_space<vmem>>, vector<18x1x4xf32>,
    %c0_20 = arith.constant 0 : index
    %c0_21 = arith.constant 0 : index
    %c0_22 = arith.constant 0 : index
    %11 = vector.load %arg9[%c0_20, %c0_21, %c0_22] : memref<18x18x4xf32, #tpu.memory_space<vmem>>, vector<16x16x4xf32>
    %c0_23 = arith.constant 0 : index
    %c1_24 = arith.constant 1 : index
    %c0_25 = arith.constant 0 : index
    %12 = vector.load %arg9[%c0_23, %c1_24, %c0_25] : memref<18x18x4xf32, #tpu.memory_space<vmem>>, vector<16x16x4xf32>
    %c0_26 = arith.constant 0 : index
    %c2_27 = arith.constant 2 : index
    %c0_28 = arith.constant 0 : index
    %13 = vector.load %arg9[%c0_26, %c2_27, %c0_28] : memref<18x18x4xf32, #tpu.memory_space<vmem>>, vector<16x16x4xf32>
    %c1_29 = arith.constant 1 : index
    %c0_30 = arith.constant 0 : index
    %c0_31 = arith.constant 0 : index
    %14 = vector.load %arg9[%c1_29, %c0_30, %c0_31] : memref<18x18x4xf32, #tpu.memory_space<vmem>>, vector<16x16x4xf32>
    %c1_32 = arith.constant 1 : index
    %c1_33 = arith.constant 1 : index
    %c0_34 = arith.constant 0 : index
    %15 = vector.load %arg9[%c1_32, %c1_33, %c0_34] : memref<18x18x4xf32, #tpu.memory_space<vmem>>, vector<16x16x4xf32>
    %c1_35 = arith.constant 1 : index
    %c2_36 = arith.constant 2 : index
    %c0_37 = arith.constant 0 : index
    %16 = vector.load %arg9[%c1_35, %c2_36, %c0_37] : memref<18x18x4xf32, #tpu.memory_space<vmem>>, vector<16x16x4xf32>
    %c2_38 = arith.constant 2 : index
    %c0_39 = arith.constant 0 : index
    %c0_40 = arith.constant 0 : index
    %17 = vector.load %arg9[%c2_38, %c0_39, %c0_40] : memref<18x18x4xf32, #tpu.memory_space<vmem>>, vector<16x16x4xf32>
    %c2_41 = arith.constant 2 : index
    %c1_42 = arith.constant 1 : index
    %c0_43 = arith.constant 0 : index
    %18 = vector.load %arg9[%c2_41, %c1_42, %c0_43] : memref<18x18x4xf32, #tpu.memory_space<vmem>>, vector<16x16x4xf32>
    %c2_44 = arith.constant 2 : index
    %c2_45 = arith.constant 2 : index
    %c0_46 = arith.constant 0 : index
    %19 = vector.load %arg9[%c2_44, %c2_45, %c0_46] : memref<18x18x4xf32, #tpu.memory_space<vmem>>, vector<16x16x4xf32>
    %20 = tpu.concatenate %11, %12, %13, %14, %15, %16, %17, %18, %19 in 2 : vector<16x16x4xf32>, vector<16x16x4xf32>, vector<16x16x4xf32>, vector<16x16x4xf32>, vector<16x16x4xf32>, vector<16x16x4xf32>, vector<16x16x4xf32>, vector<16x16x4xf32>, vector<16x16x4xf32> -> vector<16x16x36xf32>
    %21 = vector.shape_cast %20 : vector<16x16x36xf32> to vector<256x36xf32>
    %c0_47 = arith.constant 0 : index
    %c0_48 = arith.constant 0 : index
    %22 = vector.load %arg2[%c0_47, %c0_48] : memref<36x4xf32, #tpu.memory_space<vmem>>, vector<36x4xf32>
    %cst = arith.constant dense<0.000000e+00> : vector<256x4xf32>
    %23 = tpu.matmul %21, %22, %cst {dimension_numbers = #tpu.dot_dimension_numbers<[1], [0], [0], [1], [0, 0, 1, 1], [], []>} : vector<256x36xf32>, vector<36x4xf32>, vector<256x4xf32> -> vector<256x4xf32>
    %c0_49 = arith.constant 0 : index
    %c0_50 = arith.constant 0 : index
    %24 = vector.load %arg3[%c0_49, %c0_50] : memref<1x4xf32, #tpu.memory_space<vmem>>, vector<1x4xf32>
    %c0_51 = arith.constant 0 : index
    %c0_52 = arith.constant 0 : index
    %25 = vector.load %arg4[%c0_51, %c0_52] : memref<1x4xf32, #tpu.memory_space<vmem>>, vector<1x4xf32>
    %cst_53 = arith.constant dense<0.000000e+00> : vector<4xf32>
    %26 = vector.multi_reduction <add>, %23, %cst_53 [0] : vector<256x4xf32> to vector<4xf32>
    %27 = vector.shape_cast %26 : vector<4xf32> to vector<1x4xf32>
    %28 = arith.mulf %23, %23 : vector<256x4xf32>
    %cst_54 = arith.constant dense<0.000000e+00> : vector<4xf32>
    %29 = vector.multi_reduction <add>, %28, %cst_54 [0] : vector<256x4xf32> to vector<4xf32>
    %30 = vector.shape_cast %29 : vector<4xf32> to vector<1x4xf32>
    %cst_55 = arith.constant 3.906250e-03 : f32
    %31 = vector.broadcast %cst_55 : f32 to vector<1x4xf32>
    %32 = arith.mulf %27, %31 : vector<1x4xf32>
    %cst_56 = arith.constant 3.906250e-03 : f32
    %33 = vector.broadcast %cst_56 : f32 to vector<1x4xf32>
    %34 = arith.mulf %30, %33 : vector<1x4xf32>
    %35 = arith.mulf %32, %32 : vector<1x4xf32>
    %36 = arith.subf %34, %35 : vector<1x4xf32>
    %cst_57 = arith.constant 0.000000e+00 : f32
    %37 = vector.broadcast %cst_57 : f32 to vector<1x4xf32>
    %38 = arith.maximumf %36, %37 : vector<1x4xf32>
    %cst_58 = arith.constant 9.99999974E-6 : f32
    %39 = vector.broadcast %cst_58 : f32 to vector<1x4xf32>
    %40 = arith.addf %38, %39 : vector<1x4xf32>
    %41 = math.rsqrt %40 : vector<1x4xf32>
    %42 = arith.mulf %24, %41 : vector<1x4xf32>
    %43 = arith.mulf %32, %42 : vector<1x4xf32>
    %44 = arith.subf %25, %43 : vector<1x4xf32>
    %45 = vector.broadcast %42 : vector<1x4xf32> to vector<256x4xf32>
    %46 = arith.mulf %23, %45 : vector<256x4xf32>
    %47 = vector.broadcast %44 : vector<1x4xf32> to vector<256x4xf32>
    %48 = arith.addf %46, %47 : vector<256x4xf32>
    %cst_59 = arith.constant 0.000000e+00 : f32
    %49 = vector.broadcast %cst_59 : f32 to vector<256x4xf32>
    %50 = arith.maximumf %48, %49 : vector<256x4xf32>
    %51 = vector.shape_cast %50 : vector<256x4xf32> to vector<16x16x4xf32>
    %c1_60 = arith.constant 1 : index
    %c1_61 = arith.constant 1 : index
    %c0_62 = arith.constant 0 : index
    %52 = vector.load %arg9[%c1_60, %c1_61, %c0_62] : memref<18x18x4xf32, #tpu.memory_space<vmem>>, vector<16x16x4xf32>
    tpu.vector_store %arg9[%c1_60, %c1_61, %c0_62], %51 {strides = array<i32>} : memref<18x18x4xf32, #tpu.memory_space<vmem>>, vector<16x16x4xf32>,
    %53 = vector.extract_strided_slice %51 {offsets = [1, 0, 0], sizes = [1, 16, 4], strides = [1, 1, 1]} : vector<16x16x4xf32> to vector<1x16x4xf32>
    %c0_63 = arith.constant 0 : index
    %c1_64 = arith.constant 1 : index
    %c0_65 = arith.constant 0 : index
    %54 = vector.load %arg9[%c0_63, %c1_64, %c0_65] : memref<18x18x4xf32, #tpu.memory_space<vmem>>, vector<1x16x4xf32>
    tpu.vector_store %arg9[%c0_63, %c1_64, %c0_65], %53 {strides = array<i32>} : memref<18x18x4xf32, #tpu.memory_space<vmem>>, vector<1x16x4xf32>,
    %55 = vector.extract_strided_slice %51 {offsets = [14, 0, 0], sizes = [1, 16, 4], strides = [1, 1, 1]} : vector<16x16x4xf32> to vector<1x16x4xf32>
    %c17_66 = arith.constant 17 : index
    %c1_67 = arith.constant 1 : index
    %c0_68 = arith.constant 0 : index
    %56 = vector.load %arg9[%c17_66, %c1_67, %c0_68] : memref<18x18x4xf32, #tpu.memory_space<vmem>>, vector<1x16x4xf32>
    tpu.vector_store %arg9[%c17_66, %c1_67, %c0_68], %55 {strides = array<i32>} : memref<18x18x4xf32, #tpu.memory_space<vmem>>, vector<1x16x4xf32>,
    %c0_69 = arith.constant 0 : index
    %c2_70 = arith.constant 2 : index
    %c0_71 = arith.constant 0 : index
    %57 = vector.load %arg9[%c0_69, %c2_70, %c0_71] : memref<18x18x4xf32, #tpu.memory_space<vmem>>, vector<18x1x4xf32>
    %c0_72 = arith.constant 0 : index
    %c0_73 = arith.constant 0 : index
    %c0_74 = arith.constant 0 : index
    %58 = vector.load %arg9[%c0_72, %c0_73, %c0_74] : memref<18x18x4xf32, #tpu.memory_space<vmem>>, vector<18x1x4xf32>
    tpu.vector_store %arg9[%c0_72, %c0_73, %c0_74], %57 {strides = array<i32>} : memref<18x18x4xf32, #tpu.memory_space<vmem>>, vector<18x1x4xf32>,
    %c0_75 = arith.constant 0 : index
    %c15_76 = arith.constant 15 : index
    %c0_77 = arith.constant 0 : index
    %59 = vector.load %arg9[%c0_75, %c15_76, %c0_77] : memref<18x18x4xf32, #tpu.memory_space<vmem>>, vector<18x1x4xf32>
    %c0_78 = arith.constant 0 : index
    %c17_79 = arith.constant 17 : index
    %c0_80 = arith.constant 0 : index
    %60 = vector.load %arg9[%c0_78, %c17_79, %c0_80] : memref<18x18x4xf32, #tpu.memory_space<vmem>>, vector<18x1x4xf32>
    tpu.vector_store %arg9[%c0_78, %c17_79, %c0_80], %59 {strides = array<i32>} : memref<18x18x4xf32, #tpu.memory_space<vmem>>, vector<18x1x4xf32>,
    %c0_81 = arith.constant 0 : index
    %c0_82 = arith.constant 0 : index
    %c0_83 = arith.constant 0 : index
    %61 = vector.load %arg9[%c0_81, %c0_82, %c0_83] : memref<18x18x4xf32, #tpu.memory_space<vmem>>, vector<16x16x4xf32>
    %c0_84 = arith.constant 0 : index
    %c1_85 = arith.constant 1 : index
    %c0_86 = arith.constant 0 : index
    %62 = vector.load %arg9[%c0_84, %c1_85, %c0_86] : memref<18x18x4xf32, #tpu.memory_space<vmem>>, vector<16x16x4xf32>
    %c0_87 = arith.constant 0 : index
    %c2_88 = arith.constant 2 : index
    %c0_89 = arith.constant 0 : index
    %63 = vector.load %arg9[%c0_87, %c2_88, %c0_89] : memref<18x18x4xf32, #tpu.memory_space<vmem>>, vector<16x16x4xf32>
    %c1_90 = arith.constant 1 : index
    %c0_91 = arith.constant 0 : index
    %c0_92 = arith.constant 0 : index
    %64 = vector.load %arg9[%c1_90, %c0_91, %c0_92] : memref<18x18x4xf32, #tpu.memory_space<vmem>>, vector<16x16x4xf32>
    %c1_93 = arith.constant 1 : index
    %c1_94 = arith.constant 1 : index
    %c0_95 = arith.constant 0 : index
    %65 = vector.load %arg9[%c1_93, %c1_94, %c0_95] : memref<18x18x4xf32, #tpu.memory_space<vmem>>, vector<16x16x4xf32>
    %c1_96 = arith.constant 1 : index
    %c2_97 = arith.constant 2 : index
    %c0_98 = arith.constant 0 : index
    %66 = vector.load %arg9[%c1_96, %c2_97, %c0_98] : memref<18x18x4xf32, #tpu.memory_space<vmem>>, vector<16x16x4xf32>
    %c2_99 = arith.constant 2 : index
    %c0_100 = arith.constant 0 : index
    %c0_101 = arith.constant 0 : index
    %67 = vector.load %arg9[%c2_99, %c0_100, %c0_101] : memref<18x18x4xf32, #tpu.memory_space<vmem>>, vector<16x16x4xf32>
    %c2_102 = arith.constant 2 : index
    %c1_103 = arith.constant 1 : index
    %c0_104 = arith.constant 0 : index
    %68 = vector.load %arg9[%c2_102, %c1_103, %c0_104] : memref<18x18x4xf32, #tpu.memory_space<vmem>>, vector<16x16x4xf32>
    %c2_105 = arith.constant 2 : index
    %c2_106 = arith.constant 2 : index
    %c0_107 = arith.constant 0 : index
    %69 = vector.load %arg9[%c2_105, %c2_106, %c0_107] : memref<18x18x4xf32, #tpu.memory_space<vmem>>, vector<16x16x4xf32>
    %70 = tpu.concatenate %61, %62, %63, %64, %65, %66, %67, %68, %69 in 2 : vector<16x16x4xf32>, vector<16x16x4xf32>, vector<16x16x4xf32>, vector<16x16x4xf32>, vector<16x16x4xf32>, vector<16x16x4xf32>, vector<16x16x4xf32>, vector<16x16x4xf32>, vector<16x16x4xf32> -> vector<16x16x36xf32>
    %71 = vector.shape_cast %70 : vector<16x16x36xf32> to vector<256x36xf32>
    %c0_108 = arith.constant 0 : index
    %c0_109 = arith.constant 0 : index
    %72 = vector.load %arg5[%c0_108, %c0_109] : memref<36x4xf32, #tpu.memory_space<vmem>>, vector<36x4xf32>
    %cst_110 = arith.constant dense<0.000000e+00> : vector<256x4xf32>
    %73 = tpu.matmul %71, %72, %cst_110 {dimension_numbers = #tpu.dot_dimension_numbers<[1], [0], [0], [1], [0, 0, 1, 1], [], []>} : vector<256x36xf32>, vector<36x4xf32>, vector<256x4xf32> -> vector<256x4xf32>
    %c0_111 = arith.constant 0 : index
    %c0_112 = arith.constant 0 : index
    %74 = vector.load %arg6[%c0_111, %c0_112] : memref<1x4xf32, #tpu.memory_space<vmem>>, vector<1x4xf32>
    %c0_113 = arith.constant 0 : index
    %c0_114 = arith.constant 0 : index
    %75 = vector.load %arg7[%c0_113, %c0_114] : memref<1x4xf32, #tpu.memory_space<vmem>>, vector<1x4xf32>
    %cst_115 = arith.constant dense<0.000000e+00> : vector<4xf32>
    %76 = vector.multi_reduction <add>, %73, %cst_115 [0] : vector<256x4xf32> to vector<4xf32>
    %77 = vector.shape_cast %76 : vector<4xf32> to vector<1x4xf32>
    %78 = arith.mulf %73, %73 : vector<256x4xf32>
    %cst_116 = arith.constant dense<0.000000e+00> : vector<4xf32>
    %79 = vector.multi_reduction <add>, %78, %cst_116 [0] : vector<256x4xf32> to vector<4xf32>
    %80 = vector.shape_cast %79 : vector<4xf32> to vector<1x4xf32>
    %cst_117 = arith.constant 3.906250e-03 : f32
    %81 = vector.broadcast %cst_117 : f32 to vector<1x4xf32>
    %82 = arith.mulf %77, %81 : vector<1x4xf32>
    %cst_118 = arith.constant 3.906250e-03 : f32
    %83 = vector.broadcast %cst_118 : f32 to vector<1x4xf32>
    %84 = arith.mulf %80, %83 : vector<1x4xf32>
    %85 = arith.mulf %82, %82 : vector<1x4xf32>
    %86 = arith.subf %84, %85 : vector<1x4xf32>
    %cst_119 = arith.constant 0.000000e+00 : f32
    %87 = vector.broadcast %cst_119 : f32 to vector<1x4xf32>
    %88 = arith.maximumf %86, %87 : vector<1x4xf32>
    %cst_120 = arith.constant 9.99999974E-6 : f32
    %89 = vector.broadcast %cst_120 : f32 to vector<1x4xf32>
    %90 = arith.addf %88, %89 : vector<1x4xf32>
    %91 = math.rsqrt %90 : vector<1x4xf32>
    %92 = arith.mulf %74, %91 : vector<1x4xf32>
    %93 = arith.mulf %82, %92 : vector<1x4xf32>
    %94 = arith.subf %75, %93 : vector<1x4xf32>
    %95 = vector.broadcast %92 : vector<1x4xf32> to vector<256x4xf32>
    %96 = arith.mulf %73, %95 : vector<256x4xf32>
    %97 = vector.broadcast %94 : vector<1x4xf32> to vector<256x4xf32>
    %98 = arith.addf %96, %97 : vector<256x4xf32>
    %99 = vector.shape_cast %98 : vector<256x4xf32> to vector<16x16x4xf32>
    %c0_121 = arith.constant 0 : index
    %c0_122 = arith.constant 0 : index
    %c0_123 = arith.constant 0 : index
    %c0_124 = arith.constant 0 : index
    %100 = vector.load %arg1[%c0_121, %c0_122, %c0_123, %c0_124] : memref<1x16x16x4xf32, #tpu.memory_space<vmem>>, vector<1x16x16x4xf32>
    %101 = vector.shape_cast %100 : vector<1x16x16x4xf32> to vector<16x16x4xf32>
    %102 = arith.addf %99, %101 : vector<16x16x4xf32>
    %c0_125 = arith.constant 0 : index
    %c0_126 = arith.constant 0 : index
    %c0_127 = arith.constant 0 : index
    %c0_128 = arith.constant 0 : index
    %103 = vector.load %arg8[%c0_125, %c0_126, %c0_127, %c0_128] : memref<1x16x16x4xf32, #tpu.memory_space<vmem>>, vector<1x16x16x4xf32>
    %104 = vector.shape_cast %103 : vector<1x16x16x4xf32> to vector<16x16x4xf32>
    %105 = vector.shape_cast %102 : vector<16x16x4xf32> to vector<1x16x16x4xf32>
    tpu.vector_store %arg8[%c0_125, %c0_126, %c0_127, %c0_128], %105 {strides = array<i32>} : memref<1x16x16x4xf32, #tpu.memory_space<vmem>>, vector<1x16x16x4xf32>,
    return
  }
  func.func @transform_0(%arg0: i32) -> (i32, i32, i32, i32) {
    %c0_i32 = arith.constant 0 : i32
    %c0_i32_0 = arith.constant 0 : i32
    %c0_i32_1 = arith.constant 0 : i32
    %c0_i32_2 = arith.constant 0 : i32
    return %arg0, %c0_i32, %c0_i32_0, %c0_i32_1 : i32, i32, i32, i32
  }
  func.func @transform_1(%arg0: i32) -> (i32, i32) {
    %c0_i32 = arith.constant 0 : i32
    %c0_i32_0 = arith.constant 0 : i32
    %c0_i32_1 = arith.constant 0 : i32
    return %c0_i32, %c0_i32_0 : i32, i32
  }
  func.func @transform_2(%arg0: i32) -> (i32, i32) {
    %c0_i32 = arith.constant 0 : i32
    %c0_i32_0 = arith.constant 0 : i32
    %c0_i32_1 = arith.constant 0 : i32
    return %c0_i32, %c0_i32_0 : i32, i32
  }
  func.func @transform_3(%arg0: i32) -> (i32, i32) {
    %c0_i32 = arith.constant 0 : i32
    %c0_i32_0 = arith.constant 0 : i32
    %c0_i32_1 = arith.constant 0 : i32
    return %c0_i32, %c0_i32_0 : i32, i32
  }
  func.func @transform_4(%arg0: i32) -> (i32, i32) {
    %c0_i32 = arith.constant 0 : i32
    %c0_i32_0 = arith.constant 0 : i32
    %c0_i32_1 = arith.constant 0 : i32
    return %c0_i32, %c0_i32_0 : i32, i32
  }
  func.func @transform_5(%arg0: i32) -> (i32, i32) {
    %c0_i32 = arith.constant 0 : i32
    %c0_i32_0 = arith.constant 0 : i32
    %c0_i32_1 = arith.constant 0 : i32
    return %c0_i32, %c0_i32_0 : i32, i32
  }
  func.func @transform_6(%arg0: i32) -> (i32, i32) {
    %c0_i32 = arith.constant 0 : i32
    %c0_i32_0 = arith.constant 0 : i32
    %c0_i32_1 = arith.constant 0 : i32
    return %c0_i32, %c0_i32_0 : i32, i32
  }
  func.func @transform_7(%arg0: i32) -> (i32, i32, i32, i32) {
    %c0_i32 = arith.constant 0 : i32
    %c0_i32_0 = arith.constant 0 : i32
    %c0_i32_1 = arith.constant 0 : i32
    %c0_i32_2 = arith.constant 0 : i32
    return %arg0, %c0_i32, %c0_i32_0, %c0_i32_1 : i32, i32, i32, i32
  }
}

</mosaic_0001>

<llo_original>
// kernel: residual_block_forward.1
$region0: #{residual_block_forward.1}
  #allocation0 [shape = 'u32[]', space=smem, size = 0x4, offset = 0x4, fixed_abs, tag = 'smem constant byte address 0x4 - core index']
  #allocation1 [shape = 'u32[144,128]{1,0:T(1,128)}', space=vmem, size = 0x12000, scoped, tag = 'internal scratch']
  #allocation2 [shape = 'f32[18,18,4]{2,1,0:T(8,128)}', space=vmem, size = 0x36000, scoped, tag = 'scratch operand']
  %s0 = inlined_call_operand.vmem [shape: f32[2,16,16,4], index: 0, kind: input, shape index: {}]
  %s1 = inlined_call_operand.vmem [shape: f32[36,4], index: 1, kind: input, shape index: {}]
  %s2 = inlined_call_operand.vmem [shape: f32[1,4], index: 2, kind: input, shape index: {}]
  %s3 = inlined_call_operand.vmem [shape: f32[1,4], index: 3, kind: input, shape index: {}]
  %s4 = inlined_call_operand.vmem [shape: f32[36,4], index: 4, kind: input, shape index: {}]
  %s5 = inlined_call_operand.vmem [shape: f32[1,4], index: 5, kind: input, shape index: {}]
  %s6 = inlined_call_operand.vmem [shape: f32[1,4], index: 6, kind: input, shape index: {}]
  %s7 = inlined_call_operand.vmem [shape: f32[2,16,16,4], index: 7, kind: output, shape index: {}]
  %s8 = sld [smem:[#allocation0]]
  $region61: #{residual_block_forward.1} parent=0
    _
  %s10 = ssub.s32 1, %s8
  %s11 = scalar_select 0, %s10, %s8
  loop: start=0, step=1, limit=4
  $region2: #{residual_block_forward.1} parent=0 // loop_pre_header
    _
  $region3: #{residual_block_forward.1} parent=0 // loop_header
    %s13 = sphi 0, %s17
    %p14 = scmp.ge.s32.totalorder %s13, 4
    %s23 = sphi 0, %s25
    %s26 = sphi 0, %s23
    %s27 = sphi 0, %s26
    %s43 = sphi 0, %s27
    %s47 = sphi 0, %s47
    %s49 = sphi 0, %s47
    %s50 = sphi 0, %s49
    %s64 = sphi 0, %s50
    %s68 = sphi 0, %s68
    %s70 = sphi 0, %s68
    %s71 = sphi 0, %s70
    %s85 = sphi 0, %s71
    %s89 = sphi 0, %s89
    %s91 = sphi 0, %s89
    %s92 = sphi 0, %s91
    %s106 = sphi 0, %s92
    %s110 = sphi 0, %s110
    %s112 = sphi 0, %s110
    %s113 = sphi 0, %s112
    %s127 = sphi 0, %s113
    %s131 = sphi 0, %s131
    %s133 = sphi 0, %s131
    %s134 = sphi 0, %s133
    %s148 = sphi 0, %s134
    %s152 = sphi 0, %s152
    %s154 = sphi 0, %s152
    %s155 = sphi 0, %s154
    %s169 = sphi 0, %s155
    %s175 = sphi 0, %s177
    %s178 = sphi 0, %s175
    %s179 = sphi 0, %s178
    %s195 = sphi 0, %s179
  $region4: #{residual_block_forward.1} parent=0 // loop_header_branch
    %16 = sbr.rel (%p14) target = $region8
  $region5: #{residual_block_forward.1} parent=0 // loop_body
    %s18 = ssub.s32 %s13, 1
    %s19 = ssub.s32 %s13, 2
    %s20 = sadd.s32 %s13, 1
    %s21 = ssub.s32 %s13, %s20
    %p22 = scmp.eq.s32.totalorder %s21, 0
    %s24 = sadd.s32 %s23, 1
    %s25 = scalar_select %p22, %s23, %s24
    %p28 = pneg %p22
    %p29 = scmp.eq.s32.totalorder %s13, 1
    %p30 = por %p28, %p29
    %p31 = scmp.ne.s32.totalorder %s23, %s26
    %p32 = scmp.eq.s32.totalorder %s13, 0
    %p33 = por %p31, %p32
    %p34 = scmp.ne.s32.totalorder %s23, %s26
    %p35 = scmp.eq.s32.totalorder %s18, 1
    %p36 = por %p34, %p35
    %p37 = scmp.ne.s32.totalorder %s26, %s27
    %p38 = scmp.eq.s32.totalorder %s18, 0
    %p39 = por %p37, %p38
    %p40 = scmp.ne.s32.totalorder %s26, %s27
    %p41 = scmp.eq.s32.totalorder %s19, 1
    %p42 = por %p40, %p41
    %p44 = scmp.ne.s32.totalorder %s27, %s43
    %p45 = scmp.eq.s32.totalorder %s19, 0
    %p46 = por %p44, %p45
    %s48 = sadd.s32 %s47, 1
    %p51 = scmp.eq.s32.totalorder %s13, 1
    %p52 = scmp.ne.s32.totalorder %s47, %s49
    %p53 = scmp.eq.s32.totalorder %s13, 0
    %p54 = por %p52, %p53
    %p55 = scmp.ne.s32.totalorder %s47, %s49
    %p56 = scmp.eq.s32.totalorder %s18, 1
    %p57 = por %p55, %p56
    %p58 = scmp.ne.s32.totalorder %s49, %s50
    %p59 = scmp.eq.s32.totalorder %s18, 0
    %p60 = por %p58, %p59
    %p61 = scmp.ne.s32.totalorder %s49, %s50
    %p62 = scmp.eq.s32.totalorder %s19, 1
    %p63 = por %p61, %p62
    %p65 = scmp.ne.s32.totalorder %s50, %s64
    %p66 = scmp.eq.s32.totalorder %s19, 0
    %p67 = por %p65, %p66
    %s69 = sadd.s32 %s68, 1
    %p72 = scmp.eq.s32.totalorder %s13, 1
    %p73 = scmp.ne.s32.totalorder %s68, %s70
    %p74 = scmp.eq.s32.totalorder %s13, 0
    %p75 = por %p73, %p74
    %p76 = scmp.ne.s32.totalorder %s68, %s70
    %p77 = scmp.eq.s32.totalorder %s18, 1
    %p78 = por %p76, %p77
    %p79 = scmp.ne.s32.totalorder %s70, %s71
    %p80 = scmp.eq.s32.totalorder %s18, 0
    %p81 = por %p79, %p80
    %p82 = scmp.ne.s32.totalorder %s70, %s71
    %p83 = scmp.eq.s32.totalorder %s19, 1
    %p84 = por %p82, %p83
    %p86 = scmp.ne.s32.totalorder %s71, %s85
    %p87 = scmp.eq.s32.totalorder %s19, 0
    %p88 = por %p86, %p87
    %s90 = sadd.s32 %s89, 1
    %p93 = scmp.eq.s32.totalorder %s13, 1
    %p94 = scmp.ne.s32.totalorder %s89, %s91
    %p95 = scmp.eq.s32.totalorder %s13, 0
    %p96 = por %p94, %p95
    %p97 = scmp.ne.s32.totalorder %s89, %s91
    %p98 = scmp.eq.s32.totalorder %s18, 1
    %p99 = por %p97, %p98
    %p100 = scmp.ne.s32.totalorder %s91, %s92
    %p101 = scmp.eq.s32.totalorder %s18, 0
    %p102 = por %p100, %p101
    %p103 = scmp.ne.s32.totalorder %s91, %s92
    %p104 = scmp.eq.s32.totalorder %s19, 1
    %p105 = por %p103, %p104
    %p107 = scmp.ne.s32.totalorder %s92, %s106
    %p108 = scmp.eq.s32.totalorder %s19, 0
    %p109 = por %p107, %p108
    %s111 = sadd.s32 %s110, 1
    %p114 = scmp.eq.s32.totalorder %s13, 1
    %p115 = scmp.ne.s32.totalorder %s110, %s112
    %p116 = scmp.eq.s32.totalorder %s13, 0
    %p117 = por %p115, %p116
    %p118 = scmp.ne.s32.totalorder %s110, %s112
    %p119 = scmp.eq.s32.totalorder %s18, 1
    %p120 = por %p118, %p119
    %p121 = scmp.ne.s32.totalorder %s112, %s113
    %p122 = scmp.eq.s32.totalorder %s18, 0
    %p123 = por %p121, %p122
    %p124 = scmp.ne.s32.totalorder %s112, %s113
    %p125 = scmp.eq.s32.totalorder %s19, 1
    %p126 = por %p124, %p125
    %p128 = scmp.ne.s32.totalorder %s113, %s127
    %p129 = scmp.eq.s32.totalorder %s19, 0
    %p130 = por %p128, %p129
    %s132 = sadd.s32 %s131, 1
    %p135 = scmp.eq.s32.totalorder %s13, 1
    %p136 = scmp.ne.s32.totalorder %s131, %s133
    %p137 = scmp.eq.s32.totalorder %s13, 0
    %p138 = por %p136, %p137
    %p139 = scmp.ne.s32.totalorder %s131, %s133
    %p140 = scmp.eq.s32.totalorder %s18, 1
    %p141 = por %p139, %p140
    %p142 = scmp.ne.s32.totalorder %s133, %s134
    %p143 = scmp.eq.s32.totalorder %s18, 0
    %p144 = por %p142, %p143
    %p145 = scmp.ne.s32.totalorder %s133, %s134
    %p146 = scmp.eq.s32.totalorder %s19, 1
    %p147 = por %p145, %p146
    %p149 = scmp.ne.s32.totalorder %s134, %s148
    %p150 = scmp.eq.s32.totalorder %s19, 0
    %p151 = por %p149, %p150
    %s153 = sadd.s32 %s152, 1
    %p156 = scmp.eq.s32.totalorder %s13, 1
    %p157 = scmp.ne.s32.totalorder %s152, %s154
    %p158 = scmp.eq.s32.totalorder %s13, 0
    %p159 = por %p157, %p158
    %p160 = scmp.ne.s32.totalorder %s152, %s154
    %p161 = scmp.eq.s32.totalorder %s18, 1
    %p162 = por %p160, %p161
    %p163 = scmp.ne.s32.totalorder %s154, %s155
    %p164 = scmp.eq.s32.totalorder %s18, 0
    %p165 = por %p163, %p164
    %p166 = scmp.ne.s32.totalorder %s154, %s155
    %p167 = scmp.eq.s32.totalorder %s19, 1
    %p168 = por %p166, %p167
    %p170 = scmp.ne.s32.totalorder %s155, %s169
    %p171 = scmp.eq.s32.totalorder %s19, 0
    %p172 = por %p170, %p171
    %s173 = ssub.s32 %s13, %s20
    %p174 = scmp.eq.s32.totalorder %s173, 0
    %s176 = sadd.s32 %s175, 1
    %s177 = scalar_select %p174, %s175, %s176
    %p180 = pneg %p174
    %p181 = scmp.eq.s32.totalorder %s13, 1
    %p182 = por %p180, %p181
    %p183 = scmp.ne.s32.totalorder %s175, %s178
    %p184 = scmp.eq.s32.totalorder %s13, 0
    %p185 = por %p183, %p184
    %p186 = scmp.ne.s32.totalorder %s175, %s178
    %p187 = scmp.eq.s32.totalorder %s18, 1
    %p188 = por %p186, %p187
    %p189 = scmp.ne.s32.totalorder %s178, %s179
    %p190 = scmp.eq.s32.totalorder %s18, 0
    %p191 = por %p189, %p190
    %p192 = scmp.ne.s32.totalorder %s178, %s179
    %p193 = scmp.eq.s32.totalorder %s19, 1
    %p194 = por %p192, %p193
    %p196 = scmp.ne.s32.totalorder %s179, %s195
    %p197 = scmp.eq.s32.totalorder %s19, 0
    %p198 = por %p196, %p197
    %p199 = scmp.le.s32.totalorder 1, %s13
    %p200 = scmp.lt.s32.totalorder %s13, 3
    %p201 = pnand %p199, %p200
    %p202 = pneg %p201
    // Predicated region
    $region9: #{residual_block_forward.1} parent=5 // pred_check
      _
    $region10: #{residual_block_forward.1} parent=5 // pred_check_branch
      %204 = sbr.rel (%p201) target = $region12
    $region11: #{residual_block_forward.1} parent=5 // pred_region
      %s205 = ssub.s32 %s13, 1
      // Predicated region
      $region13: #{residual_block_forward.1} parent=11 // pred_check
        %p206 = pneg %p60
      $region14: #{residual_block_forward.1} parent=11 // pred_check_branch
        %208 = sbr.rel (%p206) target = $region16
      $region15: #{residual_block_forward.1} parent=11 // pred_region
        _
      $region16: #{residual_block_forward.1} parent=11 // pred_fallthru
        _
      // Predicated region
      $region17: #{residual_block_forward.1} parent=11 // pred_check
        %p209 = pneg %p81
      $region18: #{residual_block_forward.1} parent=11 // pred_check_branch
        %211 = sbr.rel (%p209) target = $region20
      $region19: #{residual_block_forward.1} parent=11 // pred_region
        _
      $region20: #{residual_block_forward.1} parent=11 // pred_fallthru
        _
      // Predicated region
      $region21: #{residual_block_forward.1} parent=11 // pred_check
        %p212 = pneg %p102
      $region22: #{residual_block_forward.1} parent=11 // pred_check_branch
        %214 = sbr.rel (%p212) target = $region24
      $region23: #{residual_block_forward.1} parent=11 // pred_region
        _
      $region24: #{residual_block_forward.1} parent=11 // pred_fallthru
        _
      // Predicated region
      $region25: #{residual_block_forward.1} parent=11 // pred_check
        %p215 = pneg %p123
      $region26: #{residual_block_forward.1} parent=11 // pred_check_branch
        %217 = sbr.rel (%p215) target = $region28
      $region27: #{residual_block_forward.1} parent=11 // pred_region
        _
      $region28: #{residual_block_forward.1} parent=11 // pred_fallthru
        _
      // Predicated region
      $region29: #{residual_block_forward.1} parent=11 // pred_check
        %p218 = pneg %p144
      $region30: #{residual_block_forward.1} parent=11 // pred_check_branch
        %220 = sbr.rel (%p218) target = $region32
      $region31: #{residual_block_forward.1} parent=11 // pred_region
        _
      $region32: #{residual_block_forward.1} parent=11 // pred_fallthru
        _
      // Predicated region
      $region33: #{residual_block_forward.1} parent=11 // pred_check
        %p221 = pneg %p165
      $region34: #{residual_block_forward.1} parent=11 // pred_check_branch
        %223 = sbr.rel (%p221) target = $region36
      $region35: #{residual_block_forward.1} parent=11 // pred_region
        _
      $region36: #{residual_block_forward.1} parent=11 // pred_fallthru
        _
    $region12: #{residual_block_forward.1} parent=5 // pred_fallthru
      _
    %p224 = scmp.lt.s32.totalorder %s13, 2
    // Predicated region
    $region37: #{residual_block_forward.1} parent=5 // pred_check
      %p225 = pneg %p224
    $region38: #{residual_block_forward.1} parent=5 // pred_check_branch
      %227 = sbr.rel (%p225) target = $region40
    $region39: #{residual_block_forward.1} parent=5 // pred_region
      // Predicated region
      $region41: #{residual_block_forward.1} parent=39 // pred_check
        %p228 = pneg %p33
      $region42: #{residual_block_forward.1} parent=39 // pred_check_branch
        %230 = sbr.rel (%p228) target = $region44
      $region43: #{residual_block_forward.1} parent=39 // pred_region
        %p231 = scmp.lt.s32.totalorder %s13, 1
        %s232 = scalar_select %p231, %s13, 1
        %s233 = smul.addr %s232, 32
        %s234 = smul.addr %s233, 8
        %s235 = scalar_lea.vmem %s0, %s234
      $region44: #{residual_block_forward.1} parent=39 // pred_fallthru
        _
    $region40: #{residual_block_forward.1} parent=5 // pred_fallthru
      _
    %p236 = scmp.le.s32.totalorder 1, %s13
    %p237 = scmp.lt.s32.totalorder %s13, 3
    %p238 = pnand %p236, %p237
    %p239 = pneg %p238
    // Predicated region
    $region45: #{residual_block_forward.1} parent=5 // pred_check
      _
    $region46: #{residual_block_forward.1} parent=5 // pred_check_branch
      %241 = sbr.rel (%p238) target = $region48
    $region47: #{residual_block_forward.1} parent=5 // pred_region
      %s242 = ssub.s32 %s13, 1
      %p243 = scmp.lt.s32.totalorder %s18, 1
      %s244 = scalar_select %p243, %s18, 1
      %s245 = smul.addr %s244, 32
      %s246 = smul.addr %s245, 8
      %s247 = scalar_lea.vmem %s0, %s246
      %p248 = pneg %p39
      %p249 = pneg %p36
      %p250 = pneg %p60
      %p251 = pneg %p57
      %p252 = pneg %p81
      %p253 = pneg %p78
      %p254 = pneg %p102
      %p255 = pneg %p99
      %p256 = pneg %p123
      %p257 = pneg %p120
      %p258 = pneg %p144
      %p259 = pneg %p141
      %p260 = pneg %p165
      %p261 = pneg %p162
      %p262 = pneg %p191
      %p263 = pneg %p188
      %p264 = scmp.lt.s32.totalorder %s18, 1
      %s265 = scalar_select %p264, %s18, 1
      %s266 = smul.addr %s265, 32
      %s267 = smul.addr %s266, 8
      %s268 = scalar_lea.vmem %s7, %s267
      %p269 = scmp.lt.s32.totalorder %s18, 1
      %s270 = scalar_select %p269, %s18, 1
      %s271 = smul.addr %s270, 32
      %s272 = smul.addr %s271, 8
      %s273 = scalar_lea.vmem %s0, %s272
      %p274 = scmp.lt.s32.totalorder %s18, 1
      %s275 = scalar_select %p274, %s18, 1
      %s276 = smul.addr %s275, 32
      %s277 = smul.addr %s276, 8
      %s278 = scalar_lea.vmem %s7, %s277
      %v279 = vld [vmem:[%s273] sm:$0xff]
      %v280 = vld [vmem:[%s273 + $0x8] sm:$0xff]
      %v281 = vld [vmem:[%s273 + $0x10] sm:$0xff]
      %v282 = vld [vmem:[%s273 + $0x18] sm:$0xff]
      %v283 = vld [vmem:[%s273 + $0x20] sm:$0xff]
      %v284 = vld [vmem:[%s273 + $0x28] sm:$0xff]
      %v285 = vld [vmem:[%s273 + $0x30] sm:$0xff]
      %v286 = vld [vmem:[%s273 + $0x38] sm:$0xff]
      %v287 = vld [vmem:[%s273 + $0x40] sm:$0xff]
      %v288 = vld [vmem:[%s273 + $0x48] sm:$0xff]
      %v289 = vld [vmem:[%s273 + $0x50] sm:$0xff]
      %v290 = vld [vmem:[%s273 + $0x58] sm:$0xff]
      %v291 = vld [vmem:[%s273 + $0x60] sm:$0xff]
      %v292 = vld [vmem:[%s273 + $0x68] sm:$0xff]
      %v293 = vld [vmem:[%s273 + $0x70] sm:$0xff]
      %v294 = vld [vmem:[%s273 + $0x78] sm:$0xff]
      %v295 = vld [vmem:[%s273 + $0x80] sm:$0xff]
      %v296 = vld [vmem:[%s273 + $0x88] sm:$0xff]
      %v297 = vld [vmem:[%s273 + $0x90] sm:$0xff]
      %v298 = vld [vmem:[%s273 + $0x98] sm:$0xff]
      %v299 = vld [vmem:[%s273 + $0xa0] sm:$0xff]
      %v300 = vld [vmem:[%s273 + $0xa8] sm:$0xff]
      %v301 = vld [vmem:[%s273 + $0xb0] sm:$0xff]
      %v302 = vld [vmem:[%s273 + $0xb8] sm:$0xff]
      %v303 = vld [vmem:[%s273 + $0xc0] sm:$0xff]
      %v304 = vld [vmem:[%s273 + $0xc8] sm:$0xff]
      %v305 = vld [vmem:[%s273 + $0xd0] sm:$0xff]
      %v306 = vld [vmem:[%s273 + $0xd8] sm:$0xff]
      %v307 = vld [vmem:[%s273 + $0xe0] sm:$0xff]
      %v308 = vld [vmem:[%s273 + $0xe8] sm:$0xff]
      %v309 = vld [vmem:[%s273 + $0xf0] sm:$0xff]
      %v310 = vld [vmem:[%s273 + $0xf8] sm:$0xff]
      %s311 = scalar_lea.vmem [#allocation2], 24
      %vm312 = vcmask 31744
      %313 = vst.msk [vmem:[%s311 + $0x1] sm:$0xff] %vm312, %v279
      %314 = vst.msk [vmem:[%s311 + $0x9] sm:$0xff] %vm312, %v280
      %315 = vst.msk [vmem:[%s311 + $0x19] sm:$0xff] %vm312, %v281
      %316 = vst.msk [vmem:[%s311 + $0x21] sm:$0xff] %vm312, %v282
      %317 = vst.msk [vmem:[%s311 + $0x31] sm:$0xff] %vm312, %v283
      %318 = vst.msk [vmem:[%s311 + $0x39] sm:$0xff] %vm312, %v284
      %319 = vst.msk [vmem:[%s311 + $0x49] sm:$0xff] %vm312, %v285
      %320 = vst.msk [vmem:[%s311 + $0x51] sm:$0xff] %vm312, %v286
      %321 = vst.msk [vmem:[%s311 + $0x61] sm:$0xff] %vm312, %v287
      %322 = vst.msk [vmem:[%s311 + $0x69] sm:$0xff] %vm312, %v288
      %323 = vst.msk [vmem:[%s311 + $0x79] sm:$0xff] %vm312, %v289
      %324 = vst.msk [vmem:[%s311 + $0x81] sm:$0xff] %vm312, %v290
      %325 = vst.msk [vmem:[%s311 + $0x91] sm:$0xff] %vm312, %v291
      %326 = vst.msk [vmem:[%s311 + $0x99] sm:$0xff] %vm312, %v292
      %327 = vst.msk [vmem:[%s311 + $0xa9] sm:$0xff] %vm312, %v293
      %328 = vst.msk [vmem:[%s311 + $0xb1] sm:$0xff] %vm312, %v294
      %329 = vst.msk [vmem:[%s311 + $0xc1] sm:$0xff] %vm312, %v295
      %330 = vst.msk [vmem:[%s311 + $0xc9] sm:$0xff] %vm312, %v296
      %331 = vst.msk [vmem:[%s311 + $0xd9] sm:$0xff] %vm312, %v297
      %332 = vst.msk [vmem:[%s311 + $0xe1] sm:$0xff] %vm312, %v298
      %333 = vst.msk [vmem:[%s311 + $0xf1] sm:$0xff] %vm312, %v299
      %334 = vst.msk [vmem:[%s311 + $0xf9] sm:$0xff] %vm312, %v300
      %335 = vst.msk [vmem:[%s311 + $0x109] sm:$0xff] %vm312, %v301
      %336 = vst.msk [vmem:[%s311 + $0x111] sm:$0xff] %vm312, %v302
      %337 = vst.msk [vmem:[%s311 + $0x121] sm:$0xff] %vm312, %v303
      %338 = vst.msk [vmem:[%s311 + $0x129] sm:$0xff] %vm312, %v304
      %339 = vst.msk [vmem:[%s311 + $0x139] sm:$0xff] %vm312, %v305
      %340 = vst.msk [vmem:[%s311 + $0x141] sm:$0xff] %vm312, %v306
      %341 = vst.msk [vmem:[%s311 + $0x151] sm:$0xff] %vm312, %v307
      %342 = vst.msk [vmem:[%s311 + $0x159] sm:$0xff] %vm312, %v308
      %343 = vst.msk [vmem:[%s311 + $0x169] sm:$0xff] %vm312, %v309
      %344 = vst.msk [vmem:[%s311 + $0x171] sm:$0xff] %vm312, %v310
      %345 = vst.msk [vmem:[#allocation2 + $0x1] sm:$0xff] %vm312, %v281
      %346 = vst.msk [vmem:[#allocation2 + $0x9] sm:$0xff] %vm312, %v282
      %s347 = scalar_lea.vmem [#allocation2], 408
      %348 = vst.msk [vmem:[%s347 + $0x1] sm:$0xff] %vm312, %v307
      %349 = vst.msk [vmem:[%s347 + $0x9] sm:$0xff] %vm312, %v308
      %v350 = vld [vmem:[#allocation2 + $0x2] sm:$0x1]
      %v351 = vld [vmem:[#allocation2 + $0x1a] sm:$0x1]
      %v352 = vld [vmem:[#allocation2 + $0x32] sm:$0x1]
      %v353 = vld [vmem:[#allocation2 + $0x4a] sm:$0x1]
      %v354 = vld [vmem:[#allocation2 + $0x62] sm:$0x1]
      %v355 = vld [vmem:[#allocation2 + $0x7a] sm:$0x1]
      %v356 = vld [vmem:[#allocation2 + $0x92] sm:$0x1]
      %v357 = vld [vmem:[#allocation2 + $0xaa] sm:$0x1]
      %v358 = vld [vmem:[#allocation2 + $0xc2] sm:$0x1]
      %v359 = vld [vmem:[#allocation2 + $0xda] sm:$0x1]
      %v360 = vld [vmem:[#allocation2 + $0xf2] sm:$0x1]
      %v361 = vld [vmem:[#allocation2 + $0x10a] sm:$0x1]
      %v362 = vld [vmem:[#allocation2 + $0x122] sm:$0x1]
      %v363 = vld [vmem:[#allocation2 + $0x13a] sm:$0x1]
      %v364 = vld [vmem:[#allocation2 + $0x152] sm:$0x1]
      %v365 = vld [vmem:[#allocation2 + $0x16a] sm:$0x1]
      %v366 = vld [vmem:[#allocation2 + $0x182] sm:$0x1]
      %v367 = vld [vmem:[#allocation2 + $0x19a] sm:$0x1]
      %vm368 = vcmask 24576
      %369 = vst.msk [vmem:[#allocation2] sm:$0x1] %vm368, %v350
      %370 = vst.msk [vmem:[#allocation2 + $0x18] sm:$0x1] %vm368, %v351
      %371 = vst.msk [vmem:[#allocation2 + $0x30] sm:$0x1] %vm368, %v352
      %372 = vst.msk [vmem:[#allocation2 + $0x48] sm:$0x1] %vm368, %v353
      %373 = vst.msk [vmem:[#allocation2 + $0x60] sm:$0x1] %vm368, %v354
      %374 = vst.msk [vmem:[#allocation2 + $0x78] sm:$0x1] %vm368, %v355
      %375 = vst.msk [vmem:[#allocation2 + $0x90] sm:$0x1] %vm368, %v356
      %376 = vst.msk [vmem:[#allocation2 + $0xa8] sm:$0x1] %vm368, %v357
      %377 = vst.msk [vmem:[#allocation2 + $0xc0] sm:$0x1] %vm368, %v358
      %378 = vst.msk [vmem:[#allocation2 + $0xd8] sm:$0x1] %vm368, %v359
      %379 = vst.msk [vmem:[#allocation2 + $0xf0] sm:$0x1] %vm368, %v360
      %380 = vst.msk [vmem:[#allocation2 + $0x108] sm:$0x1] %vm368, %v361
      %381 = vst.msk [vmem:[#allocation2 + $0x120] sm:$0x1] %vm368, %v362
      %382 = vst.msk [vmem:[#allocation2 + $0x138] sm:$0x1] %vm368, %v363
      %383 = vst.msk [vmem:[#allocation2 + $0x150] sm:$0x1] %vm368, %v364
      %384 = vst.msk [vmem:[#allocation2 + $0x168] sm:$0x1] %vm368, %v365
      %385 = vst.msk [vmem:[#allocation2 + $0x180] sm:$0x1] %vm368, %v366
      %386 = vst.msk [vmem:[#allocation2 + $0x198] sm:$0x1] %vm368, %v367
      %v387 = vld [vmem:[#allocation2 + $0xf] sm:$0x1]
      %v388 = vld [vmem:[#allocation2 + $0x27] sm:$0x1]
      %v389 = vld [vmem:[#allocation2 + $0x3f] sm:$0x1]
      %v390 = vld [vmem:[#allocation2 + $0x57] sm:$0x1]
      %v391 = vld [vmem:[#allocation2 + $0x6f] sm:$0x1]
      %v392 = vld [vmem:[#allocation2 + $0x87] sm:$0x1]
      %v393 = vld [vmem:[#allocation2 + $0x9f] sm:$0x1]
      %v394 = vld [vmem:[#allocation2 + $0xb7] sm:$0x1]
      %v395 = vld [vmem:[#allocation2 + $0xcf] sm:$0x1]
      %v396 = vld [vmem:[#allocation2 + $0xe7] sm:$0x1]
      %v397 = vld [vmem:[#allocation2 + $0xff] sm:$0x1]
      %v398 = vld [vmem:[#allocation2 + $0x117] sm:$0x1]
      %v399 = vld [vmem:[#allocation2 + $0x12f] sm:$0x1]
      %v400 = vld [vmem:[#allocation2 + $0x147] sm:$0x1]
      %v401 = vld [vmem:[#allocation2 + $0x15f] sm:$0x1]
      %v402 = vld [vmem:[#allocation2 + $0x177] sm:$0x1]
      %v403 = vld [vmem:[#allocation2 + $0x18f] sm:$0x1]
      %v404 = vld [vmem:[#allocation2 + $0x1a7] sm:$0x1]
      %405 = vst.msk [vmem:[#allocation2 + $0x11] sm:$0x1] %vm368, %v387
      %406 = vst.msk [vmem:[#allocation2 + $0x29] sm:$0x1] %vm368, %v388
      %407 = vst.msk [vmem:[#allocation2 + $0x41] sm:$0x1] %vm368, %v389
      %408 = vst.msk [vmem:[#allocation2 + $0x59] sm:$0x1] %vm368, %v390
      %409 = vst.msk [vmem:[#allocation2 + $0x71] sm:$0x1] %vm368, %v391
      %410 = vst.msk [vmem:[#allocation2 + $0x89] sm:$0x1] %vm368, %v392
      %411 = vst.msk [vmem:[#allocation2 + $0xa1] sm:$0x1] %vm368, %v393
      %412 = vst.msk [vmem:[#allocation2 + $0xb9] sm:$0x1] %vm368, %v394
      %413 = vst.msk [vmem:[#allocation2 + $0xd1] sm:$0x1] %vm368, %v395
      %414 = vst.msk [vmem:[#allocation2 + $0xe9] sm:$0x1] %vm368, %v396
      %415 = vst.msk [vmem:[#allocation2 + $0x101] sm:$0x1] %vm368, %v397
      %416 = vst.msk [vmem:[#allocation2 + $0x119] sm:$0x1] %vm368, %v398
      %417 = vst.msk [vmem:[#allocation2 + $0x131] sm:$0x1] %vm368, %v399
      %418 = vst.msk [vmem:[#allocation2 + $0x149] sm:$0x1] %vm368, %v400
      %419 = vst.msk [vmem:[#allocation2 + $0x161] sm:$0x1] %vm368, %v401
      %420 = vst.msk [vmem:[#allocation2 + $0x179] sm:$0x1] %vm368, %v402
      %421 = vst.msk [vmem:[#allocation2 + $0x191] sm:$0x1] %vm368, %v403
      %422 = vst.msk [vmem:[#allocation2 + $0x1a9] sm:$0x1] %vm368, %v404
      %v423 = vld [vmem:[#allocation2] sm:$0xff]
      %v424 = vld [vmem:[#allocation2 + $0x8] sm:$0xff]
      %v425 = vld [vmem:[#allocation2 + $0x18] sm:$0xff]
      %v426 = vld [vmem:[#allocation2 + $0x20] sm:$0xff]
      %v427 = vld [vmem:[#allocation2 + $0x30] sm:$0xff]
      %v428 = vld [vmem:[#allocation2 + $0x38] sm:$0xff]
      %v429 = vld [vmem:[#allocation2 + $0x48] sm:$0xff]
      %v430 = vld [vmem:[#allocation2 + $0x50] sm:$0xff]
      %v431 = vld [vmem:[#allocation2 + $0x60] sm:$0xff]
      %v432 = vld [vmem:[#allocation2 + $0x68] sm:$0xff]
      %v433 = vld [vmem:[#allocation2 + $0x78] sm:$0xff]
      %v434 = vld [vmem:[#allocation2 + $0x80] sm:$0xff]
      %v435 = vld [vmem:[#allocation2 + $0x90] sm:$0xff]
      %v436 = vld [vmem:[#allocation2 + $0x98] sm:$0xff]
      %v437 = vld [vmem:[#allocation2 + $0xa8] sm:$0xff]
      %v438 = vld [vmem:[#allocation2 + $0xb0] sm:$0xff]
      %v439 = vld [vmem:[#allocation2 + $0xc0] sm:$0xff]
      %v440 = vld [vmem:[#allocation2 + $0xc8] sm:$0xff]
      %v441 = vld [vmem:[#allocation2 + $0xd8] sm:$0xff]
      %v442 = vld [vmem:[#allocation2 + $0xe0] sm:$0xff]
      %v443 = vld [vmem:[#allocation2 + $0xf0] sm:$0xff]
      %v444 = vld [vmem:[#allocation2 + $0xf8] sm:$0xff]
      %v445 = vld [vmem:[#allocation2 + $0x108] sm:$0xff]
      %v446 = vld [vmem:[#allocation2 + $0x110] sm:$0xff]
      %v447 = vld [vmem:[#allocation2 + $0x120] sm:$0xff]
      %v448 = vld [vmem:[#allocation2 + $0x128] sm:$0xff]
      %v449 = vld [vmem:[#allocation2 + $0x138] sm:$0xff]
      %v450 = vld [vmem:[#allocation2 + $0x140] sm:$0xff]
      %v451 = vld [vmem:[#allocation2 + $0x150] sm:$0xff]
      %v452 = vld [vmem:[#allocation2 + $0x158] sm:$0xff]
      %v453 = vld [vmem:[#allocation2 + $0x168] sm:$0xff]
      %v454 = vld [vmem:[#allocation2 + $0x170] sm:$0xff]
      %v455 = vld [vmem:[#allocation2 + $0x1] sm:$0xff]
      %v456 = vld [vmem:[#allocation2 + $0x9] sm:$0xff]
      %v457 = vld [vmem:[#allocation2 + $0x19] sm:$0xff]
      %v458 = vld [vmem:[#allocation2 + $0x21] sm:$0xff]
      %v459 = vld [vmem:[#allocation2 + $0x31] sm:$0xff]
      %v460 = vld [vmem:[#allocation2 + $0x39] sm:$0xff]
      %v461 = vld [vmem:[#allocation2 + $0x49] sm:$0xff]
      %v462 = vld [vmem:[#allocation2 + $0x51] sm:$0xff]
      %v463 = vld [vmem:[#allocation2 + $0x61] sm:$0xff]
      %v464 = vld [vmem:[#allocation2 + $0x69] sm:$0xff]
      %v465 = vld [vmem:[#allocation2 + $0x79] sm:$0xff]
      %v466 = vld [vmem:[#allocation2 + $0x81] sm:$0xff]
      %v467 = vld [vmem:[#allocation2 + $0x91] sm:$0xff]
      %v468 = vld [vmem:[#allocation2 + $0x99] sm:$0xff]
      %v469 = vld [vmem:[#allocation2 + $0xa9] sm:$0xff]
      %v470 = vld [vmem:[#allocation2 + $0xb1] sm:$0xff]
      %v471 = vld [vmem:[#allocation2 + $0xc1] sm:$0xff]
      %v472 = vld [vmem:[#allocation2 + $0xc9] sm:$0xff]
      %v473 = vld [vmem:[#allocation2 + $0xd9] sm:$0xff]
      %v474 = vld [vmem:[#allocation2 + $0xe1] sm:$0xff]
      %v475 = vld [vmem:[#allocation2 + $0xf1] sm:$0xff]
      %v476 = vld [vmem:[#allocation2 + $0xf9] sm:$0xff]
      %v477 = vld [vmem:[#allocation2 + $0x109] sm:$0xff]
      %v478 = vld [vmem:[#allocation2 + $0x111] sm:$0xff]
      %v479 = vld [vmem:[#allocation2 + $0x121] sm:$0xff]
      %v480 = vld [vmem:[#allocation2 + $0x129] sm:$0xff]
      %v481 = vld [vmem:[#allocation2 + $0x139] sm:$0xff]
      %v482 = vld [vmem:[#allocation2 + $0x141] sm:$0xff]
      %v483 = vld [vmem:[#allocation2 + $0x151] sm:$0xff]
      %v484 = vld [vmem:[#allocation2 + $0x159] sm:$0xff]
      %v485 = vld [vmem:[#allocation2 + $0x169] sm:$0xff]
      %v486 = vld [vmem:[#allocation2 + $0x171] sm:$0xff]
      %v487 = vld [vmem:[#allocation2 + $0x2] sm:$0xff]
      %v488 = vld [vmem:[#allocation2 + $0xa] sm:$0xff]
      %v489 = vld [vmem:[#allocation2 + $0x1a] sm:$0xff]
      %v490 = vld [vmem:[#allocation2 + $0x22] sm:$0xff]
      %v491 = vld [vmem:[#allocation2 + $0x32] sm:$0xff]
      %v492 = vld [vmem:[#allocation2 + $0x3a] sm:$0xff]
      %v493 = vld [vmem:[#allocation2 + $0x4a] sm:$0xff]
      %v494 = vld [vmem:[#allocation2 + $0x52] sm:$0xff]
      %v495 = vld [vmem:[#allocation2 + $0x62] sm:$0xff]
      %v496 = vld [vmem:[#allocation2 + $0x6a] sm:$0xff]
      %v497 = vld [vmem:[#allocation2 + $0x7a] sm:$0xff]
      %v498 = vld [vmem:[#allocation2 + $0x82] sm:$0xff]
      %v499 = vld [vmem:[#allocation2 + $0x92] sm:$0xff]
      %v500 = vld [vmem:[#allocation2 + $0x9a] sm:$0xff]
      %v501 = vld [vmem:[#allocation2 + $0xaa] sm:$0xff]
      %v502 = vld [vmem:[#allocation2 + $0xb2] sm:$0xff]
      %v503 = vld [vmem:[#allocation2 + $0xc2] sm:$0xff]
      %v504 = vld [vmem:[#allocation2 + $0xca] sm:$0xff]
      %v505 = vld [vmem:[#allocation2 + $0xda] sm:$0xff]
      %v506 = vld [vmem:[#allocation2 + $0xe2] sm:$0xff]
      %v507 = vld [vmem:[#allocation2 + $0xf2] sm:$0xff]
      %v508 = vld [vmem:[#allocation2 + $0xfa] sm:$0xff]
      %v509 = vld [vmem:[#allocation2 + $0x10a] sm:$0xff]
      %v510 = vld [vmem:[#allocation2 + $0x112] sm:$0xff]
      %v511 = vld [vmem:[#allocation2 + $0x122] sm:$0xff]
      %v512 = vld [vmem:[#allocation2 + $0x12a] sm:$0xff]
      %v513 = vld [vmem:[#allocation2 + $0x13a] sm:$0xff]
      %v514 = vld [vmem:[#allocation2 + $0x142] sm:$0xff]
      %v515 = vld [vmem:[#allocation2 + $0x152] sm:$0xff]
      %v516 = vld [vmem:[#allocation2 + $0x15a] sm:$0xff]
      %v517 = vld [vmem:[#allocation2 + $0x16a] sm:$0xff]
      %v518 = vld [vmem:[#allocation2 + $0x172] sm:$0xff]
      %v519 = vld [vmem:[%s311] sm:$0xff]
      %v520 = vld [vmem:[%s311 + $0x8] sm:$0xff]
      %v521 = vld [vmem:[%s311 + $0x18] sm:$0xff]
      %v522 = vld [vmem:[%s311 + $0x20] sm:$0xff]
      %v523 = vld [vmem:[%s311 + $0x30] sm:$0xff]
      %v524 = vld [vmem:[%s311 + $0x38] sm:$0xff]
      %v525 = vld [vmem:[%s311 + $0x48] sm:$0xff]
      %v526 = vld [vmem:[%s311 + $0x50] sm:$0xff]
      %v527 = vld [vmem:[%s311 + $0x60] sm:$0xff]
      %v528 = vld [vmem:[%s311 + $0x68] sm:$0xff]
      %v529 = vld [vmem:[%s311 + $0x78] sm:$0xff]
      %v530 = vld [vmem:[%s311 + $0x80] sm:$0xff]
      %v531 = vld [vmem:[%s311 + $0x90] sm:$0xff]
      %v532 = vld [vmem:[%s311 + $0x98] sm:$0xff]
      %v533 = vld [vmem:[%s311 + $0xa8] sm:$0xff]
      %v534 = vld [vmem:[%s311 + $0xb0] sm:$0xff]
      %v535 = vld [vmem:[%s311 + $0xc0] sm:$0xff]
      %v536 = vld [vmem:[%s311 + $0xc8] sm:$0xff]
      %v537 = vld [vmem:[%s311 + $0xd8] sm:$0xff]
      %v538 = vld [vmem:[%s311 + $0xe0] sm:$0xff]
      %v539 = vld [vmem:[%s311 + $0xf0] sm:$0xff]
      %v540 = vld [vmem:[%s311 + $0xf8] sm:$0xff]
      %v541 = vld [vmem:[%s311 + $0x108] sm:$0xff]
      %v542 = vld [vmem:[%s311 + $0x110] sm:$0xff]
      %v543 = vld [vmem:[%s311 + $0x120] sm:$0xff]
      %v544 = vld [vmem:[%s311 + $0x128] sm:$0xff]
      %v545 = vld [vmem:[%s311 + $0x138] sm:$0xff]
      %v546 = vld [vmem:[%s311 + $0x140] sm:$0xff]
      %v547 = vld [vmem:[%s311 + $0x150] sm:$0xff]
      %v548 = vld [vmem:[%s311 + $0x158] sm:$0xff]
      %v549 = vld [vmem:[%s311 + $0x168] sm:$0xff]
      %v550 = vld [vmem:[%s311 + $0x170] sm:$0xff]
      %v551 = vld [vmem:[%s311 + $0x1] sm:$0xff]
      %v552 = vld [vmem:[%s311 + $0x9] sm:$0xff]
      %v553 = vld [vmem:[%s311 + $0x19] sm:$0xff]
      %v554 = vld [vmem:[%s311 + $0x21] sm:$0xff]
      %v555 = vld [vmem:[%s311 + $0x31] sm:$0xff]
      %v556 = vld [vmem:[%s311 + $0x39] sm:$0xff]
      %v557 = vld [vmem:[%s311 + $0x49] sm:$0xff]
      %v558 = vld [vmem:[%s311 + $0x51] sm:$0xff]
      %v559 = vld [vmem:[%s311 + $0x61] sm:$0xff]
      %v560 = vld [vmem:[%s311 + $0x69] sm:$0xff]
      %v561 = vld [vmem:[%s311 + $0x79] sm:$0xff]
      %v562 = vld [vmem:[%s311 + $0x81] sm:$0xff]
      %v563 = vld [vmem:[%s311 + $0x91] sm:$0xff]
      %v564 = vld [vmem:[%s311 + $0x99] sm:$0xff]
      %v565 = vld [vmem:[%s311 + $0xa9] sm:$0xff]
      %v566 = vld [vmem:[%s311 + $0xb1] sm:$0xff]
      %v567 = vld [vmem:[%s311 + $0xc1] sm:$0xff]
      %v568 = vld [vmem:[%s311 + $0xc9] sm:$0xff]
      %v569 = vld [vmem:[%s311 + $0xd9] sm:$0xff]
      %v570 = vld [vmem:[%s311 + $0xe1] sm:$0xff]
      %v571 = vld [vmem:[%s311 + $0xf1] sm:$0xff]
      %v572 = vld [vmem:[%s311 + $0xf9] sm:$0xff]
      %v573 = vld [vmem:[%s311 + $0x109] sm:$0xff]
      %v574 = vld [vmem:[%s311 + $0x111] sm:$0xff]
      %v575 = vld [vmem:[%s311 + $0x121] sm:$0xff]
      %v576 = vld [vmem:[%s311 + $0x129] sm:$0xff]
      %v577 = vld [vmem:[%s311 + $0x139] sm:$0xff]
      %v578 = vld [vmem:[%s311 + $0x141] sm:$0xff]
      %v579 = vld [vmem:[%s311 + $0x151] sm:$0xff]
      %v580 = vld [vmem:[%s311 + $0x159] sm:$0xff]
      %v581 = vld [vmem:[%s311 + $0x169] sm:$0xff]
      %v582 = vld [vmem:[%s311 + $0x171] sm:$0xff]
      %v583 = vld [vmem:[%s311 + $0x2] sm:$0xff]
      %v584 = vld [vmem:[%s311 + $0xa] sm:$0xff]
      %v585 = vld [vmem:[%s311 + $0x1a] sm:$0xff]
      %v586 = vld [vmem:[%s311 + $0x22] sm:$0xff]
      %v587 = vld [vmem:[%s311 + $0x32] sm:$0xff]
      %v588 = vld [vmem:[%s311 + $0x3a] sm:$0xff]
      %v589 = vld [vmem:[%s311 + $0x4a] sm:$0xff]
      %v590 = vld [vmem:[%s311 + $0x52] sm:$0xff]
      %v591 = vld [vmem:[%s311 + $0x62] sm:$0xff]
      %v592 = vld [vmem:[%s311 + $0x6a] sm:$0xff]
      %v593 = vld [vmem:[%s311 + $0x7a] sm:$0xff]
      %v594 = vld [vmem:[%s311 + $0x82] sm:$0xff]
      %v595 = vld [vmem:[%s311 + $0x92] sm:$0xff]
      %v596 = vld [vmem:[%s311 + $0x9a] sm:$0xff]
      %v597 = vld [vmem:[%s311 + $0xaa] sm:$0xff]
      %v598 = vld [vmem:[%s311 + $0xb2] sm:$0xff]
      %v599 = vld [vmem:[%s311 + $0xc2] sm:$0xff]
      %v600 = vld [vmem:[%s311 + $0xca] sm:$0xff]
      %v601 = vld [vmem:[%s311 + $0xda] sm:$0xff]
      %v602 = vld [vmem:[%s311 + $0xe2] sm:$0xff]
      %v603 = vld [vmem:[%s311 + $0xf2] sm:$0xff]
      %v604 = vld [vmem:[%s311 + $0xfa] sm:$0xff]
      %v605 = vld [vmem:[%s311 + $0x10a] sm:$0xff]
      %v606 = vld [vmem:[%s311 + $0x112] sm:$0xff]
      %v607 = vld [vmem:[%s311 + $0x122] sm:$0xff]
      %v608 = vld [vmem:[%s311 + $0x12a] sm:$0xff]
      %v609 = vld [vmem:[%s311 + $0x13a] sm:$0xff]
      %v610 = vld [vmem:[%s311 + $0x142] sm:$0xff]
      %v611 = vld [vmem:[%s311 + $0x152] sm:$0xff]
      %v612 = vld [vmem:[%s311 + $0x15a] sm:$0xff]
      %v613 = vld [vmem:[%s311 + $0x16a] sm:$0xff]
      %v614 = vld [vmem:[%s311 + $0x172] sm:$0xff]
      %s615 = scalar_lea.vmem [#allocation2], 48
      %v616 = vld [vmem:[%s615] sm:$0xff]
      %v617 = vld [vmem:[%s615 + $0x8] sm:$0xff]
      %v618 = vld [vmem:[%s615 + $0x18] sm:$0xff]
      %v619 = vld [vmem:[%s615 + $0x20] sm:$0xff]
      %v620 = vld [vmem:[%s615 + $0x30] sm:$0xff]
      %v621 = vld [vmem:[%s615 + $0x38] sm:$0xff]
      %v622 = vld [vmem:[%s615 + $0x48] sm:$0xff]
      %v623 = vld [vmem:[%s615 + $0x50] sm:$0xff]
      %v624 = vld [vmem:[%s615 + $0x60] sm:$0xff]
      %v625 = vld [vmem:[%s615 + $0x68] sm:$0xff]
      %v626 = vld [vmem:[%s615 + $0x78] sm:$0xff]
      %v627 = vld [vmem:[%s615 + $0x80] sm:$0xff]
      %v628 = vld [vmem:[%s615 + $0x90] sm:$0xff]
      %v629 = vld [vmem:[%s615 + $0x98] sm:$0xff]
      %v630 = vld [vmem:[%s615 + $0xa8] sm:$0xff]
      %v631 = vld [vmem:[%s615 + $0xb0] sm:$0xff]
      %v632 = vld [vmem:[%s615 + $0xc0] sm:$0xff]
      %v633 = vld [vmem:[%s615 + $0xc8] sm:$0xff]
      %v634 = vld [vmem:[%s615 + $0xd8] sm:$0xff]
      %v635 = vld [vmem:[%s615 + $0xe0] sm:$0xff]
      %v636 = vld [vmem:[%s615 + $0xf0] sm:$0xff]
      %v637 = vld [vmem:[%s615 + $0xf8] sm:$0xff]
      %v638 = vld [vmem:[%s615 + $0x108] sm:$0xff]
      %v639 = vld [vmem:[%s615 + $0x110] sm:$0xff]
      %v640 = vld [vmem:[%s615 + $0x120] sm:$0xff]
      %v641 = vld [vmem:[%s615 + $0x128] sm:$0xff]
      %v642 = vld [vmem:[%s615 + $0x138] sm:$0xff]
      %v643 = vld [vmem:[%s615 + $0x140] sm:$0xff]
      %v644 = vld [vmem:[%s615 + $0x150] sm:$0xff]
      %v645 = vld [vmem:[%s615 + $0x158] sm:$0xff]
      %v646 = vld [vmem:[%s615 + $0x168] sm:$0xff]
      %v647 = vld [vmem:[%s615 + $0x170] sm:$0xff]
      %v648 = vld [vmem:[%s615 + $0x1] sm:$0xff]
      %v649 = vld [vmem:[%s615 + $0x9] sm:$0xff]
      %v650 = vld [vmem:[%s615 + $0x19] sm:$0xff]
      %v651 = vld [vmem:[%s615 + $0x21] sm:$0xff]
      %v652 = vld [vmem:[%s615 + $0x31] sm:$0xff]
      %v653 = vld [vmem:[%s615 + $0x39] sm:$0xff]
      %v654 = vld [vmem:[%s615 + $0x49] sm:$0xff]
      %v655 = vld [vmem:[%s615 + $0x51] sm:$0xff]
      %v656 = vld [vmem:[%s615 + $0x61] sm:$0xff]
      %v657 = vld [vmem:[%s615 + $0x69] sm:$0xff]
      %v658 = vld [vmem:[%s615 + $0x79] sm:$0xff]
      %v659 = vld [vmem:[%s615 + $0x81] sm:$0xff]
      %v660 = vld [vmem:[%s615 + $0x91] sm:$0xff]
      %v661 = vld [vmem:[%s615 + $0x99] sm:$0xff]
      %v662 = vld [vmem:[%s615 + $0xa9] sm:$0xff]
      %v663 = vld [vmem:[%s615 + $0xb1] sm:$0xff]
      %v664 = vld [vmem:[%s615 + $0xc1] sm:$0xff]
      %v665 = vld [vmem:[%s615 + $0xc9] sm:$0xff]
      %v666 = vld [vmem:[%s615 + $0xd9] sm:$0xff]
      %v667 = vld [vmem:[%s615 + $0xe1] sm:$0xff]
      %v668 = vld [vmem:[%s615 + $0xf1] sm:$0xff]
      %v669 = vld [vmem:[%s615 + $0xf9] sm:$0xff]
      %v670 = vld [vmem:[%s615 + $0x109] sm:$0xff]
      %v671 = vld [vmem:[%s615 + $0x111] sm:$0xff]
      %v672 = vld [vmem:[%s615 + $0x121] sm:$0xff]
      %v673 = vld [vmem:[%s615 + $0x129] sm:$0xff]
      %v674 = vld [vmem:[%s615 + $0x139] sm:$0xff]
      %v675 = vld [vmem:[%s615 + $0x141] sm:$0xff]
      %v676 = vld [vmem:[%s615 + $0x151] sm:$0xff]
      %v677 = vld [vmem:[%s615 + $0x159] sm:$0xff]
      %v678 = vld [vmem:[%s615 + $0x169] sm:$0xff]
      %v679 = vld [vmem:[%s615 + $0x171] sm:$0xff]
      %v680 = vld [vmem:[%s615 + $0x2] sm:$0xff]
      %v681 = vld [vmem:[%s615 + $0xa] sm:$0xff]
      %v682 = vld [vmem:[%s615 + $0x1a] sm:$0xff]
      %v683 = vld [vmem:[%s615 + $0x22] sm:$0xff]
      %v684 = vld [vmem:[%s615 + $0x32] sm:$0xff]
      %v685 = vld [vmem:[%s615 + $0x3a] sm:$0xff]
      %v686 = vld [vmem:[%s615 + $0x4a] sm:$0xff]
      %v687 = vld [vmem:[%s615 + $0x52] sm:$0xff]
      %v688 = vld [vmem:[%s615 + $0x62] sm:$0xff]
      %v689 = vld [vmem:[%s615 + $0x6a] sm:$0xff]
      %v690 = vld [vmem:[%s615 + $0x7a] sm:$0xff]
      %v691 = vld [vmem:[%s615 + $0x82] sm:$0xff]
      %v692 = vld [vmem:[%s615 + $0x92] sm:$0xff]
      %v693 = vld [vmem:[%s615 + $0x9a] sm:$0xff]
      %v694 = vld [vmem:[%s615 + $0xaa] sm:$0xff]
      %v695 = vld [vmem:[%s615 + $0xb2] sm:$0xff]
      %v696 = vld [vmem:[%s615 + $0xc2] sm:$0xff]
      %v697 = vld [vmem:[%s615 + $0xca] sm:$0xff]
      %v698 = vld [vmem:[%s615 + $0xda] sm:$0xff]
      %v699 = vld [vmem:[%s615 + $0xe2] sm:$0xff]
      %v700 = vld [vmem:[%s615 + $0xf2] sm:$0xff]
      %v701 = vld [vmem:[%s615 + $0xfa] sm:$0xff]
      %v702 = vld [vmem:[%s615 + $0x10a] sm:$0xff]
      %v703 = vld [vmem:[%s615 + $0x112] sm:$0xff]
      %v704 = vld [vmem:[%s615 + $0x122] sm:$0xff]
      %v705 = vld [vmem:[%s615 + $0x12a] sm:$0xff]
      %v706 = vld [vmem:[%s615 + $0x13a] sm:$0xff]
      %v707 = vld [vmem:[%s615 + $0x142] sm:$0xff]
      %v708 = vld [vmem:[%s615 + $0x152] sm:$0xff]
      %v709 = vld [vmem:[%s615 + $0x15a] sm:$0xff]
      %v710 = vld [vmem:[%s615 + $0x16a] sm:$0xff]
      %v711 = vld [vmem:[%s615 + $0x172] sm:$0xff]
      %744 = vrot.lane.b32.xlu0 %v455, 4
      %v745 = vpop.permute.xlu0 %744
      %746 = vrot.lane.b32.xlu0 %v456, 4
      %v747 = vpop.permute.xlu0 %746
      %748 = vrot.lane.b32.xlu0 %v457, 4
      %v749 = vpop.permute.xlu0 %748
      %750 = vrot.lane.b32.xlu0 %v458, 4
      %v751 = vpop.permute.xlu0 %750
      %752 = vrot.lane.b32.xlu0 %v459, 4
      %v753 = vpop.permute.xlu0 %752
      %754 = vrot.lane.b32.xlu0 %v460, 4
      %v755 = vpop.permute.xlu0 %754
      %756 = vrot.lane.b32.xlu0 %v461, 4
      %v757 = vpop.permute.xlu0 %756
      %758 = vrot.lane.b32.xlu0 %v462, 4
      %v759 = vpop.permute.xlu0 %758
      %760 = vrot.lane.b32.xlu0 %v463, 4
      %v761 = vpop.permute.xlu0 %760
      %762 = vrot.lane.b32.xlu0 %v464, 4
      %v763 = vpop.permute.xlu0 %762
      %764 = vrot.lane.b32.xlu0 %v465, 4
      %v765 = vpop.permute.xlu0 %764
      %766 = vrot.lane.b32.xlu0 %v466, 4
      %v767 = vpop.permute.xlu0 %766
      %768 = vrot.lane.b32.xlu0 %v467, 4
      %v769 = vpop.permute.xlu0 %768
      %770 = vrot.lane.b32.xlu0 %v468, 4
      %v771 = vpop.permute.xlu0 %770
      %772 = vrot.lane.b32.xlu0 %v469, 4
      %v773 = vpop.permute.xlu0 %772
      %774 = vrot.lane.b32.xlu0 %v470, 4
      %v775 = vpop.permute.xlu0 %774
      %776 = vrot.lane.b32.xlu0 %v471, 4
      %v777 = vpop.permute.xlu0 %776
      %778 = vrot.lane.b32.xlu0 %v472, 4
      %v779 = vpop.permute.xlu0 %778
      %780 = vrot.lane.b32.xlu0 %v473, 4
      %v781 = vpop.permute.xlu0 %780
      %782 = vrot.lane.b32.xlu0 %v474, 4
      %v783 = vpop.permute.xlu0 %782
      %784 = vrot.lane.b32.xlu0 %v475, 4
      %v785 = vpop.permute.xlu0 %784
      %786 = vrot.lane.b32.xlu0 %v476, 4
      %v787 = vpop.permute.xlu0 %786
      %788 = vrot.lane.b32.xlu0 %v477, 4
      %v789 = vpop.permute.xlu0 %788
      %790 = vrot.lane.b32.xlu0 %v478, 4
      %v791 = vpop.permute.xlu0 %790
      %792 = vrot.lane.b32.xlu0 %v479, 4
      %v793 = vpop.permute.xlu0 %792
      %794 = vrot.lane.b32.xlu0 %v480, 4
      %v795 = vpop.permute.xlu0 %794
      %796 = vrot.lane.b32.xlu0 %v481, 4
      %v797 = vpop.permute.xlu0 %796
      %798 = vrot.lane.b32.xlu0 %v482, 4
      %v799 = vpop.permute.xlu0 %798
      %800 = vrot.lane.b32.xlu0 %v483, 4
      %v801 = vpop.permute.xlu0 %800
      %802 = vrot.lane.b32.xlu0 %v484, 4
      %v803 = vpop.permute.xlu0 %802
      %804 = vrot.lane.b32.xlu0 %v485, 4
      %v805 = vpop.permute.xlu0 %804
      %806 = vrot.lane.b32.xlu0 %v486, 4
      %v807 = vpop.permute.xlu0 %806
      %872 = vrot.lane.b32.xlu0 %v487, 8
      %v873 = vpop.permute.xlu0 %872
      %874 = vrot.lane.b32.xlu0 %v488, 8
      %v875 = vpop.permute.xlu0 %874
      %876 = vrot.lane.b32.xlu0 %v489, 8
      %v877 = vpop.permute.xlu0 %876
      %878 = vrot.lane.b32.xlu0 %v490, 8
      %v879 = vpop.permute.xlu0 %878
      %880 = vrot.lane.b32.xlu0 %v491, 8
      %v881 = vpop.permute.xlu0 %880
      %882 = vrot.lane.b32.xlu0 %v492, 8
      %v883 = vpop.permute.xlu0 %882
      %884 = vrot.lane.b32.xlu0 %v493, 8
      %v885 = vpop.permute.xlu0 %884
      %886 = vrot.lane.b32.xlu0 %v494, 8
      %v887 = vpop.permute.xlu0 %886
      %888 = vrot.lane.b32.xlu0 %v495, 8
      %v889 = vpop.permute.xlu0 %888
      %890 = vrot.lane.b32.xlu0 %v496, 8
      %v891 = vpop.permute.xlu0 %890
      %892 = vrot.lane.b32.xlu0 %v497, 8
      %v893 = vpop.permute.xlu0 %892
      %894 = vrot.lane.b32.xlu0 %v498, 8
      %v895 = vpop.permute.xlu0 %894
      %896 = vrot.lane.b32.xlu0 %v499, 8
      %v897 = vpop.permute.xlu0 %896
      %898 = vrot.lane.b32.xlu0 %v500, 8
      %v899 = vpop.permute.xlu0 %898
      %900 = vrot.lane.b32.xlu0 %v501, 8
      %v901 = vpop.permute.xlu0 %900
      %902 = vrot.lane.b32.xlu0 %v502, 8
      %v903 = vpop.permute.xlu0 %902
      %904 = vrot.lane.b32.xlu0 %v503, 8
      %v905 = vpop.permute.xlu0 %904
      %906 = vrot.lane.b32.xlu0 %v504, 8
      %v907 = vpop.permute.xlu0 %906
      %908 = vrot.lane.b32.xlu0 %v505, 8
      %v909 = vpop.permute.xlu0 %908
      %910 = vrot.lane.b32.xlu0 %v506, 8
      %v911 = vpop.permute.xlu0 %910
      %912 = vrot.lane.b32.xlu0 %v507, 8
      %v913 = vpop.permute.xlu0 %912
      %914 = vrot.lane.b32.xlu0 %v508, 8
      %v915 = vpop.permute.xlu0 %914
      %916 = vrot.lane.b32.xlu0 %v509, 8
      %v917 = vpop.permute.xlu0 %916
      %918 = vrot.lane.b32.xlu0 %v510, 8
      %v919 = vpop.permute.xlu0 %918
      %920 = vrot.lane.b32.xlu0 %v511, 8
      %v921 = vpop.permute.xlu0 %920
      %922 = vrot.lane.b32.xlu0 %v512, 8
      %v923 = vpop.permute.xlu0 %922
      %924 = vrot.lane.b32.xlu0 %v513, 8
      %v925 = vpop.permute.xlu0 %924
      %926 = vrot.lane.b32.xlu0 %v514, 8
      %v927 = vpop.permute.xlu0 %926
      %928 = vrot.lane.b32.xlu0 %v515, 8
      %v929 = vpop.permute.xlu0 %928
      %930 = vrot.lane.b32.xlu0 %v516, 8
      %v931 = vpop.permute.xlu0 %930
      %932 = vrot.lane.b32.xlu0 %v517, 8
      %v933 = vpop.permute.xlu0 %932
      %934 = vrot.lane.b32.xlu0 %v518, 8
      %v935 = vpop.permute.xlu0 %934
      %1000 = vrot.lane.b32.xlu0 %v519, 12
      %v1001 = vpop.permute.xlu0 %1000
      %1002 = vrot.lane.b32.xlu0 %v520, 12
      %v1003 = vpop.permute.xlu0 %1002
      %1004 = vrot.lane.b32.xlu0 %v521, 12
      %v1005 = vpop.permute.xlu0 %1004
      %1006 = vrot.lane.b32.xlu0 %v522, 12
      %v1007 = vpop.permute.xlu0 %1006
      %1008 = vrot.lane.b32.xlu0 %v523, 12
      %v1009 = vpop.permute.xlu0 %1008
      %1010 = vrot.lane.b32.xlu0 %v524, 12
      %v1011 = vpop.permute.xlu0 %1010
      %1012 = vrot.lane.b32.xlu0 %v525, 12
      %v1013 = vpop.permute.xlu0 %1012
      %1014 = vrot.lane.b32.xlu0 %v526, 12
      %v1015 = vpop.permute.xlu0 %1014
      %1016 = vrot.lane.b32.xlu0 %v527, 12
      %v1017 = vpop.permute.xlu0 %1016
      %1018 = vrot.lane.b32.xlu0 %v528, 12
      %v1019 = vpop.permute.xlu0 %1018
      %1020 = vrot.lane.b32.xlu0 %v529, 12
      %v1021 = vpop.permute.xlu0 %1020
      %1022 = vrot.lane.b32.xlu0 %v530, 12
      %v1023 = vpop.permute.xlu0 %1022
      %1024 = vrot.lane.b32.xlu0 %v531, 12
      %v1025 = vpop.permute.xlu0 %1024
      %1026 = vrot.lane.b32.xlu0 %v532, 12
      %v1027 = vpop.permute.xlu0 %1026
      %1028 = vrot.lane.b32.xlu0 %v533, 12
      %v1029 = vpop.permute.xlu0 %1028
      %1030 = vrot.lane.b32.xlu0 %v534, 12
      %v1031 = vpop.permute.xlu0 %1030
      %1032 = vrot.lane.b32.xlu0 %v535, 12
      %v1033 = vpop.permute.xlu0 %1032
      %1034 = vrot.lane.b32.xlu0 %v536, 12
      %v1035 = vpop.permute.xlu0 %1034
      %1036 = vrot.lane.b32.xlu0 %v537, 12
      %v1037 = vpop.permute.xlu0 %1036
      %1038 = vrot.lane.b32.xlu0 %v538, 12
      %v1039 = vpop.permute.xlu0 %1038
      %1040 = vrot.lane.b32.xlu0 %v539, 12
      %v1041 = vpop.permute.xlu0 %1040
      %1042 = vrot.lane.b32.xlu0 %v540, 12
      %v1043 = vpop.permute.xlu0 %1042
      %1044 = vrot.lane.b32.xlu0 %v541, 12
      %v1045 = vpop.permute.xlu0 %1044
      %1046 = vrot.lane.b32.xlu0 %v542, 12
      %v1047 = vpop.permute.xlu0 %1046
      %1048 = vrot.lane.b32.xlu0 %v543, 12
      %v1049 = vpop.permute.xlu0 %1048
      %1050 = vrot.lane.b32.xlu0 %v544, 12
      %v1051 = vpop.permute.xlu0 %1050
      %1052 = vrot.lane.b32.xlu0 %v545, 12
      %v1053 = vpop.permute.xlu0 %1052
      %1054 = vrot.lane.b32.xlu0 %v546, 12
      %v1055 = vpop.permute.xlu0 %1054
      %1056 = vrot.lane.b32.xlu0 %v547, 12
      %v1057 = vpop.permute.xlu0 %1056
      %1058 = vrot.lane.b32.xlu0 %v548, 12
      %v1059 = vpop.permute.xlu0 %1058
      %1060 = vrot.lane.b32.xlu0 %v549, 12
      %v1061 = vpop.permute.xlu0 %1060
      %1062 = vrot.lane.b32.xlu0 %v550, 12
      %v1063 = vpop.permute.xlu0 %1062
      %1128 = vrot.lane.b32.xlu0 %v551, 16
      %v1129 = vpop.permute.xlu0 %1128
      %1130 = vrot.lane.b32.xlu0 %v552, 16
      %v1131 = vpop.permute.xlu0 %1130
      %1132 = vrot.lane.b32.xlu0 %v553, 16
      %v1133 = vpop.permute.xlu0 %1132
      %1134 = vrot.lane.b32.xlu0 %v554, 16
      %v1135 = vpop.permute.xlu0 %1134
      %1136 = vrot.lane.b32.xlu0 %v555, 16
      %v1137 = vpop.permute.xlu0 %1136
      %1138 = vrot.lane.b32.xlu0 %v556, 16
      %v1139 = vpop.permute.xlu0 %1138
      %1140 = vrot.lane.b32.xlu0 %v557, 16
      %v1141 = vpop.permute.xlu0 %1140
      %1142 = vrot.lane.b32.xlu0 %v558, 16
      %v1143 = vpop.permute.xlu0 %1142
      %1144 = vrot.lane.b32.xlu0 %v559, 16
      %v1145 = vpop.permute.xlu0 %1144
      %1146 = vrot.lane.b32.xlu0 %v560, 16
      %v1147 = vpop.permute.xlu0 %1146
      %1148 = vrot.lane.b32.xlu0 %v561, 16
      %v1149 = vpop.permute.xlu0 %1148
      %1150 = vrot.lane.b32.xlu0 %v562, 16
      %v1151 = vpop.permute.xlu0 %1150
      %1152 = vrot.lane.b32.xlu0 %v563, 16
      %v1153 = vpop.permute.xlu0 %1152
      %1154 = vrot.lane.b32.xlu0 %v564, 16
      %v1155 = vpop.permute.xlu0 %1154
      %1156 = vrot.lane.b32.xlu0 %v565, 16
      %v1157 = vpop.permute.xlu0 %1156
      %1158 = vrot.lane.b32.xlu0 %v566, 16
      %v1159 = vpop.permute.xlu0 %1158
      %1160 = vrot.lane.b32.xlu0 %v567, 16
      %v1161 = vpop.permute.xlu0 %1160
      %1162 = vrot.lane.b32.xlu0 %v568, 16
      %v1163 = vpop.permute.xlu0 %1162
      %1164 = vrot.lane.b32.xlu0 %v569, 16
      %v1165 = vpop.permute.xlu0 %1164
      %1166 = vrot.lane.b32.xlu0 %v570, 16
      %v1167 = vpop.permute.xlu0 %1166
      %1168 = vrot.lane.b32.xlu0 %v571, 16
      %v1169 = vpop.permute.xlu0 %1168
      %1170 = vrot.lane.b32.xlu0 %v572, 16
      %v1171 = vpop.permute.xlu0 %1170
      %1172 = vrot.lane.b32.xlu0 %v573, 16
      %v1173 = vpop.permute.xlu0 %1172
      %1174 = vrot.lane.b32.xlu0 %v574, 16
      %v1175 = vpop.permute.xlu0 %1174
      %1176 = vrot.lane.b32.xlu0 %v575, 16
      %v1177 = vpop.permute.xlu0 %1176
      %1178 = vrot.lane.b32.xlu0 %v576, 16
      %v1179 = vpop.permute.xlu0 %1178
      %1180 = vrot.lane.b32.xlu0 %v577, 16
      %v1181 = vpop.permute.xlu0 %1180
      %1182 = vrot.lane.b32.xlu0 %v578, 16
      %v1183 = vpop.permute.xlu0 %1182
      %1184 = vrot.lane.b32.xlu0 %v579, 16
      %v1185 = vpop.permute.xlu0 %1184
      %1186 = vrot.lane.b32.xlu0 %v580, 16
      %v1187 = vpop.permute.xlu0 %1186
      %1188 = vrot.lane.b32.xlu0 %v581, 16
      %v1189 = vpop.permute.xlu0 %1188
      %1190 = vrot.lane.b32.xlu0 %v582, 16
      %v1191 = vpop.permute.xlu0 %1190
      %1256 = vrot.lane.b32.xlu0 %v583, 20
      %v1257 = vpop.permute.xlu0 %1256
      %1258 = vrot.lane.b32.xlu0 %v584, 20
      %v1259 = vpop.permute.xlu0 %1258
      %1260 = vrot.lane.b32.xlu0 %v585, 20
      %v1261 = vpop.permute.xlu0 %1260
      %1262 = vrot.lane.b32.xlu0 %v586, 20
      %v1263 = vpop.permute.xlu0 %1262
      %1264 = vrot.lane.b32.xlu0 %v587, 20
      %v1265 = vpop.permute.xlu0 %1264
      %1266 = vrot.lane.b32.xlu0 %v588, 20
      %v1267 = vpop.permute.xlu0 %1266
      %1268 = vrot.lane.b32.xlu0 %v589, 20
      %v1269 = vpop.permute.xlu0 %1268
      %1270 = vrot.lane.b32.xlu0 %v590, 20
      %v1271 = vpop.permute.xlu0 %1270
      %1272 = vrot.lane.b32.xlu0 %v591, 20
      %v1273 = vpop.permute.xlu0 %1272
      %1274 = vrot.lane.b32.xlu0 %v592, 20
      %v1275 = vpop.permute.xlu0 %1274
      %1276 = vrot.lane.b32.xlu0 %v593, 20
      %v1277 = vpop.permute.xlu0 %1276
      %1278 = vrot.lane.b32.xlu0 %v594, 20
      %v1279 = vpop.permute.xlu0 %1278
      %1280 = vrot.lane.b32.xlu0 %v595, 20
      %v1281 = vpop.permute.xlu0 %1280
      %1282 = vrot.lane.b32.xlu0 %v596, 20
      %v1283 = vpop.permute.xlu0 %1282
      %1284 = vrot.lane.b32.xlu0 %v597, 20
      %v1285 = vpop.permute.xlu0 %1284
      %1286 = vrot.lane.b32.xlu0 %v598, 20
      %v1287 = vpop.permute.xlu0 %1286
      %1288 = vrot.lane.b32.xlu0 %v599, 20
      %v1289 = vpop.permute.xlu0 %1288
      %1290 = vrot.lane.b32.xlu0 %v600, 20
      %v1291 = vpop.permute.xlu0 %1290
      %1292 = vrot.lane.b32.xlu0 %v601, 20
      %v1293 = vpop.permute.xlu0 %1292
      %1294 = vrot.lane.b32.xlu0 %v602, 20
      %v1295 = vpop.permute.xlu0 %1294
      %1296 = vrot.lane.b32.xlu0 %v603, 20
      %v1297 = vpop.permute.xlu0 %1296
      %1298 = vrot.lane.b32.xlu0 %v604, 20
      %v1299 = vpop.permute.xlu0 %1298
      %1300 = vrot.lane.b32.xlu0 %v605, 20
      %v1301 = vpop.permute.xlu0 %1300
      %1302 = vrot.lane.b32.xlu0 %v606, 20
      %v1303 = vpop.permute.xlu0 %1302
      %1304 = vrot.lane.b32.xlu0 %v607, 20
      %v1305 = vpop.permute.xlu0 %1304
      %1306 = vrot.lane.b32.xlu0 %v608, 20
      %v1307 = vpop.permute.xlu0 %1306
      %1308 = vrot.lane.b32.xlu0 %v609, 20
      %v1309 = vpop.permute.xlu0 %1308
      %1310 = vrot.lane.b32.xlu0 %v610, 20
      %v1311 = vpop.permute.xlu0 %1310
      %1312 = vrot.lane.b32.xlu0 %v611, 20
      %v1313 = vpop.permute.xlu0 %1312
      %1314 = vrot.lane.b32.xlu0 %v612, 20
      %v1315 = vpop.permute.xlu0 %1314
      %1316 = vrot.lane.b32.xlu0 %v613, 20
      %v1317 = vpop.permute.xlu0 %1316
      %1318 = vrot.lane.b32.xlu0 %v614, 20
      %v1319 = vpop.permute.xlu0 %1318
      %1384 = vrot.lane.b32.xlu0 %v616, 24
      %v1385 = vpop.permute.xlu0 %1384
      %1386 = vrot.lane.b32.xlu0 %v617, 24
      %v1387 = vpop.permute.xlu0 %1386
      %1388 = vrot.lane.b32.xlu0 %v618, 24
      %v1389 = vpop.permute.xlu0 %1388
      %1390 = vrot.lane.b32.xlu0 %v619, 24
      %v1391 = vpop.permute.xlu0 %1390
      %1392 = vrot.lane.b32.xlu0 %v620, 24
      %v1393 = vpop.permute.xlu0 %1392
      %1394 = vrot.lane.b32.xlu0 %v621, 24
      %v1395 = vpop.permute.xlu0 %1394
      %1396 = vrot.lane.b32.xlu0 %v622, 24
      %v1397 = vpop.permute.xlu0 %1396
      %1398 = vrot.lane.b32.xlu0 %v623, 24
      %v1399 = vpop.permute.xlu0 %1398
      %1400 = vrot.lane.b32.xlu0 %v624, 24
      %v1401 = vpop.permute.xlu0 %1400
      %1402 = vrot.lane.b32.xlu0 %v625, 24
      %v1403 = vpop.permute.xlu0 %1402
      %1404 = vrot.lane.b32.xlu0 %v626, 24
      %v1405 = vpop.permute.xlu0 %1404
      %1406 = vrot.lane.b32.xlu0 %v627, 24
      %v1407 = vpop.permute.xlu0 %1406
      %1408 = vrot.lane.b32.xlu0 %v628, 24
      %v1409 = vpop.permute.xlu0 %1408
      %1410 = vrot.lane.b32.xlu0 %v629, 24
      %v1411 = vpop.permute.xlu0 %1410
      %1412 = vrot.lane.b32.xlu0 %v630, 24
      %v1413 = vpop.permute.xlu0 %1412
      %1414 = vrot.lane.b32.xlu0 %v631, 24
      %v1415 = vpop.permute.xlu0 %1414
      %1416 = vrot.lane.b32.xlu0 %v632, 24
      %v1417 = vpop.permute.xlu0 %1416
      %1418 = vrot.lane.b32.xlu0 %v633, 24
      %v1419 = vpop.permute.xlu0 %1418
      %1420 = vrot.lane.b32.xlu0 %v634, 24
      %v1421 = vpop.permute.xlu0 %1420
      %1422 = vrot.lane.b32.xlu0 %v635, 24
      %v1423 = vpop.permute.xlu0 %1422
      %1424 = vrot.lane.b32.xlu0 %v636, 24
      %v1425 = vpop.permute.xlu0 %1424
      %1426 = vrot.lane.b32.xlu0 %v637, 24
      %v1427 = vpop.permute.xlu0 %1426
      %1428 = vrot.lane.b32.xlu0 %v638, 24
      %v1429 = vpop.permute.xlu0 %1428
      %1430 = vrot.lane.b32.xlu0 %v639, 24
      %v1431 = vpop.permute.xlu0 %1430
      %1432 = vrot.lane.b32.xlu0 %v640, 24
      %v1433 = vpop.permute.xlu0 %1432
      %1434 = vrot.lane.b32.xlu0 %v641, 24
      %v1435 = vpop.permute.xlu0 %1434
      %1436 = vrot.lane.b32.xlu0 %v642, 24
      %v1437 = vpop.permute.xlu0 %1436
      %1438 = vrot.lane.b32.xlu0 %v643, 24
      %v1439 = vpop.permute.xlu0 %1438
      %1440 = vrot.lane.b32.xlu0 %v644, 24
      %v1441 = vpop.permute.xlu0 %1440
      %1442 = vrot.lane.b32.xlu0 %v645, 24
      %v1443 = vpop.permute.xlu0 %1442
      %1444 = vrot.lane.b32.xlu0 %v646, 24
      %v1445 = vpop.permute.xlu0 %1444
      %1446 = vrot.lane.b32.xlu0 %v647, 24
      %v1447 = vpop.permute.xlu0 %1446
      %1512 = vrot.lane.b32.xlu0 %v648, 28
      %v1513 = vpop.permute.xlu0 %1512
      %1514 = vrot.lane.b32.xlu0 %v649, 28
      %v1515 = vpop.permute.xlu0 %1514
      %1516 = vrot.lane.b32.xlu0 %v650, 28
      %v1517 = vpop.permute.xlu0 %1516
      %1518 = vrot.lane.b32.xlu0 %v651, 28
      %v1519 = vpop.permute.xlu0 %1518
      %1520 = vrot.lane.b32.xlu0 %v652, 28
      %v1521 = vpop.permute.xlu0 %1520
      %1522 = vrot.lane.b32.xlu0 %v653, 28
      %v1523 = vpop.permute.xlu0 %1522
      %1524 = vrot.lane.b32.xlu0 %v654, 28
      %v1525 = vpop.permute.xlu0 %1524
      %1526 = vrot.lane.b32.xlu0 %v655, 28
      %v1527 = vpop.permute.xlu0 %1526
      %1528 = vrot.lane.b32.xlu0 %v656, 28
      %v1529 = vpop.permute.xlu0 %1528
      %1530 = vrot.lane.b32.xlu0 %v657, 28
      %v1531 = vpop.permute.xlu0 %1530
      %1532 = vrot.lane.b32.xlu0 %v658, 28
      %v1533 = vpop.permute.xlu0 %1532
      %1534 = vrot.lane.b32.xlu0 %v659, 28
      %v1535 = vpop.permute.xlu0 %1534
      %1536 = vrot.lane.b32.xlu0 %v660, 28
      %v1537 = vpop.permute.xlu0 %1536
      %1538 = vrot.lane.b32.xlu0 %v661, 28
      %v1539 = vpop.permute.xlu0 %1538
      %1540 = vrot.lane.b32.xlu0 %v662, 28
      %v1541 = vpop.permute.xlu0 %1540
      %1542 = vrot.lane.b32.xlu0 %v663, 28
      %v1543 = vpop.permute.xlu0 %1542
      %1544 = vrot.lane.b32.xlu0 %v664, 28
      %v1545 = vpop.permute.xlu0 %1544
      %1546 = vrot.lane.b32.xlu0 %v665, 28
      %v1547 = vpop.permute.xlu0 %1546
      %1548 = vrot.lane.b32.xlu0 %v666, 28
      %v1549 = vpop.permute.xlu0 %1548
      %1550 = vrot.lane.b32.xlu0 %v667, 28
      %v1551 = vpop.permute.xlu0 %1550
      %1552 = vrot.lane.b32.xlu0 %v668, 28
      %v1553 = vpop.permute.xlu0 %1552
      %1554 = vrot.lane.b32.xlu0 %v669, 28
      %v1555 = vpop.permute.xlu0 %1554
      %1556 = vrot.lane.b32.xlu0 %v670, 28
      %v1557 = vpop.permute.xlu0 %1556
      %1558 = vrot.lane.b32.xlu0 %v671, 28
      %v1559 = vpop.permute.xlu0 %1558
      %1560 = vrot.lane.b32.xlu0 %v672, 28
      %v1561 = vpop.permute.xlu0 %1560
      %1562 = vrot.lane.b32.xlu0 %v673, 28
      %v1563 = vpop.permute.xlu0 %1562
      %1564 = vrot.lane.b32.xlu0 %v674, 28
      %v1565 = vpop.permute.xlu0 %1564
      %1566 = vrot.lane.b32.xlu0 %v675, 28
      %v1567 = vpop.permute.xlu0 %1566
      %1568 = vrot.lane.b32.xlu0 %v676, 28
      %v1569 = vpop.permute.xlu0 %1568
      %1570 = vrot.lane.b32.xlu0 %v677, 28
      %v1571 = vpop.permute.xlu0 %1570
      %1572 = vrot.lane.b32.xlu0 %v678, 28
      %v1573 = vpop.permute.xlu0 %1572
      %1574 = vrot.lane.b32.xlu0 %v679, 28
      %v1575 = vpop.permute.xlu0 %1574
      %1640 = vrot.lane.b32.xlu0 %v680, 32
      %v1641 = vpop.permute.xlu0 %1640
      %1642 = vrot.lane.b32.xlu0 %v681, 32
      %v1643 = vpop.permute.xlu0 %1642
      %1644 = vrot.lane.b32.xlu0 %v682, 32
      %v1645 = vpop.permute.xlu0 %1644
      %1646 = vrot.lane.b32.xlu0 %v683, 32
      %v1647 = vpop.permute.xlu0 %1646
      %1648 = vrot.lane.b32.xlu0 %v684, 32
      %v1649 = vpop.permute.xlu0 %1648
      %1650 = vrot.lane.b32.xlu0 %v685, 32
      %v1651 = vpop.permute.xlu0 %1650
      %1652 = vrot.lane.b32.xlu0 %v686, 32
      %v1653 = vpop.permute.xlu0 %1652
      %1654 = vrot.lane.b32.xlu0 %v687, 32
      %v1655 = vpop.permute.xlu0 %1654
      %1656 = vrot.lane.b32.xlu0 %v688, 32
      %v1657 = vpop.permute.xlu0 %1656
      %1658 = vrot.lane.b32.xlu0 %v689, 32
      %v1659 = vpop.permute.xlu0 %1658
      %1660 = vrot.lane.b32.xlu0 %v690, 32
      %v1661 = vpop.permute.xlu0 %1660
      %1662 = vrot.lane.b32.xlu0 %v691, 32
      %v1663 = vpop.permute.xlu0 %1662
      %1664 = vrot.lane.b32.xlu0 %v692, 32
      %v1665 = vpop.permute.xlu0 %1664
      %1666 = vrot.lane.b32.xlu0 %v693, 32
      %v1667 = vpop.permute.xlu0 %1666
      %1668 = vrot.lane.b32.xlu0 %v694, 32
      %v1669 = vpop.permute.xlu0 %1668
      %1670 = vrot.lane.b32.xlu0 %v695, 32
      %v1671 = vpop.permute.xlu0 %1670
      %1672 = vrot.lane.b32.xlu0 %v696, 32
      %v1673 = vpop.permute.xlu0 %1672
      %1674 = vrot.lane.b32.xlu0 %v697, 32
      %v1675 = vpop.permute.xlu0 %1674
      %1676 = vrot.lane.b32.xlu0 %v698, 32
      %v1677 = vpop.permute.xlu0 %1676
      %1678 = vrot.lane.b32.xlu0 %v699, 32
      %v1679 = vpop.permute.xlu0 %1678
      %1680 = vrot.lane.b32.xlu0 %v700, 32
      %v1681 = vpop.permute.xlu0 %1680
      %1682 = vrot.lane.b32.xlu0 %v701, 32
      %v1683 = vpop.permute.xlu0 %1682
      %1684 = vrot.lane.b32.xlu0 %v702, 32
      %v1685 = vpop.permute.xlu0 %1684
      %1686 = vrot.lane.b32.xlu0 %v703, 32
      %v1687 = vpop.permute.xlu0 %1686
      %1688 = vrot.lane.b32.xlu0 %v704, 32
      %v1689 = vpop.permute.xlu0 %1688
      %1690 = vrot.lane.b32.xlu0 %v705, 32
      %v1691 = vpop.permute.xlu0 %1690
      %1692 = vrot.lane.b32.xlu0 %v706, 32
      %v1693 = vpop.permute.xlu0 %1692
      %1694 = vrot.lane.b32.xlu0 %v707, 32
      %v1695 = vpop.permute.xlu0 %1694
      %1696 = vrot.lane.b32.xlu0 %v708, 32
      %v1697 = vpop.permute.xlu0 %1696
      %1698 = vrot.lane.b32.xlu0 %v709, 32
      %v1699 = vpop.permute.xlu0 %1698
      %1700 = vrot.lane.b32.xlu0 %v710, 32
      %v1701 = vpop.permute.xlu0 %1700
      %1702 = vrot.lane.b32.xlu0 %v711, 32
      %v1703 = vpop.permute.xlu0 %1702
      %v1736 = vsel %vm312, %v423, %v745
      %v1737 = vsel %vm312, %v424, %v747
      %v1738 = vsel %vm312, %v425, %v749
      %v1739 = vsel %vm312, %v426, %v751
      %v1740 = vsel %vm312, %v427, %v753
      %v1741 = vsel %vm312, %v428, %v755
      %v1742 = vsel %vm312, %v429, %v757
      %v1743 = vsel %vm312, %v430, %v759
      %v1744 = vsel %vm312, %v431, %v761
      %v1745 = vsel %vm312, %v432, %v763
      %v1746 = vsel %vm312, %v433, %v765
      %v1747 = vsel %vm312, %v434, %v767
      %v1748 = vsel %vm312, %v435, %v769
      %v1749 = vsel %vm312, %v436, %v771
      %v1750 = vsel %vm312, %v437, %v773
      %v1751 = vsel %vm312, %v438, %v775
      %v1752 = vsel %vm312, %v439, %v777
      %v1753 = vsel %vm312, %v440, %v779
      %v1754 = vsel %vm312, %v441, %v781
      %v1755 = vsel %vm312, %v442, %v783
      %v1756 = vsel %vm312, %v443, %v785
      %v1757 = vsel %vm312, %v444, %v787
      %v1758 = vsel %vm312, %v445, %v789
      %v1759 = vsel %vm312, %v446, %v791
      %v1760 = vsel %vm312, %v447, %v793
      %v1761 = vsel %vm312, %v448, %v795
      %v1762 = vsel %vm312, %v449, %v797
      %v1763 = vsel %vm312, %v450, %v799
      %v1764 = vsel %vm312, %v451, %v801
      %v1765 = vsel %vm312, %v452, %v803
      %v1766 = vsel %vm312, %v453, %v805
      %v1767 = vsel %vm312, %v454, %v807
      %vm1768 = vcmask 64512
      %v1769 = vsel %vm1768, %v1736, %v873
      %v1770 = vsel %vm1768, %v1737, %v875
      %v1771 = vsel %vm1768, %v1738, %v877
      %v1772 = vsel %vm1768, %v1739, %v879
      %v1773 = vsel %vm1768, %v1740, %v881
      %v1774 = vsel %vm1768, %v1741, %v883
      %v1775 = vsel %vm1768, %v1742, %v885
      %v1776 = vsel %vm1768, %v1743, %v887
      %v1777 = vsel %vm1768, %v1744, %v889
      %v1778 = vsel %vm1768, %v1745, %v891
      %v1779 = vsel %vm1768, %v1746, %v893
      %v1780 = vsel %vm1768, %v1747, %v895
      %v1781 = vsel %vm1768, %v1748, %v897
      %v1782 = vsel %vm1768, %v1749, %v899
      %v1783 = vsel %vm1768, %v1750, %v901
      %v1784 = vsel %vm1768, %v1751, %v903
      %v1785 = vsel %vm1768, %v1752, %v905
      %v1786 = vsel %vm1768, %v1753, %v907
      %v1787 = vsel %vm1768, %v1754, %v909
      %v1788 = vsel %vm1768, %v1755, %v911
      %v1789 = vsel %vm1768, %v1756, %v913
      %v1790 = vsel %vm1768, %v1757, %v915
      %v1791 = vsel %vm1768, %v1758, %v917
      %v1792 = vsel %vm1768, %v1759, %v919
      %v1793 = vsel %vm1768, %v1760, %v921
      %v1794 = vsel %vm1768, %v1761, %v923
      %v1795 = vsel %vm1768, %v1762, %v925
      %v1796 = vsel %vm1768, %v1763, %v927
      %v1797 = vsel %vm1768, %v1764, %v929
      %v1798 = vsel %vm1768, %v1765, %v931
      %v1799 = vsel %vm1768, %v1766, %v933
      %v1800 = vsel %vm1768, %v1767, %v935
      %vm1801 = vcmask 97280
      %v1802 = vsel %vm1801, %v1769, %v1001
      %v1803 = vsel %vm1801, %v1770, %v1003
      %v1804 = vsel %vm1801, %v1771, %v1005
      %v1805 = vsel %vm1801, %v1772, %v1007
      %v1806 = vsel %vm1801, %v1773, %v1009
      %v1807 = vsel %vm1801, %v1774, %v1011
      %v1808 = vsel %vm1801, %v1775, %v1013
      %v1809 = vsel %vm1801, %v1776, %v1015
      %v1810 = vsel %vm1801, %v1777, %v1017
      %v1811 = vsel %vm1801, %v1778, %v1019
      %v1812 = vsel %vm1801, %v1779, %v1021
      %v1813 = vsel %vm1801, %v1780, %v1023
      %v1814 = vsel %vm1801, %v1781, %v1025
      %v1815 = vsel %vm1801, %v1782, %v1027
      %v1816 = vsel %vm1801, %v1783, %v1029
      %v1817 = vsel %vm1801, %v1784, %v1031
      %v1818 = vsel %vm1801, %v1785, %v1033
      %v1819 = vsel %vm1801, %v1786, %v1035
      %v1820 = vsel %vm1801, %v1787, %v1037
      %v1821 = vsel %vm1801, %v1788, %v1039
      %v1822 = vsel %vm1801, %v1789, %v1041
      %v1823 = vsel %vm1801, %v1790, %v1043
      %v1824 = vsel %vm1801, %v1791, %v1045
      %v1825 = vsel %vm1801, %v1792, %v1047
      %v1826 = vsel %vm1801, %v1793, %v1049
      %v1827 = vsel %vm1801, %v1794, %v1051
      %v1828 = vsel %vm1801, %v1795, %v1053
      %v1829 = vsel %vm1801, %v1796, %v1055
      %v1830 = vsel %vm1801, %v1797, %v1057
      %v1831 = vsel %vm1801, %v1798, %v1059
      %v1832 = vsel %vm1801, %v1799, %v1061
      %v1833 = vsel %vm1801, %v1800, %v1063
      %vm1834 = vcmask 130048
      %v1835 = vsel %vm1834, %v1802, %v1129
      %v1836 = vsel %vm1834, %v1803, %v1131
      %v1837 = vsel %vm1834, %v1804, %v1133
      %v1838 = vsel %vm1834, %v1805, %v1135
      %v1839 = vsel %vm1834, %v1806, %v1137
      %v1840 = vsel %vm1834, %v1807, %v1139
      %v1841 = vsel %vm1834, %v1808, %v1141
      %v1842 = vsel %vm1834, %v1809, %v1143
      %v1843 = vsel %vm1834, %v1810, %v1145
      %v1844 = vsel %vm1834, %v1811, %v1147
      %v1845 = vsel %vm1834, %v1812, %v1149
      %v1846 = vsel %vm1834, %v1813, %v1151
      %v1847 = vsel %vm1834, %v1814, %v1153
      %v1848 = vsel %vm1834, %v1815, %v1155
      %v1849 = vsel %vm1834, %v1816, %v1157
      %v1850 = vsel %vm1834, %v1817, %v1159
      %v1851 = vsel %vm1834, %v1818, %v1161
      %v1852 = vsel %vm1834, %v1819, %v1163
      %v1853 = vsel %vm1834, %v1820, %v1165
      %v1854 = vsel %vm1834, %v1821, %v1167
      %v1855 = vsel %vm1834, %v1822, %v1169
      %v1856 = vsel %vm1834, %v1823, %v1171
      %v1857 = vsel %vm1834, %v1824, %v1173
      %v1858 = vsel %vm1834, %v1825, %v1175
      %v1859 = vsel %vm1834, %v1826, %v1177
      %v1860 = vsel %vm1834, %v1827, %v1179
      %v1861 = vsel %vm1834, %v1828, %v1181
      %v1862 = vsel %vm1834, %v1829, %v1183
      %v1863 = vsel %vm1834, %v1830, %v1185
      %v1864 = vsel %vm1834, %v1831, %v1187
      %v1865 = vsel %vm1834, %v1832, %v1189
      %v1866 = vsel %vm1834, %v1833, %v1191
      %vm1867 = vcmask 162816
      %v1868 = vsel %vm1867, %v1835, %v1257
      %v1869 = vsel %vm1867, %v1836, %v1259
      %v1870 = vsel %vm1867, %v1837, %v1261
      %v1871 = vsel %vm1867, %v1838, %v1263
      %v1872 = vsel %vm1867, %v1839, %v1265
      %v1873 = vsel %vm1867, %v1840, %v1267
      %v1874 = vsel %vm1867, %v1841, %v1269
      %v1875 = vsel %vm1867, %v1842, %v1271
      %v1876 = vsel %vm1867, %v1843, %v1273
      %v1877 = vsel %vm1867, %v1844, %v1275
      %v1878 = vsel %vm1867, %v1845, %v1277
      %v1879 = vsel %vm1867, %v1846, %v1279
      %v1880 = vsel %vm1867, %v1847, %v1281
      %v1881 = vsel %vm1867, %v1848, %v1283
      %v1882 = vsel %vm1867, %v1849, %v1285
      %v1883 = vsel %vm1867, %v1850, %v1287
      %v1884 = vsel %vm1867, %v1851, %v1289
      %v1885 = vsel %vm1867, %v1852, %v1291
      %v1886 = vsel %vm1867, %v1853, %v1293
      %v1887 = vsel %vm1867, %v1854, %v1295
      %v1888 = vsel %vm1867, %v1855, %v1297
      %v1889 = vsel %vm1867, %v1856, %v1299
      %v1890 = vsel %vm1867, %v1857, %v1301
      %v1891 = vsel %vm1867, %v1858, %v1303
      %v1892 = vsel %vm1867, %v1859, %v1305
      %v1893 = vsel %vm1867, %v1860, %v1307
      %v1894 = vsel %vm1867, %v1861, %v1309
      %v1895 = vsel %vm1867, %v1862, %v1311
      %v1896 = vsel %vm1867, %v1863, %v1313
      %v1897 = vsel %vm1867, %v1864, %v1315
      %v1898 = vsel %vm1867, %v1865, %v1317
      %v1899 = vsel %vm1867, %v1866, %v1319
      %vm1900 = vcmask 195584
      %v1901 = vsel %vm1900, %v1868, %v1385
      %v1902 = vsel %vm1900, %v1869, %v1387
      %v1903 = vsel %vm1900, %v1870, %v1389
      %v1904 = vsel %vm1900, %v1871, %v1391
      %v1905 = vsel %vm1900, %v1872, %v1393
      %v1906 = vsel %vm1900, %v1873, %v1395
      %v1907 = vsel %vm1900, %v1874, %v1397
      %v1908 = vsel %vm1900, %v1875, %v1399
      %v1909 = vsel %vm1900, %v1876, %v1401
      %v1910 = vsel %vm1900, %v1877, %v1403
      %v1911 = vsel %vm1900, %v1878, %v1405
      %v1912 = vsel %vm1900, %v1879, %v1407
      %v1913 = vsel %vm1900, %v1880, %v1409
      %v1914 = vsel %vm1900, %v1881, %v1411
      %v1915 = vsel %vm1900, %v1882, %v1413
      %v1916 = vsel %vm1900, %v1883, %v1415
      %v1917 = vsel %vm1900, %v1884, %v1417
      %v1918 = vsel %vm1900, %v1885, %v1419
      %v1919 = vsel %vm1900, %v1886, %v1421
      %v1920 = vsel %vm1900, %v1887, %v1423
      %v1921 = vsel %vm1900, %v1888, %v1425
      %v1922 = vsel %vm1900, %v1889, %v1427
      %v1923 = vsel %vm1900, %v1890, %v1429
      %v1924 = vsel %vm1900, %v1891, %v1431
      %v1925 = vsel %vm1900, %v1892, %v1433
      %v1926 = vsel %vm1900, %v1893, %v1435
      %v1927 = vsel %vm1900, %v1894, %v1437
      %v1928 = vsel %vm1900, %v1895, %v1439
      %v1929 = vsel %vm1900, %v1896, %v1441
      %v1930 = vsel %vm1900, %v1897, %v1443
      %v1931 = vsel %vm1900, %v1898, %v1445
      %v1932 = vsel %vm1900, %v1899, %v1447
      %vm1933 = vcmask 228352
      %v1934 = vsel %vm1933, %v1901, %v1513
      %v1935 = vsel %vm1933, %v1902, %v1515
      %v1936 = vsel %vm1933, %v1903, %v1517
      %v1937 = vsel %vm1933, %v1904, %v1519
      %v1938 = vsel %vm1933, %v1905, %v1521
      %v1939 = vsel %vm1933, %v1906, %v1523
      %v1940 = vsel %vm1933, %v1907, %v1525
      %v1941 = vsel %vm1933, %v1908, %v1527
      %v1942 = vsel %vm1933, %v1909, %v1529
      %v1943 = vsel %vm1933, %v1910, %v1531
      %v1944 = vsel %vm1933, %v1911, %v1533
      %v1945 = vsel %vm1933, %v1912, %v1535
      %v1946 = vsel %vm1933, %v1913, %v1537
      %v1947 = vsel %vm1933, %v1914, %v1539
      %v1948 = vsel %vm1933, %v1915, %v1541
      %v1949 = vsel %vm1933, %v1916, %v1543
      %v1950 = vsel %vm1933, %v1917, %v1545
      %v1951 = vsel %vm1933, %v1918, %v1547
      %v1952 = vsel %vm1933, %v1919, %v1549
      %v1953 = vsel %vm1933, %v1920, %v1551
      %v1954 = vsel %vm1933, %v1921, %v1553
      %v1955 = vsel %vm1933, %v1922, %v1555
      %v1956 = vsel %vm1933, %v1923, %v1557
      %v1957 = vsel %vm1933, %v1924, %v1559
      %v1958 = vsel %vm1933, %v1925, %v1561
      %v1959 = vsel %vm1933, %v1926, %v1563
      %v1960 = vsel %vm1933, %v1927, %v1565
      %v1961 = vsel %vm1933, %v1928, %v1567
      %v1962 = vsel %vm1933, %v1929, %v1569
      %v1963 = vsel %vm1933, %v1930, %v1571
      %v1964 = vsel %vm1933, %v1931, %v1573
      %v1965 = vsel %vm1933, %v1932, %v1575
      %vm1966 = vcmask 261120
      %v1967 = vsel %vm1966, %v1934, %v1641
      %v1968 = vsel %vm1966, %v1935, %v1643
      %v1969 = vsel %vm1966, %v1936, %v1645
      %v1970 = vsel %vm1966, %v1937, %v1647
      %v1971 = vsel %vm1966, %v1938, %v1649
      %v1972 = vsel %vm1966, %v1939, %v1651
      %v1973 = vsel %vm1966, %v1940, %v1653
      %v1974 = vsel %vm1966, %v1941, %v1655
      %v1975 = vsel %vm1966, %v1942, %v1657
      %v1976 = vsel %vm1966, %v1943, %v1659
      %v1977 = vsel %vm1966, %v1944, %v1661
      %v1978 = vsel %vm1966, %v1945, %v1663
      %v1979 = vsel %vm1966, %v1946, %v1665
      %v1980 = vsel %vm1966, %v1947, %v1667
      %v1981 = vsel %vm1966, %v1948, %v1669
      %v1982 = vsel %vm1966, %v1949, %v1671
      %v1983 = vsel %vm1966, %v1950, %v1673
      %v1984 = vsel %vm1966, %v1951, %v1675
      %v1985 = vsel %vm1966, %v1952, %v1677
      %v1986 = vsel %vm1966, %v1953, %v1679
      %v1987 = vsel %vm1966, %v1954, %v1681
      %v1988 = vsel %vm1966, %v1955, %v1683
      %v1989 = vsel %vm1966, %v1956, %v1685
      %v1990 = vsel %vm1966, %v1957, %v1687
      %v1991 = vsel %vm1966, %v1958, %v1689
      %v1992 = vsel %vm1966, %v1959, %v1691
      %v1993 = vsel %vm1966, %v1960, %v1693
      %v1994 = vsel %vm1966, %v1961, %v1695
      %v1995 = vsel %vm1966, %v1962, %v1697
      %v1996 = vsel %vm1966, %v1963, %v1699
      %v1997 = vsel %vm1966, %v1964, %v1701
      %v1998 = vsel %vm1966, %v1965, %v1703
      %v1999 = vld [vmem:[%s1] sm:$0xff]
      %v2000 = vld [vmem:[%s1 + $0x8] sm:$0xff]
      %v2001 = vld [vmem:[%s1 + $0x10] sm:$0xff]
      %v2002 = vld [vmem:[%s1 + $0x18] sm:$0xff]
      %v2003 = vld [vmem:[%s1 + $0x20] sm:$0xf]
      %vm2004 = vcmask 293888
      %v2006 = vsel %vm2004, %v1967, 0
      %v2009 = vsel %vm2004, %v1968, 0
      %v2012 = vsel %vm2004, %v1969, 0
      %v2015 = vsel %vm2004, %v1970, 0
      %v2018 = vsel %vm2004, %v1971, 0
      %v2021 = vsel %vm2004, %v1972, 0
      %v2024 = vsel %vm2004, %v1973, 0
      %v2027 = vsel %vm2004, %v1974, 0
      %v2030 = vsel %vm2004, %v1975, 0
      %v2033 = vsel %vm2004, %v1976, 0
      %v2036 = vsel %vm2004, %v1977, 0
      %v2039 = vsel %vm2004, %v1978, 0
      %v2042 = vsel %vm2004, %v1979, 0
      %v2045 = vsel %vm2004, %v1980, 0
      %v2048 = vsel %vm2004, %v1981, 0
      %v2051 = vsel %vm2004, %v1982, 0
      %v2054 = vsel %vm2004, %v1983, 0
      %v2057 = vsel %vm2004, %v1984, 0
      %v2060 = vsel %vm2004, %v1985, 0
      %v2063 = vsel %vm2004, %v1986, 0
      %v2066 = vsel %vm2004, %v1987, 0
      %v2069 = vsel %vm2004, %v1988, 0
      %v2072 = vsel %vm2004, %v1989, 0
      %v2075 = vsel %vm2004, %v1990, 0
      %v2078 = vsel %vm2004, %v1991, 0
      %v2081 = vsel %vm2004, %v1992, 0
      %v2084 = vsel %vm2004, %v1993, 0
      %v2087 = vsel %vm2004, %v1994, 0
      %v2090 = vsel %vm2004, %v1995, 0
      %v2093 = vsel %vm2004, %v1996, 0
      %v2096 = vsel %vm2004, %v1997, 0
      %v2099 = vsel %vm2004, %v1998, 0
      %vm2101 = vcmask 1043456
      %v2103 = vsel %vm2101, %v2003, 0
      %2105 = vmatprep.subr.mxu0 0.0
      %2106 = vmatpush1.msra.mxu0 %v1999
      %2107 = vmatprep.subr.mxu0 0.0
      %2108 = vmatpush1.msra.mxu0 %v2000
      %2109 = vmatprep.subr.mxu0 0.0
      %2110 = vmatpush1.msra.mxu0 %v2001
      %2111 = vmatprep.subr.mxu0 0.0
      %2112 = vmatpush1.msra.mxu0 %v2002
      %2113 = vmatprep.subr.mxu0 0.0
      %2114 = vmatpush1.msra.mxu0 %v2103
      %2115 = vmatprep.subr.mxu0 0.0
      %2116 = vmatpush1.msra.mxu0 0.0
      %2117 = vmatprep.subr.mxu0 0.0
      %2118 = vmatpush1.msra.mxu0 0.0
      %2119 = vmatprep.subr.mxu0 0.0
      %2120 = vmatpush1.msra.mxu0 0.0
      %2121 = vmatprep.subr.mxu0 0.0
      %2122 = vmatpush1.msra.mxu0 0.0
      %2123 = vmatprep.subr.mxu0 0.0
      %2124 = vmatpush1.msra.mxu0 0.0
      %2125 = vmatprep.subr.mxu0 0.0
      %2126 = vmatpush1.msra.mxu0 0.0
      %2127 = vmatprep.subr.mxu0 0.0
      %2128 = vmatpush1.msra.mxu0 0.0
      %2129 = vmatprep.subr.mxu0 0.0
      %2130 = vmatpush1.msra.mxu0 0.0
      %2131 = vmatprep.subr.mxu0 0.0
      %2132 = vmatpush1.msra.mxu0 0.0
      %2133 = vmatprep.subr.mxu0 0.0
      %2134 = vmatpush1.msra.mxu0 0.0
      %2135 = vmatprep.subr.mxu0 0.0
      %2136 = vmatpush1.msra.mxu0 0.0
      %2137 = vmatprep.subr.mxu0 0.0
      %2138 = vmatpush1.msra.mxu0 0.0
      %2139 = vmatprep.subr.mxu0 0.0
      %2140 = vmatpush1.msra.mxu0 0.0
      %2141 = vmatprep.subr.mxu0 0.0
      %2142 = vmatpush1.msra.mxu0 0.0
      %2143 = vmatprep.subr.mxu0 0.0
      %2144 = vmatpush1.msra.mxu0 0.0
      %2145 = vmatprep.subr.mxu0 0.0
      %2146 = vmatpush1.msra.mxu0 0.0
      %2147 = vmatprep.subr.mxu0 0.0
      %2148 = vmatpush1.msra.mxu0 0.0
      %2149 = vmatprep.subr.mxu0 0.0
      %2150 = vmatpush1.msra.mxu0 0.0
      %2151 = vmatprep.subr.mxu0 0.0
      %2152 = vmatpush1.msra.mxu0 0.0
      %2153 = vmatprep.subr.mxu0 0.0
      %2154 = vmatpush1.msra.mxu0 0.0
      %2155 = vmatprep.subr.mxu0 0.0
      %2156 = vmatpush1.msra.mxu0 0.0
      %2157 = vmatprep.subr.mxu0 0.0
      %2158 = vmatpush1.msra.mxu0 0.0
      %2159 = vmatprep.subr.mxu0 0.0
      %2160 = vmatpush1.msra.mxu0 0.0
      %2161 = vmatprep.subr.mxu0 0.0
      %2162 = vmatpush1.msra.mxu0 0.0
      %2163 = vmatprep.subr.mxu0 0.0
      %2164 = vmatpush1.msra.mxu0 0.0
      %2165 = vmatprep.subr.mxu0 0.0
      %2166 = vmatpush1.msra.mxu0 0.0
      %2167 = vmatprep.subr.mxu0 0.0
      %2168 = vmatpush1.msra.mxu0 0.0
      %2169 = vmatprep.mubr.f32.mxu0 0.0
      %2170 = vmatmul.mubr.f32.gmra.mrb[0].mxu0 %v2006
      %v2171 = vpop.f32.mrb[0].mxu0
      %v2172 = vadd.f32 0.0, %v2171
      %v2173 = vpop.f32.mrb[0].mxu0
      %2174 = vmatprep.mubr.f32.mxu0 0.0
      %2175 = vmatmul.mubr.f32.gmra.mrb[0].mxu0 %v2009
      %v2176 = vpop.f32.mrb[0].mxu0
      %v2177 = vadd.f32 0.0, %v2176
      %v2178 = vpop.f32.mrb[0].mxu0
      %2179 = vmatprep.mubr.f32.mxu0 0.0
      %2180 = vmatmul.mubr.f32.gmra.mrb[0].mxu0 %v2012
      %v2181 = vpop.f32.mrb[0].mxu0
      %v2182 = vadd.f32 0.0, %v2181
      %v2183 = vpop.f32.mrb[0].mxu0
      %2184 = vmatprep.mubr.f32.mxu0 0.0
      %2185 = vmatmul.mubr.f32.gmra.mrb[0].mxu0 %v2015
      %v2186 = vpop.f32.mrb[0].mxu0
      %v2187 = vadd.f32 0.0, %v2186
      %v2188 = vpop.f32.mrb[0].mxu0
      %2189 = vmatprep.mubr.f32.mxu0 0.0
      %2190 = vmatmul.mubr.f32.gmra.mrb[0].mxu0 %v2018
      %v2191 = vpop.f32.mrb[0].mxu0
      %v2192 = vadd.f32 0.0, %v2191
      %v2193 = vpop.f32.mrb[0].mxu0
      %2194 = vmatprep.mubr.f32.mxu0 0.0
      %2195 = vmatmul.mubr.f32.gmra.mrb[0].mxu0 %v2021
      %v2196 = vpop.f32.mrb[0].mxu0
      %v2197 = vadd.f32 0.0, %v2196
      %v2198 = vpop.f32.mrb[0].mxu0
      %2199 = vmatprep.mubr.f32.mxu0 0.0
      %2200 = vmatmul.mubr.f32.gmra.mrb[0].mxu0 %v2024
      %v2201 = vpop.f32.mrb[0].mxu0
      %v2202 = vadd.f32 0.0, %v2201
      %v2203 = vpop.f32.mrb[0].mxu0
      %2204 = vmatprep.mubr.f32.mxu0 0.0
      %2205 = vmatmul.mubr.f32.gmra.mrb[0].mxu0 %v2027
      %v2206 = vpop.f32.mrb[0].mxu0
      %v2207 = vadd.f32 0.0, %v2206
      %v2208 = vpop.f32.mrb[0].mxu0
      %2209 = vmatprep.mubr.f32.mxu0 0.0
      %2210 = vmatmul.mubr.f32.gmra.mrb[0].mxu0 %v2030
      %v2211 = vpop.f32.mrb[0].mxu0
      %v2212 = vadd.f32 0.0, %v2211
      %v2213 = vpop.f32.mrb[0].mxu0
      %2214 = vmatprep.mubr.f32.mxu0 0.0
      %2215 = vmatmul.mubr.f32.gmra.mrb[0].mxu0 %v2033
      %v2216 = vpop.f32.mrb[0].mxu0
      %v2217 = vadd.f32 0.0, %v2216
      %v2218 = vpop.f32.mrb[0].mxu0
      %2219 = vmatprep.mubr.f32.mxu0 0.0
      %2220 = vmatmul.mubr.f32.gmra.mrb[0].mxu0 %v2036
      %v2221 = vpop.f32.mrb[0].mxu0
      %v2222 = vadd.f32 0.0, %v2221
      %v2223 = vpop.f32.mrb[0].mxu0
      %2224 = vmatprep.mubr.f32.mxu0 0.0
      %2225 = vmatmul.mubr.f32.gmra.mrb[0].mxu0 %v2039
      %v2226 = vpop.f32.mrb[0].mxu0
      %v2227 = vadd.f32 0.0, %v2226
      %v2228 = vpop.f32.mrb[0].mxu0
      %2229 = vmatprep.mubr.f32.mxu0 0.0
      %2230 = vmatmul.mubr.f32.gmra.mrb[0].mxu0 %v2042
      %v2231 = vpop.f32.mrb[0].mxu0
      %v2232 = vadd.f32 0.0, %v2231
      %v2233 = vpop.f32.mrb[0].mxu0
      %2234 = vmatprep.mubr.f32.mxu0 0.0
      %2235 = vmatmul.mubr.f32.gmra.mrb[0].mxu0 %v2045
      %v2236 = vpop.f32.mrb[0].mxu0
      %v2237 = vadd.f32 0.0, %v2236
      %v2238 = vpop.f32.mrb[0].mxu0
      %2239 = vmatprep.mubr.f32.mxu0 0.0
      %2240 = vmatmul.mubr.f32.gmra.mrb[0].mxu0 %v2048
      %v2241 = vpop.f32.mrb[0].mxu0
      %v2242 = vadd.f32 0.0, %v2241
      %v2243 = vpop.f32.mrb[0].mxu0
      %2244 = vmatprep.mubr.f32.mxu0 0.0
      %2245 = vmatmul.mubr.f32.gmra.mrb[0].mxu0 %v2051
      %v2246 = vpop.f32.mrb[0].mxu0
      %v2247 = vadd.f32 0.0, %v2246
      %v2248 = vpop.f32.mrb[0].mxu0
      %2249 = vmatprep.mubr.f32.mxu0 0.0
      %2250 = vmatmul.mubr.f32.gmra.mrb[0].mxu0 %v2054
      %v2251 = vpop.f32.mrb[0].mxu0
      %v2252 = vadd.f32 0.0, %v2251
      %v2253 = vpop.f32.mrb[0].mxu0
      %2254 = vmatprep.mubr.f32.mxu0 0.0
      %2255 = vmatmul.mubr.f32.gmra.mrb[0].mxu0 %v2057
      %v2256 = vpop.f32.mrb[0].mxu0
      %v2257 = vadd.f32 0.0, %v2256
      %v2258 = vpop.f32.mrb[0].mxu0
      %2259 = vmatprep.mubr.f32.mxu0 0.0
      %2260 = vmatmul.mubr.f32.gmra.mrb[0].mxu0 %v2060
      %v2261 = vpop.f32.mrb[0].mxu0
      %v2262 = vadd.f32 0.0, %v2261
      %v2263 = vpop.f32.mrb[0].mxu0
      %2264 = vmatprep.mubr.f32.mxu0 0.0
      %2265 = vmatmul.mubr.f32.gmra.mrb[0].mxu0 %v2063
      %v2266 = vpop.f32.mrb[0].mxu0
      %v2267 = vadd.f32 0.0, %v2266
      %v2268 = vpop.f32.mrb[0].mxu0
      %2269 = vmatprep.mubr.f32.mxu0 0.0
      %2270 = vmatmul.mubr.f32.gmra.mrb[0].mxu0 %v2066
      %v2271 = vpop.f32.mrb[0].mxu0
      %v2272 = vadd.f32 0.0, %v2271
      %v2273 = vpop.f32.mrb[0].mxu0
      %2274 = vmatprep.mubr.f32.mxu0 0.0
      %2275 = vmatmul.mubr.f32.gmra.mrb[0].mxu0 %v2069
      %v2276 = vpop.f32.mrb[0].mxu0
      %v2277 = vadd.f32 0.0, %v2276
      %v2278 = vpop.f32.mrb[0].mxu0
      %2279 = vmatprep.mubr.f32.mxu0 0.0
      %2280 = vmatmul.mubr.f32.gmra.mrb[0].mxu0 %v2072
      %v2281 = vpop.f32.mrb[0].mxu0
      %v2282 = vadd.f32 0.0, %v2281
      %v2283 = vpop.f32.mrb[0].mxu0
      %2284 = vmatprep.mubr.f32.mxu0 0.0
      %2285 = vmatmul.mubr.f32.gmra.mrb[0].mxu0 %v2075
      %v2286 = vpop.f32.mrb[0].mxu0
      %v2287 = vadd.f32 0.0, %v2286
      %v2288 = vpop.f32.mrb[0].mxu0
      %2289 = vmatprep.mubr.f32.mxu0 0.0
      %2290 = vmatmul.mubr.f32.gmra.mrb[0].mxu0 %v2078
      %v2291 = vpop.f32.mrb[0].mxu0
      %v2292 = vadd.f32 0.0, %v2291
      %v2293 = vpop.f32.mrb[0].mxu0
      %2294 = vmatprep.mubr.f32.mxu0 0.0
      %2295 = vmatmul.mubr.f32.gmra.mrb[0].mxu0 %v2081
      %v2296 = vpop.f32.mrb[0].mxu0
      %v2297 = vadd.f32 0.0, %v2296
      %v2298 = vpop.f32.mrb[0].mxu0
      %2299 = vmatprep.mubr.f32.mxu0 0.0
      %2300 = vmatmul.mubr.f32.gmra.mrb[0].mxu0 %v2084
      %v2301 = vpop.f32.mrb[0].mxu0
      %v2302 = vadd.f32 0.0, %v2301
      %v2303 = vpop.f32.mrb[0].mxu0
      %2304 = vmatprep.mubr.f32.mxu0 0.0
      %2305 = vmatmul.mubr.f32.gmra.mrb[0].mxu0 %v2087
      %v2306 = vpop.f32.mrb[0].mxu0
      %v2307 = vadd.f32 0.0, %v2306
      %v2308 = vpop.f32.mrb[0].mxu0
      %2309 = vmatprep.mubr.f32.mxu0 0.0
      %2310 = vmatmul.mubr.f32.gmra.mrb[0].mxu0 %v2090
      %v2311 = vpop.f32.mrb[0].mxu0
      %v2312 = vadd.f32 0.0, %v2311
      %v2313 = vpop.f32.mrb[0].mxu0
      %2314 = vmatprep.mubr.f32.mxu0 0.0
      %2315 = vmatmul.mubr.f32.gmra.mrb[0].mxu0 %v2093
      %v2316 = vpop.f32.mrb[0].mxu0
      %v2317 = vadd.f32 0.0, %v2316
      %v2318 = vpop.f32.mrb[0].mxu0
      %2319 = vmatprep.mubr.f32.mxu0 0.0
      %2320 = vmatmul.mubr.f32.gmra.mrb[0].mxu0 %v2096
      %v2321 = vpop.f32.mrb[0].mxu0
      %v2322 = vadd.f32 0.0, %v2321
      %v2323 = vpop.f32.mrb[0].mxu0
      %2324 = vmatprep.mubr.f32.mxu0 0.0
      %2325 = vmatmul.mubr.f32.gmra.mrb[0].mxu0 %v2099
      %v2326 = vpop.f32.mrb[0].mxu0
      %v2327 = vadd.f32 0.0, %v2326
      %v2328 = vpop.f32.mrb[0].mxu0
      %2329 = vdwg.mxu0
      %v2330 = vld [vmem:[%s2] sm:$0x1]
      %v2331 = vld [vmem:[%s3] sm:$0x1]
      %v2332 = vsel %vm312, %v2172, 0.0
      %v2333 = vsel %vm312, %v2177, 0.0
      %v2334 = vadd.f32 %v2332, %v2333
      %v2335 = vsel %vm312, %v2182, 0.0
      %v2336 = vadd.f32 %v2334, %v2335
      %v2337 = vsel %vm312, %v2187, 0.0
      %v2338 = vadd.f32 %v2336, %v2337
      %v2339 = vsel %vm312, %v2192, 0.0
      %v2340 = vadd.f32 %v2338, %v2339
      %v2341 = vsel %vm312, %v2197, 0.0
      %v2342 = vadd.f32 %v2340, %v2341
      %v2343 = vsel %vm312, %v2202, 0.0
      %v2344 = vadd.f32 %v2342, %v2343
      %v2345 = vsel %vm312, %v2207, 0.0
      %v2346 = vadd.f32 %v2344, %v2345
      %v2347 = vsel %vm312, %v2212, 0.0
      %v2348 = vadd.f32 %v2346, %v2347
      %v2349 = vsel %vm312, %v2217, 0.0
      %v2350 = vadd.f32 %v2348, %v2349
      %v2351 = vsel %vm312, %v2222, 0.0
      %v2352 = vadd.f32 %v2350, %v2351
      %v2353 = vsel %vm312, %v2227, 0.0
      %v2354 = vadd.f32 %v2352, %v2353
      %v2355 = vsel %vm312, %v2232, 0.0
      %v2356 = vadd.f32 %v2354, %v2355
      %v2357 = vsel %vm312, %v2237, 0.0
      %v2358 = vadd.f32 %v2356, %v2357
      %v2359 = vsel %vm312, %v2242, 0.0
      %v2360 = vadd.f32 %v2358, %v2359
      %v2361 = vsel %vm312, %v2247, 0.0
      %v2362 = vadd.f32 %v2360, %v2361
      %v2363 = vsel %vm312, %v2252, 0.0
      %v2364 = vadd.f32 %v2362, %v2363
      %v2365 = vsel %vm312, %v2257, 0.0
      %v2366 = vadd.f32 %v2364, %v2365
      %v2367 = vsel %vm312, %v2262, 0.0
      %v2368 = vadd.f32 %v2366, %v2367
      %v2369 = vsel %vm312, %v2267, 0.0
      %v2370 = vadd.f32 %v2368, %v2369
      %v2371 = vsel %vm312, %v2272, 0.0
      %v2372 = vadd.f32 %v2370, %v2371
      %v2373 = vsel %vm312, %v2277, 0.0
      %v2374 = vadd.f32 %v2372, %v2373
      %v2375 = vsel %vm312, %v2282, 0.0
      %v2376 = vadd.f32 %v2374, %v2375
      %v2377 = vsel %vm312, %v2287, 0.0
      %v2378 = vadd.f32 %v2376, %v2377
      %v2379 = vsel %vm312, %v2292, 0.0
      %v2380 = vadd.f32 %v2378, %v2379
      %v2381 = vsel %vm312, %v2297, 0.0
      %v2382 = vadd.f32 %v2380, %v2381
      %v2383 = vsel %vm312, %v2302, 0.0
      %v2384 = vadd.f32 %v2382, %v2383
      %v2385 = vsel %vm312, %v2307, 0.0
      %v2386 = vadd.f32 %v2384, %v2385
      %v2387 = vsel %vm312, %v2312, 0.0
      %v2388 = vadd.f32 %v2386, %v2387
      %v2389 = vsel %vm312, %v2317, 0.0
      %v2390 = vadd.f32 %v2388, %v2389
      %v2391 = vsel %vm312, %v2322, 0.0
      %v2392 = vadd.f32 %v2390, %v2391
      %v2393 = vsel %vm312, %v2327, 0.0
      %v2394 = vadd.f32 %v2392, %v2393
      %v2395 = vrot.slane %v2394, 4
      %v2396 = vadd.f32 %v2394, %v2395
      %v2397 = vrot.slane %v2396, 2
      %v2398 = vadd.f32 %v2396, %v2397
      %v2399 = vrot.slane %v2398, 1
      %v2400 = vadd.f32 %v2398, %v2399
      %v2401 = vmul.f32 %v2172, %v2172
      %v2402 = vmul.f32 %v2177, %v2177
      %v2403 = vmul.f32 %v2182, %v2182
      %v2404 = vmul.f32 %v2187, %v2187
      %v2405 = vmul.f32 %v2192, %v2192
      %v2406 = vmul.f32 %v2197, %v2197
      %v2407 = vmul.f32 %v2202, %v2202
      %v2408 = vmul.f32 %v2207, %v2207
      %v2409 = vmul.f32 %v2212, %v2212
      %v2410 = vmul.f32 %v2217, %v2217
      %v2411 = vmul.f32 %v2222, %v2222
      %v2412 = vmul.f32 %v2227, %v2227
      %v2413 = vmul.f32 %v2232, %v2232
      %v2414 = vmul.f32 %v2237, %v2237
      %v2415 = vmul.f32 %v2242, %v2242
      %v2416 = vmul.f32 %v2247, %v2247
      %v2417 = vmul.f32 %v2252, %v2252
      %v2418 = vmul.f32 %v2257, %v2257
      %v2419 = vmul.f32 %v2262, %v2262
      %v2420 = vmul.f32 %v2267, %v2267
      %v2421 = vmul.f32 %v2272, %v2272
      %v2422 = vmul.f32 %v2277, %v2277
      %v2423 = vmul.f32 %v2282, %v2282
      %v2424 = vmul.f32 %v2287, %v2287
      %v2425 = vmul.f32 %v2292, %v2292
      %v2426 = vmul.f32 %v2297, %v2297
      %v2427 = vmul.f32 %v2302, %v2302
      %v2428 = vmul.f32 %v2307, %v2307
      %v2429 = vmul.f32 %v2312, %v2312
      %v2430 = vmul.f32 %v2317, %v2317
      %v2431 = vmul.f32 %v2322, %v2322
      %v2432 = vmul.f32 %v2327, %v2327
      %v2433 = vsel %vm312, %v2401, 0.0
      %v2434 = vsel %vm312, %v2402, 0.0
      %v2435 = vadd.f32 %v2433, %v2434
      %v2436 = vsel %vm312, %v2403, 0.0
      %v2437 = vadd.f32 %v2435, %v2436
      %v2438 = vsel %vm312, %v2404, 0.0
      %v2439 = vadd.f32 %v2437, %v2438
      %v2440 = vsel %vm312, %v2405, 0.0
      %v2441 = vadd.f32 %v2439, %v2440
      %v2442 = vsel %vm312, %v2406, 0.0
      %v2443 = vadd.f32 %v2441, %v2442
      %v2444 = vsel %vm312, %v2407, 0.0
      %v2445 = vadd.f32 %v2443, %v2444
      %v2446 = vsel %vm312, %v2408, 0.0
      %v2447 = vadd.f32 %v2445, %v2446
      %v2448 = vsel %vm312, %v2409, 0.0
      %v2449 = vadd.f32 %v2447, %v2448
      %v2450 = vsel %vm312, %v2410, 0.0
      %v2451 = vadd.f32 %v2449, %v2450
      %v2452 = vsel %vm312, %v2411, 0.0
      %v2453 = vadd.f32 %v2451, %v2452
      %v2454 = vsel %vm312, %v2412, 0.0
      %v2455 = vadd.f32 %v2453, %v2454
      %v2456 = vsel %vm312, %v2413, 0.0
      %v2457 = vadd.f32 %v2455, %v2456
      %v2458 = vsel %vm312, %v2414, 0.0
      %v2459 = vadd.f32 %v2457, %v2458
      %v2460 = vsel %vm312, %v2415, 0.0
      %v2461 = vadd.f32 %v2459, %v2460
      %v2462 = vsel %vm312, %v2416, 0.0
      %v2463 = vadd.f32 %v2461, %v2462
      %v2464 = vsel %vm312, %v2417, 0.0
      %v2465 = vadd.f32 %v2463, %v2464
      %v2466 = vsel %vm312, %v2418, 0.0
      %v2467 = vadd.f32 %v2465, %v2466
      %v2468 = vsel %vm312, %v2419, 0.0
      %v2469 = vadd.f32 %v2467, %v2468
      %v2470 = vsel %vm312, %v2420, 0.0
      %v2471 = vadd.f32 %v2469, %v2470
      %v2472 = vsel %vm312, %v2421, 0.0
      %v2473 = vadd.f32 %v2471, %v2472
      %v2474 = vsel %vm312, %v2422, 0.0
      %v2475 = vadd.f32 %v2473, %v2474
      %v2476 = vsel %vm312, %v2423, 0.0
      %v2477 = vadd.f32 %v2475, %v2476
      %v2478 = vsel %vm312, %v2424, 0.0
      %v2479 = vadd.f32 %v2477, %v2478
      %v2480 = vsel %vm312, %v2425, 0.0
      %v2481 = vadd.f32 %v2479, %v2480
      %v2482 = vsel %vm312, %v2426, 0.0
      %v2483 = vadd.f32 %v2481, %v2482
      %v2484 = vsel %vm312, %v2427, 0.0
      %v2485 = vadd.f32 %v2483, %v2484
      %v2486 = vsel %vm312, %v2428, 0.0
      %v2487 = vadd.f32 %v2485, %v2486
      %v2488 = vsel %vm312, %v2429, 0.0
      %v2489 = vadd.f32 %v2487, %v2488
      %v2490 = vsel %vm312, %v2430, 0.0
      %v2491 = vadd.f32 %v2489, %v2490
      %v2492 = vsel %vm312, %v2431, 0.0
      %v2493 = vadd.f32 %v2491, %v2492
      %v2494 = vsel %vm312, %v2432, 0.0
      %v2495 = vadd.f32 %v2493, %v2494
      %v2496 = vrot.slane %v2495, 4
      %v2497 = vadd.f32 %v2495, %v2496
      %v2498 = vrot.slane %v2497, 2
      %v2499 = vadd.f32 %v2497, %v2498
      %v2500 = vrot.slane %v2499, 1
      %v2501 = vadd.f32 %v2499, %v2500
      %v2502 = vmul.f32 %v2400, 0.00390625
      %v2503 = vmul.f32 %v2501, 0.00390625
      %v2504 = vmul.f32 %v2502, %v2502
      %v2505 = vsub.f32 %v2503, %v2504
      %v2506 = vmax.f32 %v2505, 0.0
      %v2507 = vadd.f32 %v2506, 1e-05
      %v2508 = vrsqrt.pop %v2507
      %v2509 = vmul.f32 %v2330, %v2508
      %v2510 = vmul.f32 %v2502, %v2509
      %v2511 = vsub.f32 %v2331, %v2510
      %v2513 = vlaneseq
      %v2514 = vshrl.u32 %v2513, 7
      %v2515 = vsub.s32 0, %v2514
      %v2516 = vrot.slane %v2509, %v2515
      %v2518 = vmul.f32 %v2172, %v2516
      %v2519 = vmul.f32 %v2177, %v2516
      %v2520 = vmul.f32 %v2182, %v2516
      %v2521 = vmul.f32 %v2187, %v2516
      %v2522 = vmul.f32 %v2192, %v2516
      %v2523 = vmul.f32 %v2197, %v2516
      %v2524 = vmul.f32 %v2202, %v2516
      %v2525 = vmul.f32 %v2207, %v2516
      %v2526 = vmul.f32 %v2212, %v2516
      %v2527 = vmul.f32 %v2217, %v2516
      %v2528 = vmul.f32 %v2222, %v2516
      %v2529 = vmul.f32 %v2227, %v2516
      %v2530 = vmul.f32 %v2232, %v2516
      %v2531 = vmul.f32 %v2237, %v2516
      %v2532 = vmul.f32 %v2242, %v2516
      %v2533 = vmul.f32 %v2247, %v2516
      %v2534 = vmul.f32 %v2252, %v2516
      %v2535 = vmul.f32 %v2257, %v2516
      %v2536 = vmul.f32 %v2262, %v2516
      %v2537 = vmul.f32 %v2267, %v2516
      %v2538 = vmul.f32 %v2272, %v2516
      %v2539 = vmul.f32 %v2277, %v2516
      %v2540 = vmul.f32 %v2282, %v2516
      %v2541 = vmul.f32 %v2287, %v2516
      %v2542 = vmul.f32 %v2292, %v2516
      %v2543 = vmul.f32 %v2297, %v2516
      %v2544 = vmul.f32 %v2302, %v2516
      %v2545 = vmul.f32 %v2307, %v2516
      %v2546 = vmul.f32 %v2312, %v2516
      %v2547 = vmul.f32 %v2317, %v2516
      %v2548 = vmul.f32 %v2322, %v2516
      %v2549 = vmul.f32 %v2327, %v2516
      %v2551 = vlaneseq
      %v2552 = vshrl.u32 %v2551, 7
      %v2553 = vsub.s32 0, %v2552
      %v2554 = vrot.slane %v2511, %v2553
      %v2556 = vadd.f32 %v2518, %v2554
      %v2557 = vadd.f32 %v2519, %v2554
      %v2558 = vadd.f32 %v2520, %v2554
      %v2559 = vadd.f32 %v2521, %v2554
      %v2560 = vadd.f32 %v2522, %v2554
      %v2561 = vadd.f32 %v2523, %v2554
      %v2562 = vadd.f32 %v2524, %v2554
      %v2563 = vadd.f32 %v2525, %v2554
      %v2564 = vadd.f32 %v2526, %v2554
      %v2565 = vadd.f32 %v2527, %v2554
      %v2566 = vadd.f32 %v2528, %v2554
      %v2567 = vadd.f32 %v2529, %v2554
      %v2568 = vadd.f32 %v2530, %v2554
      %v2569 = vadd.f32 %v2531, %v2554
      %v2570 = vadd.f32 %v2532, %v2554
      %v2571 = vadd.f32 %v2533, %v2554
      %v2572 = vadd.f32 %v2534, %v2554
      %v2573 = vadd.f32 %v2535, %v2554
      %v2574 = vadd.f32 %v2536, %v2554
      %v2575 = vadd.f32 %v2537, %v2554
      %v2576 = vadd.f32 %v2538, %v2554
      %v2577 = vadd.f32 %v2539, %v2554
      %v2578 = vadd.f32 %v2540, %v2554
      %v2579 = vadd.f32 %v2541, %v2554
      %v2580 = vadd.f32 %v2542, %v2554
      %v2581 = vadd.f32 %v2543, %v2554
      %v2582 = vadd.f32 %v2544, %v2554
      %v2583 = vadd.f32 %v2545, %v2554
      %v2584 = vadd.f32 %v2546, %v2554
      %v2585 = vadd.f32 %v2547, %v2554
      %v2586 = vadd.f32 %v2548, %v2554
      %v2587 = vadd.f32 %v2549, %v2554
      %v2588 = vmax.f32 %v2556, 0.0
      %v2589 = vmax.f32 %v2557, 0.0
      %v2590 = vmax.f32 %v2558, 0.0
      %v2591 = vmax.f32 %v2559, 0.0
      %v2592 = vmax.f32 %v2560, 0.0
      %v2593 = vmax.f32 %v2561, 0.0
      %v2594 = vmax.f32 %v2562, 0.0
      %v2595 = vmax.f32 %v2563, 0.0
      %v2596 = vmax.f32 %v2564, 0.0
      %v2597 = vmax.f32 %v2565, 0.0
      %v2598 = vmax.f32 %v2566, 0.0
      %v2599 = vmax.f32 %v2567, 0.0
      %v2600 = vmax.f32 %v2568, 0.0
      %v2601 = vmax.f32 %v2569, 0.0
      %v2602 = vmax.f32 %v2570, 0.0
      %v2603 = vmax.f32 %v2571, 0.0
      %v2604 = vmax.f32 %v2572, 0.0
      %v2605 = vmax.f32 %v2573, 0.0
      %v2606 = vmax.f32 %v2574, 0.0
      %v2607 = vmax.f32 %v2575, 0.0
      %v2608 = vmax.f32 %v2576, 0.0
      %v2609 = vmax.f32 %v2577, 0.0
      %v2610 = vmax.f32 %v2578, 0.0
      %v2611 = vmax.f32 %v2579, 0.0
      %v2612 = vmax.f32 %v2580, 0.0
      %v2613 = vmax.f32 %v2581, 0.0
      %v2614 = vmax.f32 %v2582, 0.0
      %v2615 = vmax.f32 %v2583, 0.0
      %v2616 = vmax.f32 %v2584, 0.0
      %v2617 = vmax.f32 %v2585, 0.0
      %v2618 = vmax.f32 %v2586, 0.0
      %v2619 = vmax.f32 %v2587, 0.0
      %2620 = vst.msk [vmem:[%s311 + $0x1] sm:$0xff] %vm312, %v2588
      %2621 = vst.msk [vmem:[%s311 + $0x9] sm:$0xff] %vm312, %v2589
      %2622 = vst.msk [vmem:[%s311 + $0x19] sm:$0xff] %vm312, %v2590
      %2623 = vst.msk [vmem:[%s311 + $0x21] sm:$0xff] %vm312, %v2591
      %2624 = vst.msk [vmem:[%s311 + $0x31] sm:$0xff] %vm312, %v2592
      %2625 = vst.msk [vmem:[%s311 + $0x39] sm:$0xff] %vm312, %v2593
      %2626 = vst.msk [vmem:[%s311 + $0x49] sm:$0xff] %vm312, %v2594
      %2627 = vst.msk [vmem:[%s311 + $0x51] sm:$0xff] %vm312, %v2595
      %2628 = vst.msk [vmem:[%s311 + $0x61] sm:$0xff] %vm312, %v2596
      %2629 = vst.msk [vmem:[%s311 + $0x69] sm:$0xff] %vm312, %v2597
      %2630 = vst.msk [vmem:[%s311 + $0x79] sm:$0xff] %vm312, %v2598
      %2631 = vst.msk [vmem:[%s311 + $0x81] sm:$0xff] %vm312, %v2599
      %2632 = vst.msk [vmem:[%s311 + $0x91] sm:$0xff] %vm312, %v2600
      %2633 = vst.msk [vmem:[%s311 + $0x99] sm:$0xff] %vm312, %v2601
      %2634 = vst.msk [vmem:[%s311 + $0xa9] sm:$0xff] %vm312, %v2602
      %2635 = vst.msk [vmem:[%s311 + $0xb1] sm:$0xff] %vm312, %v2603
      %2636 = vst.msk [vmem:[%s311 + $0xc1] sm:$0xff] %vm312, %v2604
      %2637 = vst.msk [vmem:[%s311 + $0xc9] sm:$0xff] %vm312, %v2605
      %2638 = vst.msk [vmem:[%s311 + $0xd9] sm:$0xff] %vm312, %v2606
      %2639 = vst.msk [vmem:[%s311 + $0xe1] sm:$0xff] %vm312, %v2607
      %2640 = vst.msk [vmem:[%s311 + $0xf1] sm:$0xff] %vm312, %v2608
      %2641 = vst.msk [vmem:[%s311 + $0xf9] sm:$0xff] %vm312, %v2609
      %2642 = vst.msk [vmem:[%s311 + $0x109] sm:$0xff] %vm312, %v2610
      %2643 = vst.msk [vmem:[%s311 + $0x111] sm:$0xff] %vm312, %v2611
      %2644 = vst.msk [vmem:[%s311 + $0x121] sm:$0xff] %vm312, %v2612
      %2645 = vst.msk [vmem:[%s311 + $0x129] sm:$0xff] %vm312, %v2613
      %2646 = vst.msk [vmem:[%s311 + $0x139] sm:$0xff] %vm312, %v2614
      %2647 = vst.msk [vmem:[%s311 + $0x141] sm:$0xff] %vm312, %v2615
      %2648 = vst.msk [vmem:[%s311 + $0x151] sm:$0xff] %vm312, %v2616
      %2649 = vst.msk [vmem:[%s311 + $0x159] sm:$0xff] %vm312, %v2617
      %2650 = vst.msk [vmem:[%s311 + $0x169] sm:$0xff] %vm312, %v2618
      %2651 = vst.msk [vmem:[%s311 + $0x171] sm:$0xff] %vm312, %v2619
      %2652 = vst.msk [vmem:[#allocation2 + $0x1] sm:$0xff] %vm312, %v2590
      %2653 = vst.msk [vmem:[#allocation2 + $0x9] sm:$0xff] %vm312, %v2591
      %2654 = vst.msk [vmem:[%s347 + $0x1] sm:$0xff] %vm312, %v2616
      %2655 = vst.msk [vmem:[%s347 + $0x9] sm:$0xff] %vm312, %v2617
      %v2656 = vld [vmem:[#allocation2 + $0x2] sm:$0x1]
      %v2657 = vld [vmem:[#allocation2 + $0x1a] sm:$0x1]
      %v2658 = vld [vmem:[#allocation2 + $0x32] sm:$0x1]
      %v2659 = vld [vmem:[#allocation2 + $0x4a] sm:$0x1]
      %v2660 = vld [vmem:[#allocation2 + $0x62] sm:$0x1]
      %v2661 = vld [vmem:[#allocation2 + $0x7a] sm:$0x1]
      %v2662 = vld [vmem:[#allocation2 + $0x92] sm:$0x1]
      %v2663 = vld [vmem:[#allocation2 + $0xaa] sm:$0x1]
      %v2664 = vld [vmem:[#allocation2 + $0xc2] sm:$0x1]
      %v2665 = vld [vmem:[#allocation2 + $0xda] sm:$0x1]
      %v2666 = vld [vmem:[#allocation2 + $0xf2] sm:$0x1]
      %v2667 = vld [vmem:[#allocation2 + $0x10a] sm:$0x1]
      %v2668 = vld [vmem:[#allocation2 + $0x122] sm:$0x1]
      %v2669 = vld [vmem:[#allocation2 + $0x13a] sm:$0x1]
      %v2670 = vld [vmem:[#allocation2 + $0x152] sm:$0x1]
      %v2671 = vld [vmem:[#allocation2 + $0x16a] sm:$0x1]
      %v2672 = vld [vmem:[#allocation2 + $0x182] sm:$0x1]
      %v2673 = vld [vmem:[#allocation2 + $0x19a] sm:$0x1]
      %2674 = vst.msk [vmem:[#allocation2] sm:$0x1] %vm368, %v2656
      %2675 = vst.msk [vmem:[#allocation2 + $0x18] sm:$0x1] %vm368, %v2657
      %2676 = vst.msk [vmem:[#allocation2 + $0x30] sm:$0x1] %vm368, %v2658
      %2677 = vst.msk [vmem:[#allocation2 + $0x48] sm:$0x1] %vm368, %v2659
      %2678 = vst.msk [vmem:[#allocation2 + $0x60] sm:$0x1] %vm368, %v2660
      %2679 = vst.msk [vmem:[#allocation2 + $0x78] sm:$0x1] %vm368, %v2661
      %2680 = vst.msk [vmem:[#allocation2 + $0x90] sm:$0x1] %vm368, %v2662
      %2681 = vst.msk [vmem:[#allocation2 + $0xa8] sm:$0x1] %vm368, %v2663
      %2682 = vst.msk [vmem:[#allocation2 + $0xc0] sm:$0x1] %vm368, %v2664
      %2683 = vst.msk [vmem:[#allocation2 + $0xd8] sm:$0x1] %vm368, %v2665
      %2684 = vst.msk [vmem:[#allocation2 + $0xf0] sm:$0x1] %vm368, %v2666
      %2685 = vst.msk [vmem:[#allocation2 + $0x108] sm:$0x1] %vm368, %v2667
      %2686 = vst.msk [vmem:[#allocation2 + $0x120] sm:$0x1] %vm368, %v2668
      %2687 = vst.msk [vmem:[#allocation2 + $0x138] sm:$0x1] %vm368, %v2669
      %2688 = vst.msk [vmem:[#allocation2 + $0x150] sm:$0x1] %vm368, %v2670
      %2689 = vst.msk [vmem:[#allocation2 + $0x168] sm:$0x1] %vm368, %v2671
      %2690 = vst.msk [vmem:[#allocation2 + $0x180] sm:$0x1] %vm368, %v2672
      %2691 = vst.msk [vmem:[#allocation2 + $0x198] sm:$0x1] %vm368, %v2673
      %v2692 = vld [vmem:[#allocation2 + $0xf] sm:$0x1]
      %v2693 = vld [vmem:[#allocation2 + $0x27] sm:$0x1]
      %v2694 = vld [vmem:[#allocation2 + $0x3f] sm:$0x1]
      %v2695 = vld [vmem:[#allocation2 + $0x57] sm:$0x1]
      %v2696 = vld [vmem:[#allocation2 + $0x6f] sm:$0x1]
      %v2697 = vld [vmem:[#allocation2 + $0x87] sm:$0x1]
      %v2698 = vld [vmem:[#allocation2 + $0x9f] sm:$0x1]
      %v2699 = vld [vmem:[#allocation2 + $0xb7] sm:$0x1]
      %v2700 = vld [vmem:[#allocation2 + $0xcf] sm:$0x1]
      %v2701 = vld [vmem:[#allocation2 + $0xe7] sm:$0x1]
      %v2702 = vld [vmem:[#allocation2 + $0xff] sm:$0x1]
      %v2703 = vld [vmem:[#allocation2 + $0x117] sm:$0x1]
      %v2704 = vld [vmem:[#allocation2 + $0x12f] sm:$0x1]
      %v2705 = vld [vmem:[#allocation2 + $0x147] sm:$0x1]
      %v2706 = vld [vmem:[#allocation2 + $0x15f] sm:$0x1]
      %v2707 = vld [vmem:[#allocation2 + $0x177] sm:$0x1]
      %v2708 = vld [vmem:[#allocation2 + $0x18f] sm:$0x1]
      %v2709 = vld [vmem:[#allocation2 + $0x1a7] sm:$0x1]
      %2710 = vst.msk [vmem:[#allocation2 + $0x11] sm:$0x1] %vm368, %v2692
      %2711 = vst.msk [vmem:[#allocation2 + $0x29] sm:$0x1] %vm368, %v2693
      %2712 = vst.msk [vmem:[#allocation2 + $0x41] sm:$0x1] %vm368, %v2694
      %2713 = vst.msk [vmem:[#allocation2 + $0x59] sm:$0x1] %vm368, %v2695
      %2714 = vst.msk [vmem:[#allocation2 + $0x71] sm:$0x1] %vm368, %v2696
      %2715 = vst.msk [vmem:[#allocation2 + $0x89] sm:$0x1] %vm368, %v2697
      %2716 = vst.msk [vmem:[#allocation2 + $0xa1] sm:$0x1] %vm368, %v2698
      %2717 = vst.msk [vmem:[#allocation2 + $0xb9] sm:$0x1] %vm368, %v2699
      %2718 = vst.msk [vmem:[#allocation2 + $0xd1] sm:$0x1] %vm368, %v2700
      %2719 = vst.msk [vmem:[#allocation2 + $0xe9] sm:$0x1] %vm368, %v2701
      %2720 = vst.msk [vmem:[#allocation2 + $0x101] sm:$0x1] %vm368, %v2702
      %2721 = vst.msk [vmem:[#allocation2 + $0x119] sm:$0x1] %vm368, %v2703
      %2722 = vst.msk [vmem:[#allocation2 + $0x131] sm:$0x1] %vm368, %v2704
      %2723 = vst.msk [vmem:[#allocation2 + $0x149] sm:$0x1] %vm368, %v2705
      %2724 = vst.msk [vmem:[#allocation2 + $0x161] sm:$0x1] %vm368, %v2706
      %2725 = vst.msk [vmem:[#allocation2 + $0x179] sm:$0x1] %vm368, %v2707
      %2726 = vst.msk [vmem:[#allocation2 + $0x191] sm:$0x1] %vm368, %v2708
      %2727 = vst.msk [vmem:[#allocation2 + $0x1a9] sm:$0x1] %vm368, %v2709
      %v2728 = vld [vmem:[#allocation2] sm:$0xff]
      %v2729 = vld [vmem:[#allocation2 + $0x8] sm:$0xff]
      %v2730 = vld [vmem:[#allocation2 + $0x18] sm:$0xff]
      %v2731 = vld [vmem:[#allocation2 + $0x20] sm:$0xff]
      %v2732 = vld [vmem:[#allocation2 + $0x30] sm:$0xff]
      %v2733 = vld [vmem:[#allocation2 + $0x38] sm:$0xff]
      %v2734 = vld [vmem:[#allocation2 + $0x48] sm:$0xff]
      %v2735 = vld [vmem:[#allocation2 + $0x50] sm:$0xff]
      %v2736 = vld [vmem:[#allocation2 + $0x60] sm:$0xff]
      %v2737 = vld [vmem:[#allocation2 + $0x68] sm:$0xff]
      %v2738 = vld [vmem:[#allocation2 + $0x78] sm:$0xff]
      %v2739 = vld [vmem:[#allocation2 + $0x80] sm:$0xff]
      %v2740 = vld [vmem:[#allocation2 + $0x90] sm:$0xff]
      %v2741 = vld [vmem:[#allocation2 + $0x98] sm:$0xff]
      %v2742 = vld [vmem:[#allocation2 + $0xa8] sm:$0xff]
      %v2743 = vld [vmem:[#allocation2 + $0xb0] sm:$0xff]
      %v2744 = vld [vmem:[#allocation2 + $0xc0] sm:$0xff]
      %v2745 = vld [vmem:[#allocation2 + $0xc8] sm:$0xff]
      %v2746 = vld [vmem:[#allocation2 + $0xd8] sm:$0xff]
      %v2747 = vld [vmem:[#allocation2 + $0xe0] sm:$0xff]
      %v2748 = vld [vmem:[#allocation2 + $0xf0] sm:$0xff]
      %v2749 = vld [vmem:[#allocation2 + $0xf8] sm:$0xff]
      %v2750 = vld [vmem:[#allocation2 + $0x108] sm:$0xff]
      %v2751 = vld [vmem:[#allocation2 + $0x110] sm:$0xff]
      %v2752 = vld [vmem:[#allocation2 + $0x120] sm:$0xff]
      %v2753 = vld [vmem:[#allocation2 + $0x128] sm:$0xff]
      %v2754 = vld [vmem:[#allocation2 + $0x138] sm:$0xff]
      %v2755 = vld [vmem:[#allocation2 + $0x140] sm:$0xff]
      %v2756 = vld [vmem:[#allocation2 + $0x150] sm:$0xff]
      %v2757 = vld [vmem:[#allocation2 + $0x158] sm:$0xff]
      %v2758 = vld [vmem:[#allocation2 + $0x168] sm:$0xff]
      %v2759 = vld [vmem:[#allocation2 + $0x170] sm:$0xff]
      %v2760 = vld [vmem:[#allocation2 + $0x1] sm:$0xff]
      %v2761 = vld [vmem:[#allocation2 + $0x9] sm:$0xff]
      %v2762 = vld [vmem:[#allocation2 + $0x19] sm:$0xff]
      %v2763 = vld [vmem:[#allocation2 + $0x21] sm:$0xff]
      %v2764 = vld [vmem:[#allocation2 + $0x31] sm:$0xff]
      %v2765 = vld [vmem:[#allocation2 + $0x39] sm:$0xff]
      %v2766 = vld [vmem:[#allocation2 + $0x49] sm:$0xff]
      %v2767 = vld [vmem:[#allocation2 + $0x51] sm:$0xff]
      %v2768 = vld [vmem:[#allocation2 + $0x61] sm:$0xff]
      %v2769 = vld [vmem:[#allocation2 + $0x69] sm:$0xff]
      %v2770 = vld [vmem:[#allocation2 + $0x79] sm:$0xff]
      %v2771 = vld [vmem:[#allocation2 + $0x81] sm:$0xff]
      %v2772 = vld [vmem:[#allocation2 + $0x91] sm:$0xff]
      %v2773 = vld [vmem:[#allocation2 + $0x99] sm:$0xff]
      %v2774 = vld [vmem:[#allocation2 + $0xa9] sm:$0xff]
      %v2775 = vld [vmem:[#allocation2 + $0xb1] sm:$0xff]
      %v2776 = vld [vmem:[#allocation2 + $0xc1] sm:$0xff]
      %v2777 = vld [vmem:[#allocation2 + $0xc9] sm:$0xff]
      %v2778 = vld [vmem:[#allocation2 + $0xd9] sm:$0xff]
      %v2779 = vld [vmem:[#allocation2 + $0xe1] sm:$0xff]
      %v2780 = vld [vmem:[#allocation2 + $0xf1] sm:$0xff]
      %v2781 = vld [vmem:[#allocation2 + $0xf9] sm:$0xff]
      %v2782 = vld [vmem:[#allocation2 + $0x109] sm:$0xff]
      %v2783 = vld [vmem:[#allocation2 + $0x111] sm:$0xff]
      %v2784 = vld [vmem:[#allocation2 + $0x121] sm:$0xff]
      %v2785 = vld [vmem:[#allocation2 + $0x129] sm:$0xff]
      %v2786 = vld [vmem:[#allocation2 + $0x139] sm:$0xff]
      %v2787 = vld [vmem:[#allocation2 + $0x141] sm:$0xff]
      %v2788 = vld [vmem:[#allocation2 + $0x151] sm:$0xff]
      %v2789 = vld [vmem:[#allocation2 + $0x159] sm:$0xff]
      %v2790 = vld [vmem:[#allocation2 + $0x169] sm:$0xff]
      %v2791 = vld [vmem:[#allocation2 + $0x171] sm:$0xff]
      %v2792 = vld [vmem:[#allocation2 + $0x2] sm:$0xff]
      %v2793 = vld [vmem:[#allocation2 + $0xa] sm:$0xff]
      %v2794 = vld [vmem:[#allocation2 + $0x1a] sm:$0xff]
      %v2795 = vld [vmem:[#allocation2 + $0x22] sm:$0xff]
      %v2796 = vld [vmem:[#allocation2 + $0x32] sm:$0xff]
      %v2797 = vld [vmem:[#allocation2 + $0x3a] sm:$0xff]
      %v2798 = vld [vmem:[#allocation2 + $0x4a] sm:$0xff]
      %v2799 = vld [vmem:[#allocation2 + $0x52] sm:$0xff]
      %v2800 = vld [vmem:[#allocation2 + $0x62] sm:$0xff]
      %v2801 = vld [vmem:[#allocation2 + $0x6a] sm:$0xff]
      %v2802 = vld [vmem:[#allocation2 + $0x7a] sm:$0xff]
      %v2803 = vld [vmem:[#allocation2 + $0x82] sm:$0xff]
      %v2804 = vld [vmem:[#allocation2 + $0x92] sm:$0xff]
      %v2805 = vld [vmem:[#allocation2 + $0x9a] sm:$0xff]
      %v2806 = vld [vmem:[#allocation2 + $0xaa] sm:$0xff]
      %v2807 = vld [vmem:[#allocation2 + $0xb2] sm:$0xff]
      %v2808 = vld [vmem:[#allocation2 + $0xc2] sm:$0xff]
      %v2809 = vld [vmem:[#allocation2 + $0xca] sm:$0xff]
      %v2810 = vld [vmem:[#allocation2 + $0xda] sm:$0xff]
      %v2811 = vld [vmem:[#allocation2 + $0xe2] sm:$0xff]
      %v2812 = vld [vmem:[#allocation2 + $0xf2] sm:$0xff]
      %v2813 = vld [vmem:[#allocation2 + $0xfa] sm:$0xff]
      %v2814 = vld [vmem:[#allocation2 + $0x10a] sm:$0xff]
      %v2815 = vld [vmem:[#allocation2 + $0x112] sm:$0xff]
      %v2816 = vld [vmem:[#allocation2 + $0x122] sm:$0xff]
      %v2817 = vld [vmem:[#allocation2 + $0x12a] sm:$0xff]
      %v2818 = vld [vmem:[#allocation2 + $0x13a] sm:$0xff]
      %v2819 = vld [vmem:[#allocation2 + $0x142] sm:$0xff]
      %v2820 = vld [vmem:[#allocation2 + $0x152] sm:$0xff]
      %v2821 = vld [vmem:[#allocation2 + $0x15a] sm:$0xff]
      %v2822 = vld [vmem:[#allocation2 + $0x16a] sm:$0xff]
      %v2823 = vld [vmem:[#allocation2 + $0x172] sm:$0xff]
      %v2824 = vld [vmem:[%s311] sm:$0xff]
      %v2825 = vld [vmem:[%s311 + $0x8] sm:$0xff]
      %v2826 = vld [vmem:[%s311 + $0x18] sm:$0xff]
      %v2827 = vld [vmem:[%s311 + $0x20] sm:$0xff]
      %v2828 = vld [vmem:[%s311 + $0x30] sm:$0xff]
      %v2829 = vld [vmem:[%s311 + $0x38] sm:$0xff]
      %v2830 = vld [vmem:[%s311 + $0x48] sm:$0xff]
      %v2831 = vld [vmem:[%s311 + $0x50] sm:$0xff]
      %v2832 = vld [vmem:[%s311 + $0x60] sm:$0xff]
      %v2833 = vld [vmem:[%s311 + $0x68] sm:$0xff]
      %v2834 = vld [vmem:[%s311 + $0x78] sm:$0xff]
      %v2835 = vld [vmem:[%s311 + $0x80] sm:$0xff]
      %v2836 = vld [vmem:[%s311 + $0x90] sm:$0xff]
      %v2837 = vld [vmem:[%s311 + $0x98] sm:$0xff]
      %v2838 = vld [vmem:[%s311 + $0xa8] sm:$0xff]
      %v2839 = vld [vmem:[%s311 + $0xb0] sm:$0xff]
      %v2840 = vld [vmem:[%s311 + $0xc0] sm:$0xff]
      %v2841 = vld [vmem:[%s311 + $0xc8] sm:$0xff]
      %v2842 = vld [vmem:[%s311 + $0xd8] sm:$0xff]
      %v2843 = vld [vmem:[%s311 + $0xe0] sm:$0xff]
      %v2844 = vld [vmem:[%s311 + $0xf0] sm:$0xff]
      %v2845 = vld [vmem:[%s311 + $0xf8] sm:$0xff]
      %v2846 = vld [vmem:[%s311 + $0x108] sm:$0xff]
      %v2847 = vld [vmem:[%s311 + $0x110] sm:$0xff]
      %v2848 = vld [vmem:[%s311 + $0x120] sm:$0xff]
      %v2849 = vld [vmem:[%s311 + $0x128] sm:$0xff]
      %v2850 = vld [vmem:[%s311 + $0x138] sm:$0xff]
      %v2851 = vld [vmem:[%s311 + $0x140] sm:$0xff]
      %v2852 = vld [vmem:[%s311 + $0x150] sm:$0xff]
      %v2853 = vld [vmem:[%s311 + $0x158] sm:$0xff]
      %v2854 = vld [vmem:[%s311 + $0x168] sm:$0xff]
      %v2855 = vld [vmem:[%s311 + $0x170] sm:$0xff]
      %v2856 = vld [vmem:[%s311 + $0x1] sm:$0xff]
      %v2857 = vld [vmem:[%s311 + $0x9] sm:$0xff]
      %v2858 = vld [vmem:[%s311 + $0x19] sm:$0xff]
      %v2859 = vld [vmem:[%s311 + $0x21] sm:$0xff]
      %v2860 = vld [vmem:[%s311 + $0x31] sm:$0xff]
      %v2861 = vld [vmem:[%s311 + $0x39] sm:$0xff]
      %v2862 = vld [vmem:[%s311 + $0x49] sm:$0xff]
      %v2863 = vld [vmem:[%s311 + $0x51] sm:$0xff]
      %v2864 = vld [vmem:[%s311 + $0x61] sm:$0xff]
      %v2865 = vld [vmem:[%s311 + $0x69] sm:$0xff]
      %v2866 = vld [vmem:[%s311 + $0x79] sm:$0xff]
      %v2867 = vld [vmem:[%s311 + $0x81] sm:$0xff]
      %v2868 = vld [vmem:[%s311 + $0x91] sm:$0xff]
      %v2869 = vld [vmem:[%s311 + $0x99] sm:$0xff]
      %v2870 = vld [vmem:[%s311 + $0xa9] sm:$0xff]
      %v2871 = vld [vmem:[%s311 + $0xb1] sm:$0xff]
      %v2872 = vld [vmem:[%s311 + $0xc1] sm:$0xff]
      %v2873 = vld [vmem:[%s311 + $0xc9] sm:$0xff]
      %v2874 = vld [vmem:[%s311 + $0xd9] sm:$0xff]
      %v2875 = vld [vmem:[%s311 + $0xe1] sm:$0xff]
      %v2876 = vld [vmem:[%s311 + $0xf1] sm:$0xff]
      %v2877 = vld [vmem:[%s311 + $0xf9] sm:$0xff]
      %v2878 = vld [vmem:[%s311 + $0x109] sm:$0xff]
      %v2879 = vld [vmem:[%s311 + $0x111] sm:$0xff]
      %v2880 = vld [vmem:[%s311 + $0x121] sm:$0xff]
      %v2881 = vld [vmem:[%s311 + $0x129] sm:$0xff]
      %v2882 = vld [vmem:[%s311 + $0x139] sm:$0xff]
      %v2883 = vld [vmem:[%s311 + $0x141] sm:$0xff]
      %v2884 = vld [vmem:[%s311 + $0x151] sm:$0xff]
      %v2885 = vld [vmem:[%s311 + $0x159] sm:$0xff]
      %v2886 = vld [vmem:[%s311 + $0x169] sm:$0xff]
      %v2887 = vld [vmem:[%s311 + $0x171] sm:$0xff]
      %v2888 = vld [vmem:[%s311 + $0x2] sm:$0xff]
      %v2889 = vld [vmem:[%s311 + $0xa] sm:$0xff]
      %v2890 = vld [vmem:[%s311 + $0x1a] sm:$0xff]
      %v2891 = vld [vmem:[%s311 + $0x22] sm:$0xff]
      %v2892 = vld [vmem:[%s311 + $0x32] sm:$0xff]
      %v2893 = vld [vmem:[%s311 + $0x3a] sm:$0xff]
      %v2894 = vld [vmem:[%s311 + $0x4a] sm:$0xff]
      %v2895 = vld [vmem:[%s311 + $0x52] sm:$0xff]
      %v2896 = vld [vmem:[%s311 + $0x62] sm:$0xff]
      %v2897 = vld [vmem:[%s311 + $0x6a] sm:$0xff]
      %v2898 = vld [vmem:[%s311 + $0x7a] sm:$0xff]
      %v2899 = vld [vmem:[%s311 + $0x82] sm:$0xff]
      %v2900 = vld [vmem:[%s311 + $0x92] sm:$0xff]
      %v2901 = vld [vmem:[%s311 + $0x9a] sm:$0xff]
      %v2902 = vld [vmem:[%s311 + $0xaa] sm:$0xff]
      %v2903 = vld [vmem:[%s311 + $0xb2] sm:$0xff]
      %v2904 = vld [vmem:[%s311 + $0xc2] sm:$0xff]
      %v2905 = vld [vmem:[%s311 + $0xca] sm:$0xff]
      %v2906 = vld [vmem:[%s311 + $0xda] sm:$0xff]
      %v2907 = vld [vmem:[%s311 + $0xe2] sm:$0xff]
      %v2908 = vld [vmem:[%s311 + $0xf2] sm:$0xff]
      %v2909 = vld [vmem:[%s311 + $0xfa] sm:$0xff]
      %v2910 = vld [vmem:[%s311 + $0x10a] sm:$0xff]
      %v2911 = vld [vmem:[%s311 + $0x112] sm:$0xff]
      %v2912 = vld [vmem:[%s311 + $0x122] sm:$0xff]
      %v2913 = vld [vmem:[%s311 + $0x12a] sm:$0xff]
      %v2914 = vld [vmem:[%s311 + $0x13a] sm:$0xff]
      %v2915 = vld [vmem:[%s311 + $0x142] sm:$0xff]
      %v2916 = vld [vmem:[%s311 + $0x152] sm:$0xff]
      %v2917 = vld [vmem:[%s311 + $0x15a] sm:$0xff]
      %v2918 = vld [vmem:[%s311 + $0x16a] sm:$0xff]
      %v2919 = vld [vmem:[%s311 + $0x172] sm:$0xff]
      %v2920 = vld [vmem:[%s615] sm:$0xff]
      %v2921 = vld [vmem:[%s615 + $0x8] sm:$0xff]
      %v2922 = vld [vmem:[%s615 + $0x18] sm:$0xff]
      %v2923 = vld [vmem:[%s615 + $0x20] sm:$0xff]
      %v2924 = vld [vmem:[%s615 + $0x30] sm:$0xff]
      %v2925 = vld [vmem:[%s615 + $0x38] sm:$0xff]
      %v2926 = vld [vmem:[%s615 + $0x48] sm:$0xff]
      %v2927 = vld [vmem:[%s615 + $0x50] sm:$0xff]
      %v2928 = vld [vmem:[%s615 + $0x60] sm:$0xff]
      %v2929 = vld [vmem:[%s615 + $0x68] sm:$0xff]
      %v2930 = vld [vmem:[%s615 + $0x78] sm:$0xff]
      %v2931 = vld [vmem:[%s615 + $0x80] sm:$0xff]
      %v2932 = vld [vmem:[%s615 + $0x90] sm:$0xff]
      %v2933 = vld [vmem:[%s615 + $0x98] sm:$0xff]
      %v2934 = vld [vmem:[%s615 + $0xa8] sm:$0xff]
      %v2935 = vld [vmem:[%s615 + $0xb0] sm:$0xff]
      %v2936 = vld [vmem:[%s615 + $0xc0] sm:$0xff]
      %v2937 = vld [vmem:[%s615 + $0xc8] sm:$0xff]
      %v2938 = vld [vmem:[%s615 + $0xd8] sm:$0xff]
      %v2939 = vld [vmem:[%s615 + $0xe0] sm:$0xff]
      %v2940 = vld [vmem:[%s615 + $0xf0] sm:$0xff]
      %v2941 = vld [vmem:[%s615 + $0xf8] sm:$0xff]
      %v2942 = vld [vmem:[%s615 + $0x108] sm:$0xff]
      %v2943 = vld [vmem:[%s615 + $0x110] sm:$0xff]
      %v2944 = vld [vmem:[%s615 + $0x120] sm:$0xff]
      %v2945 = vld [vmem:[%s615 + $0x128] sm:$0xff]
      %v2946 = vld [vmem:[%s615 + $0x138] sm:$0xff]
      %v2947 = vld [vmem:[%s615 + $0x140] sm:$0xff]
      %v2948 = vld [vmem:[%s615 + $0x150] sm:$0xff]
      %v2949 = vld [vmem:[%s615 + $0x158] sm:$0xff]
      %v2950 = vld [vmem:[%s615 + $0x168] sm:$0xff]
      %v2951 = vld [vmem:[%s615 + $0x170] sm:$0xff]
      %v2952 = vld [vmem:[%s615 + $0x1] sm:$0xff]
      %v2953 = vld [vmem:[%s615 + $0x9] sm:$0xff]
      %v2954 = vld [vmem:[%s615 + $0x19] sm:$0xff]
      %v2955 = vld [vmem:[%s615 + $0x21] sm:$0xff]
      %v2956 = vld [vmem:[%s615 + $0x31] sm:$0xff]
      %v2957 = vld [vmem:[%s615 + $0x39] sm:$0xff]
      %v2958 = vld [vmem:[%s615 + $0x49] sm:$0xff]
      %v2959 = vld [vmem:[%s615 + $0x51] sm:$0xff]
      %v2960 = vld [vmem:[%s615 + $0x61] sm:$0xff]
      %v2961 = vld [vmem:[%s615 + $0x69] sm:$0xff]
      %v2962 = vld [vmem:[%s615 + $0x79] sm:$0xff]
      %v2963 = vld [vmem:[%s615 + $0x81] sm:$0xff]
      %v2964 = vld [vmem:[%s615 + $0x91] sm:$0xff]
      %v2965 = vld [vmem:[%s615 + $0x99] sm:$0xff]
      %v2966 = vld [vmem:[%s615 + $0xa9] sm:$0xff]
      %v2967 = vld [vmem:[%s615 + $0xb1] sm:$0xff]
      %v2968 = vld [vmem:[%s615 + $0xc1] sm:$0xff]
      %v2969 = vld [vmem:[%s615 + $0xc9] sm:$0xff]
      %v2970 = vld [vmem:[%s615 + $0xd9] sm:$0xff]
      %v2971 = vld [vmem:[%s615 + $0xe1] sm:$0xff]
      %v2972 = vld [vmem:[%s615 + $0xf1] sm:$0xff]
      %v2973 = vld [vmem:[%s615 + $0xf9] sm:$0xff]
      %v2974 = vld [vmem:[%s615 + $0x109] sm:$0xff]
      %v2975 = vld [vmem:[%s615 + $0x111] sm:$0xff]
      %v2976 = vld [vmem:[%s615 + $0x121] sm:$0xff]
      %v2977 = vld [vmem:[%s615 + $0x129] sm:$0xff]
      %v2978 = vld [vmem:[%s615 + $0x139] sm:$0xff]
      %v2979 = vld [vmem:[%s615 + $0x141] sm:$0xff]
      %v2980 = vld [vmem:[%s615 + $0x151] sm:$0xff]
      %v2981 = vld [vmem:[%s615 + $0x159] sm:$0xff]
      %v2982 = vld [vmem:[%s615 + $0x169] sm:$0xff]
      %v2983 = vld [vmem:[%s615 + $0x171] sm:$0xff]
      %v2984 = vld [vmem:[%s615 + $0x2] sm:$0xff]
      %v2985 = vld [vmem:[%s615 + $0xa] sm:$0xff]
      %v2986 = vld [vmem:[%s615 + $0x1a] sm:$0xff]
      %v2987 = vld [vmem:[%s615 + $0x22] sm:$0xff]
      %v2988 = vld [vmem:[%s615 + $0x32] sm:$0xff]
      %v2989 = vld [vmem:[%s615 + $0x3a] sm:$0xff]
      %v2990 = vld [vmem:[%s615 + $0x4a] sm:$0xff]
      %v2991 = vld [vmem:[%s615 + $0x52] sm:$0xff]
      %v2992 = vld [vmem:[%s615 + $0x62] sm:$0xff]
      %v2993 = vld [vmem:[%s615 + $0x6a] sm:$0xff]
      %v2994 = vld [vmem:[%s615 + $0x7a] sm:$0xff]
      %v2995 = vld [vmem:[%s615 + $0x82] sm:$0xff]
      %v2996 = vld [vmem:[%s615 + $0x92] sm:$0xff]
      %v2997 = vld [vmem:[%s615 + $0x9a] sm:$0xff]
      %v2998 = vld [vmem:[%s615 + $0xaa] sm:$0xff]
      %v2999 = vld [vmem:[%s615 + $0xb2] sm:$0xff]
      %v3000 = vld [vmem:[%s615 + $0xc2] sm:$0xff]
      %v3001 = vld [vmem:[%s615 + $0xca] sm:$0xff]
      %v3002 = vld [vmem:[%s615 + $0xda] sm:$0xff]
      %v3003 = vld [vmem:[%s615 + $0xe2] sm:$0xff]
      %v3004 = vld [vmem:[%s615 + $0xf2] sm:$0xff]
      %v3005 = vld [vmem:[%s615 + $0xfa] sm:$0xff]
      %v3006 = vld [vmem:[%s615 + $0x10a] sm:$0xff]
      %v3007 = vld [vmem:[%s615 + $0x112] sm:$0xff]
      %v3008 = vld [vmem:[%s615 + $0x122] sm:$0xff]
      %v3009 = vld [vmem:[%s615 + $0x12a] sm:$0xff]
      %v3010 = vld [vmem:[%s615 + $0x13a] sm:$0xff]
      %v3011 = vld [vmem:[%s615 + $0x142] sm:$0xff]
      %v3012 = vld [vmem:[%s615 + $0x152] sm:$0xff]
      %v3013 = vld [vmem:[%s615 + $0x15a] sm:$0xff]
      %v3014 = vld [vmem:[%s615 + $0x16a] sm:$0xff]
      %v3015 = vld [vmem:[%s615 + $0x172] sm:$0xff]
      %3048 = vrot.lane.b32.xlu0 %v2760, 4
      %v3049 = vpop.permute.xlu0 %3048
      %3050 = vrot.lane.b32.xlu0 %v2761, 4
      %v3051 = vpop.permute.xlu0 %3050
      %3052 = vrot.lane.b32.xlu0 %v2762, 4
      %v3053 = vpop.permute.xlu0 %3052
      %3054 = vrot.lane.b32.xlu0 %v2763, 4
      %v3055 = vpop.permute.xlu0 %3054
      %3056 = vrot.lane.b32.xlu0 %v2764, 4
      %v3057 = vpop.permute.xlu0 %3056
      %3058 = vrot.lane.b32.xlu0 %v2765, 4
      %v3059 = vpop.permute.xlu0 %3058
      %3060 = vrot.lane.b32.xlu0 %v2766, 4
      %v3061 = vpop.permute.xlu0 %3060
      %3062 = vrot.lane.b32.xlu0 %v2767, 4
      %v3063 = vpop.permute.xlu0 %3062
      %3064 = vrot.lane.b32.xlu0 %v2768, 4
      %v3065 = vpop.permute.xlu0 %3064
      %3066 = vrot.lane.b32.xlu0 %v2769, 4
      %v3067 = vpop.permute.xlu0 %3066
      %3068 = vrot.lane.b32.xlu0 %v2770, 4
      %v3069 = vpop.permute.xlu0 %3068
      %3070 = vrot.lane.b32.xlu0 %v2771, 4
      %v3071 = vpop.permute.xlu0 %3070
      %3072 = vrot.lane.b32.xlu0 %v2772, 4
      %v3073 = vpop.permute.xlu0 %3072
      %3074 = vrot.lane.b32.xlu0 %v2773, 4
      %v3075 = vpop.permute.xlu0 %3074
      %3076 = vrot.lane.b32.xlu0 %v2774, 4
      %v3077 = vpop.permute.xlu0 %3076
      %3078 = vrot.lane.b32.xlu0 %v2775, 4
      %v3079 = vpop.permute.xlu0 %3078
      %3080 = vrot.lane.b32.xlu0 %v2776, 4
      %v3081 = vpop.permute.xlu0 %3080
      %3082 = vrot.lane.b32.xlu0 %v2777, 4
      %v3083 = vpop.permute.xlu0 %3082
      %3084 = vrot.lane.b32.xlu0 %v2778, 4
      %v3085 = vpop.permute.xlu0 %3084
      %3086 = vrot.lane.b32.xlu0 %v2779, 4
      %v3087 = vpop.permute.xlu0 %3086
      %3088 = vrot.lane.b32.xlu0 %v2780, 4
      %v3089 = vpop.permute.xlu0 %3088
      %3090 = vrot.lane.b32.xlu0 %v2781, 4
      %v3091 = vpop.permute.xlu0 %3090
      %3092 = vrot.lane.b32.xlu0 %v2782, 4
      %v3093 = vpop.permute.xlu0 %3092
      %3094 = vrot.lane.b32.xlu0 %v2783, 4
      %v3095 = vpop.permute.xlu0 %3094
      %3096 = vrot.lane.b32.xlu0 %v2784, 4
      %v3097 = vpop.permute.xlu0 %3096
      %3098 = vrot.lane.b32.xlu0 %v2785, 4
      %v3099 = vpop.permute.xlu0 %3098
      %3100 = vrot.lane.b32.xlu0 %v2786, 4
      %v3101 = vpop.permute.xlu0 %3100
      %3102 = vrot.lane.b32.xlu0 %v2787, 4
      %v3103 = vpop.permute.xlu0 %3102
      %3104 = vrot.lane.b32.xlu0 %v2788, 4
      %v3105 = vpop.permute.xlu0 %3104
      %3106 = vrot.lane.b32.xlu0 %v2789, 4
      %v3107 = vpop.permute.xlu0 %3106
      %3108 = vrot.lane.b32.xlu0 %v2790, 4
      %v3109 = vpop.permute.xlu0 %3108
      %3110 = vrot.lane.b32.xlu0 %v2791, 4
      %v3111 = vpop.permute.xlu0 %3110
      %3176 = vrot.lane.b32.xlu0 %v2792, 8
      %v3177 = vpop.permute.xlu0 %3176
      %3178 = vrot.lane.b32.xlu0 %v2793, 8
      %v3179 = vpop.permute.xlu0 %3178
      %3180 = vrot.lane.b32.xlu0 %v2794, 8
      %v3181 = vpop.permute.xlu0 %3180
      %3182 = vrot.lane.b32.xlu0 %v2795, 8
      %v3183 = vpop.permute.xlu0 %3182
      %3184 = vrot.lane.b32.xlu0 %v2796, 8
      %v3185 = vpop.permute.xlu0 %3184
      %3186 = vrot.lane.b32.xlu0 %v2797, 8
      %v3187 = vpop.permute.xlu0 %3186
      %3188 = vrot.lane.b32.xlu0 %v2798, 8
      %v3189 = vpop.permute.xlu0 %3188
      %3190 = vrot.lane.b32.xlu0 %v2799, 8
      %v3191 = vpop.permute.xlu0 %3190
      %3192 = vrot.lane.b32.xlu0 %v2800, 8
      %v3193 = vpop.permute.xlu0 %3192
      %3194 = vrot.lane.b32.xlu0 %v2801, 8
      %v3195 = vpop.permute.xlu0 %3194
      %3196 = vrot.lane.b32.xlu0 %v2802, 8
      %v3197 = vpop.permute.xlu0 %3196
      %3198 = vrot.lane.b32.xlu0 %v2803, 8
      %v3199 = vpop.permute.xlu0 %3198
      %3200 = vrot.lane.b32.xlu0 %v2804, 8
      %v3201 = vpop.permute.xlu0 %3200
      %3202 = vrot.lane.b32.xlu0 %v2805, 8
      %v3203 = vpop.permute.xlu0 %3202
      %3204 = vrot.lane.b32.xlu0 %v2806, 8
      %v3205 = vpop.permute.xlu0 %3204
      %3206 = vrot.lane.b32.xlu0 %v2807, 8
      %v3207 = vpop.permute.xlu0 %3206
      %3208 = vrot.lane.b32.xlu0 %v2808, 8
      %v3209 = vpop.permute.xlu0 %3208
      %3210 = vrot.lane.b32.xlu0 %v2809, 8
      %v3211 = vpop.permute.xlu0 %3210
      %3212 = vrot.lane.b32.xlu0 %v2810, 8
      %v3213 = vpop.permute.xlu0 %3212
      %3214 = vrot.lane.b32.xlu0 %v2811, 8
      %v3215 = vpop.permute.xlu0 %3214
      %3216 = vrot.lane.b32.xlu0 %v2812, 8
      %v3217 = vpop.permute.xlu0 %3216
      %3218 = vrot.lane.b32.xlu0 %v2813, 8
      %v3219 = vpop.permute.xlu0 %3218
      %3220 = vrot.lane.b32.xlu0 %v2814, 8
      %v3221 = vpop.permute.xlu0 %3220
      %3222 = vrot.lane.b32.xlu0 %v2815, 8
      %v3223 = vpop.permute.xlu0 %3222
      %3224 = vrot.lane.b32.xlu0 %v2816, 8
      %v3225 = vpop.permute.xlu0 %3224
      %3226 = vrot.lane.b32.xlu0 %v2817, 8
      %v3227 = vpop.permute.xlu0 %3226
      %3228 = vrot.lane.b32.xlu0 %v2818, 8
      %v3229 = vpop.permute.xlu0 %3228
      %3230 = vrot.lane.b32.xlu0 %v2819, 8
      %v3231 = vpop.permute.xlu0 %3230
      %3232 = vrot.lane.b32.xlu0 %v2820, 8
      %v3233 = vpop.permute.xlu0 %3232
      %3234 = vrot.lane.b32.xlu0 %v2821, 8
      %v3235 = vpop.permute.xlu0 %3234
      %3236 = vrot.lane.b32.xlu0 %v2822, 8
      %v3237 = vpop.permute.xlu0 %3236
      %3238 = vrot.lane.b32.xlu0 %v2823, 8
      %v3239 = vpop.permute.xlu0 %3238
      %3304 = vrot.lane.b32.xlu0 %v2824, 12
      %v3305 = vpop.permute.xlu0 %3304
      %3306 = vrot.lane.b32.xlu0 %v2825, 12
      %v3307 = vpop.permute.xlu0 %3306
      %3308 = vrot.lane.b32.xlu0 %v2826, 12
      %v3309 = vpop.permute.xlu0 %3308
      %3310 = vrot.lane.b32.xlu0 %v2827, 12
      %v3311 = vpop.permute.xlu0 %3310
      %3312 = vrot.lane.b32.xlu0 %v2828, 12
      %v3313 = vpop.permute.xlu0 %3312
      %3314 = vrot.lane.b32.xlu0 %v2829, 12
      %v3315 = vpop.permute.xlu0 %3314
      %3316 = vrot.lane.b32.xlu0 %v2830, 12
      %v3317 = vpop.permute.xlu0 %3316
      %3318 = vrot.lane.b32.xlu0 %v2831, 12
      %v3319 = vpop.permute.xlu0 %3318
      %3320 = vrot.lane.b32.xlu0 %v2832, 12
      %v3321 = vpop.permute.xlu0 %3320
      %3322 = vrot.lane.b32.xlu0 %v2833, 12
      %v3323 = vpop.permute.xlu0 %3322
      %3324 = vrot.lane.b32.xlu0 %v2834, 12
      %v3325 = vpop.permute.xlu0 %3324
      %3326 = vrot.lane.b32.xlu0 %v2835, 12
      %v3327 = vpop.permute.xlu0 %3326
      %3328 = vrot.lane.b32.xlu0 %v2836, 12
      %v3329 = vpop.permute.xlu0 %3328
      %3330 = vrot.lane.b32.xlu0 %v2837, 12
      %v3331 = vpop.permute.xlu0 %3330
      %3332 = vrot.lane.b32.xlu0 %v2838, 12
      %v3333 = vpop.permute.xlu0 %3332
      %3334 = vrot.lane.b32.xlu0 %v2839, 12
      %v3335 = vpop.permute.xlu0 %3334
      %3336 = vrot.lane.b32.xlu0 %v2840, 12
      %v3337 = vpop.permute.xlu0 %3336
      %3338 = vrot.lane.b32.xlu0 %v2841, 12
      %v3339 = vpop.permute.xlu0 %3338
      %3340 = vrot.lane.b32.xlu0 %v2842, 12
      %v3341 = vpop.permute.xlu0 %3340
      %3342 = vrot.lane.b32.xlu0 %v2843, 12
      %v3343 = vpop.permute.xlu0 %3342
      %3344 = vrot.lane.b32.xlu0 %v2844, 12
      %v3345 = vpop.permute.xlu0 %3344
      %3346 = vrot.lane.b32.xlu0 %v2845, 12
      %v3347 = vpop.permute.xlu0 %3346
      %3348 = vrot.lane.b32.xlu0 %v2846, 12
      %v3349 = vpop.permute.xlu0 %3348
      %3350 = vrot.lane.b32.xlu0 %v2847, 12
      %v3351 = vpop.permute.xlu0 %3350
      %3352 = vrot.lane.b32.xlu0 %v2848, 12
      %v3353 = vpop.permute.xlu0 %3352
      %3354 = vrot.lane.b32.xlu0 %v2849, 12
      %v3355 = vpop.permute.xlu0 %3354
      %3356 = vrot.lane.b32.xlu0 %v2850, 12
      %v3357 = vpop.permute.xlu0 %3356
      %3358 = vrot.lane.b32.xlu0 %v2851, 12
      %v3359 = vpop.permute.xlu0 %3358
      %3360 = vrot.lane.b32.xlu0 %v2852, 12
      %v3361 = vpop.permute.xlu0 %3360
      %3362 = vrot.lane.b32.xlu0 %v2853, 12
      %v3363 = vpop.permute.xlu0 %3362
      %3364 = vrot.lane.b32.xlu0 %v2854, 12
      %v3365 = vpop.permute.xlu0 %3364
      %3366 = vrot.lane.b32.xlu0 %v2855, 12
      %v3367 = vpop.permute.xlu0 %3366
      %3432 = vrot.lane.b32.xlu0 %v2856, 16
      %v3433 = vpop.permute.xlu0 %3432
      %3434 = vrot.lane.b32.xlu0 %v2857, 16
      %v3435 = vpop.permute.xlu0 %3434
      %3436 = vrot.lane.b32.xlu0 %v2858, 16
      %v3437 = vpop.permute.xlu0 %3436
      %3438 = vrot.lane.b32.xlu0 %v2859, 16
      %v3439 = vpop.permute.xlu0 %3438
      %3440 = vrot.lane.b32.xlu0 %v2860, 16
      %v3441 = vpop.permute.xlu0 %3440
      %3442 = vrot.lane.b32.xlu0 %v2861, 16
      %v3443 = vpop.permute.xlu0 %3442
      %3444 = vrot.lane.b32.xlu0 %v2862, 16
      %v3445 = vpop.permute.xlu0 %3444
      %3446 = vrot.lane.b32.xlu0 %v2863, 16
      %v3447 = vpop.permute.xlu0 %3446
      %3448 = vrot.lane.b32.xlu0 %v2864, 16
      %v3449 = vpop.permute.xlu0 %3448
      %3450 = vrot.lane.b32.xlu0 %v2865, 16
      %v3451 = vpop.permute.xlu0 %3450
      %3452 = vrot.lane.b32.xlu0 %v2866, 16
      %v3453 = vpop.permute.xlu0 %3452
      %3454 = vrot.lane.b32.xlu0 %v2867, 16
      %v3455 = vpop.permute.xlu0 %3454
      %3456 = vrot.lane.b32.xlu0 %v2868, 16
      %v3457 = vpop.permute.xlu0 %3456
      %3458 = vrot.lane.b32.xlu0 %v2869, 16
      %v3459 = vpop.permute.xlu0 %3458
      %3460 = vrot.lane.b32.xlu0 %v2870, 16
      %v3461 = vpop.permute.xlu0 %3460
      %3462 = vrot.lane.b32.xlu0 %v2871, 16
      %v3463 = vpop.permute.xlu0 %3462
      %3464 = vrot.lane.b32.xlu0 %v2872, 16
      %v3465 = vpop.permute.xlu0 %3464
      %3466 = vrot.lane.b32.xlu0 %v2873, 16
      %v3467 = vpop.permute.xlu0 %3466
      %3468 = vrot.lane.b32.xlu0 %v2874, 16
      %v3469 = vpop.permute.xlu0 %3468
      %3470 = vrot.lane.b32.xlu0 %v2875, 16
      %v3471 = vpop.permute.xlu0 %3470
      %3472 = vrot.lane.b32.xlu0 %v2876, 16
      %v3473 = vpop.permute.xlu0 %3472
      %3474 = vrot.lane.b32.xlu0 %v2877, 16
      %v3475 = vpop.permute.xlu0 %3474
      %3476 = vrot.lane.b32.xlu0 %v2878, 16
      %v3477 = vpop.permute.xlu0 %3476
      %3478 = vrot.lane.b32.xlu0 %v2879, 16
      %v3479 = vpop.permute.xlu0 %3478
      %3480 = vrot.lane.b32.xlu0 %v2880, 16
      %v3481 = vpop.permute.xlu0 %3480
      %3482 = vrot.lane.b32.xlu0 %v2881, 16
      %v3483 = vpop.permute.xlu0 %3482
      %3484 = vrot.lane.b32.xlu0 %v2882, 16
      %v3485 = vpop.permute.xlu0 %3484
      %3486 = vrot.lane.b32.xlu0 %v2883, 16
      %v3487 = vpop.permute.xlu0 %3486
      %3488 = vrot.lane.b32.xlu0 %v2884, 16
      %v3489 = vpop.permute.xlu0 %3488
      %3490 = vrot.lane.b32.xlu0 %v2885, 16
      %v3491 = vpop.permute.xlu0 %3490
      %3492 = vrot.lane.b32.xlu0 %v2886, 16
      %v3493 = vpop.permute.xlu0 %3492
      %3494 = vrot.lane.b32.xlu0 %v2887, 16
      %v3495 = vpop.permute.xlu0 %3494
      %3560 = vrot.lane.b32.xlu0 %v2888, 20
      %v3561 = vpop.permute.xlu0 %3560
      %3562 = vrot.lane.b32.xlu0 %v2889, 20
      %v3563 = vpop.permute.xlu0 %3562
      %3564 = vrot.lane.b32.xlu0 %v2890, 20
      %v3565 = vpop.permute.xlu0 %3564
      %3566 = vrot.lane.b32.xlu0 %v2891, 20
      %v3567 = vpop.permute.xlu0 %3566
      %3568 = vrot.lane.b32.xlu0 %v2892, 20
      %v3569 = vpop.permute.xlu0 %3568
      %3570 = vrot.lane.b32.xlu0 %v2893, 20
      %v3571 = vpop.permute.xlu0 %3570
      %3572 = vrot.lane.b32.xlu0 %v2894, 20
      %v3573 = vpop.permute.xlu0 %3572
      %3574 = vrot.lane.b32.xlu0 %v2895, 20
      %v3575 = vpop.permute.xlu0 %3574
      %3576 = vrot.lane.b32.xlu0 %v2896, 20
      %v3577 = vpop.permute.xlu0 %3576
      %3578 = vrot.lane.b32.xlu0 %v2897, 20
      %v3579 = vpop.permute.xlu0 %3578
      %3580 = vrot.lane.b32.xlu0 %v2898, 20
      %v3581 = vpop.permute.xlu0 %3580
      %3582 = vrot.lane.b32.xlu0 %v2899, 20
      %v3583 = vpop.permute.xlu0 %3582
      %3584 = vrot.lane.b32.xlu0 %v2900, 20
      %v3585 = vpop.permute.xlu0 %3584
      %3586 = vrot.lane.b32.xlu0 %v2901, 20
      %v3587 = vpop.permute.xlu0 %3586
      %3588 = vrot.lane.b32.xlu0 %v2902, 20
      %v3589 = vpop.permute.xlu0 %3588
      %3590 = vrot.lane.b32.xlu0 %v2903, 20
      %v3591 = vpop.permute.xlu0 %3590
      %3592 = vrot.lane.b32.xlu0 %v2904, 20
      %v3593 = vpop.permute.xlu0 %3592
      %3594 = vrot.lane.b32.xlu0 %v2905, 20
      %v3595 = vpop.permute.xlu0 %3594
      %3596 = vrot.lane.b32.xlu0 %v2906, 20
      %v3597 = vpop.permute.xlu0 %3596
      %3598 = vrot.lane.b32.xlu0 %v2907, 20
      %v3599 = vpop.permute.xlu0 %3598
      %3600 = vrot.lane.b32.xlu0 %v2908, 20
      %v3601 = vpop.permute.xlu0 %3600
      %3602 = vrot.lane.b32.xlu0 %v2909, 20
      %v3603 = vpop.permute.xlu0 %3602
      %3604 = vrot.lane.b32.xlu0 %v2910, 20
      %v3605 = vpop.permute.xlu0 %3604
      %3606 = vrot.lane.b32.xlu0 %v2911, 20
      %v3607 = vpop.permute.xlu0 %3606
      %3608 = vrot.lane.b32.xlu0 %v2912, 20
      %v3609 = vpop.permute.xlu0 %3608
      %3610 = vrot.lane.b32.xlu0 %v2913, 20
      %v3611 = vpop.permute.xlu0 %3610
      %3612 = vrot.lane.b32.xlu0 %v2914, 20
      %v3613 = vpop.permute.xlu0 %3612
      %3614 = vrot.lane.b32.xlu0 %v2915, 20
      %v3615 = vpop.permute.xlu0 %3614
      %3616 = vrot.lane.b32.xlu0 %v2916, 20
      %v3617 = vpop.permute.xlu0 %3616
      %3618 = vrot.lane.b32.xlu0 %v2917, 20
      %v3619 = vpop.permute.xlu0 %3618
      %3620 = vrot.lane.b32.xlu0 %v2918, 20
      %v3621 = vpop.permute.xlu0 %3620
      %3622 = vrot.lane.b32.xlu0 %v2919, 20
      %v3623 = vpop.permute.xlu0 %3622
      %3688 = vrot.lane.b32.xlu0 %v2920, 24
      %v3689 = vpop.permute.xlu0 %3688
      %3690 = vrot.lane.b32.xlu0 %v2921, 24
      %v3691 = vpop.permute.xlu0 %3690
      %3692 = vrot.lane.b32.xlu0 %v2922, 24
      %v3693 = vpop.permute.xlu0 %3692
      %3694 = vrot.lane.b32.xlu0 %v2923, 24
      %v3695 = vpop.permute.xlu0 %3694
      %3696 = vrot.lane.b32.xlu0 %v2924, 24
      %v3697 = vpop.permute.xlu0 %3696
      %3698 = vrot.lane.b32.xlu0 %v2925, 24
      %v3699 = vpop.permute.xlu0 %3698
      %3700 = vrot.lane.b32.xlu0 %v2926, 24
      %v3701 = vpop.permute.xlu0 %3700
      %3702 = vrot.lane.b32.xlu0 %v2927, 24
      %v3703 = vpop.permute.xlu0 %3702
      %3704 = vrot.lane.b32.xlu0 %v2928, 24
      %v3705 = vpop.permute.xlu0 %3704
      %3706 = vrot.lane.b32.xlu0 %v2929, 24
      %v3707 = vpop.permute.xlu0 %3706
      %3708 = vrot.lane.b32.xlu0 %v2930, 24
      %v3709 = vpop.permute.xlu0 %3708
      %3710 = vrot.lane.b32.xlu0 %v2931, 24
      %v3711 = vpop.permute.xlu0 %3710
      %3712 = vrot.lane.b32.xlu0 %v2932, 24
      %v3713 = vpop.permute.xlu0 %3712
      %3714 = vrot.lane.b32.xlu0 %v2933, 24
      %v3715 = vpop.permute.xlu0 %3714
      %3716 = vrot.lane.b32.xlu0 %v2934, 24
      %v3717 = vpop.permute.xlu0 %3716
      %3718 = vrot.lane.b32.xlu0 %v2935, 24
      %v3719 = vpop.permute.xlu0 %3718
      %3720 = vrot.lane.b32.xlu0 %v2936, 24
      %v3721 = vpop.permute.xlu0 %3720
      %3722 = vrot.lane.b32.xlu0 %v2937, 24
      %v3723 = vpop.permute.xlu0 %3722
      %3724 = vrot.lane.b32.xlu0 %v2938, 24
      %v3725 = vpop.permute.xlu0 %3724
      %3726 = vrot.lane.b32.xlu0 %v2939, 24
      %v3727 = vpop.permute.xlu0 %3726
      %3728 = vrot.lane.b32.xlu0 %v2940, 24
      %v3729 = vpop.permute.xlu0 %3728
      %3730 = vrot.lane.b32.xlu0 %v2941, 24
      %v3731 = vpop.permute.xlu0 %3730
      %3732 = vrot.lane.b32.xlu0 %v2942, 24
      %v3733 = vpop.permute.xlu0 %3732
      %3734 = vrot.lane.b32.xlu0 %v2943, 24
      %v3735 = vpop.permute.xlu0 %3734
      %3736 = vrot.lane.b32.xlu0 %v2944, 24
      %v3737 = vpop.permute.xlu0 %3736
      %3738 = vrot.lane.b32.xlu0 %v2945, 24
      %v3739 = vpop.permute.xlu0 %3738
      %3740 = vrot.lane.b32.xlu0 %v2946, 24
      %v3741 = vpop.permute.xlu0 %3740
      %3742 = vrot.lane.b32.xlu0 %v2947, 24
      %v3743 = vpop.permute.xlu0 %3742
      %3744 = vrot.lane.b32.xlu0 %v2948, 24
      %v3745 = vpop.permute.xlu0 %3744
      %3746 = vrot.lane.b32.xlu0 %v2949, 24
      %v3747 = vpop.permute.xlu0 %3746
      %3748 = vrot.lane.b32.xlu0 %v2950, 24
      %v3749 = vpop.permute.xlu0 %3748
      %3750 = vrot.lane.b32.xlu0 %v2951, 24
      %v3751 = vpop.permute.xlu0 %3750
      %3816 = vrot.lane.b32.xlu0 %v2952, 28
      %v3817 = vpop.permute.xlu0 %3816
      %3818 = vrot.lane.b32.xlu0 %v2953, 28
      %v3819 = vpop.permute.xlu0 %3818
      %3820 = vrot.lane.b32.xlu0 %v2954, 28
      %v3821 = vpop.permute.xlu0 %3820
      %3822 = vrot.lane.b32.xlu0 %v2955, 28
      %v3823 = vpop.permute.xlu0 %3822
      %3824 = vrot.lane.b32.xlu0 %v2956, 28
      %v3825 = vpop.permute.xlu0 %3824
      %3826 = vrot.lane.b32.xlu0 %v2957, 28
      %v3827 = vpop.permute.xlu0 %3826
      %3828 = vrot.lane.b32.xlu0 %v2958, 28
      %v3829 = vpop.permute.xlu0 %3828
      %3830 = vrot.lane.b32.xlu0 %v2959, 28
      %v3831 = vpop.permute.xlu0 %3830
      %3832 = vrot.lane.b32.xlu0 %v2960, 28
      %v3833 = vpop.permute.xlu0 %3832
      %3834 = vrot.lane.b32.xlu0 %v2961, 28
      %v3835 = vpop.permute.xlu0 %3834
      %3836 = vrot.lane.b32.xlu0 %v2962, 28
      %v3837 = vpop.permute.xlu0 %3836
      %3838 = vrot.lane.b32.xlu0 %v2963, 28
      %v3839 = vpop.permute.xlu0 %3838
      %3840 = vrot.lane.b32.xlu0 %v2964, 28
      %v3841 = vpop.permute.xlu0 %3840
      %3842 = vrot.lane.b32.xlu0 %v2965, 28
      %v3843 = vpop.permute.xlu0 %3842
      %3844 = vrot.lane.b32.xlu0 %v2966, 28
      %v3845 = vpop.permute.xlu0 %3844
      %3846 = vrot.lane.b32.xlu0 %v2967, 28
      %v3847 = vpop.permute.xlu0 %3846
      %3848 = vrot.lane.b32.xlu0 %v2968, 28
      %v3849 = vpop.permute.xlu0 %3848
      %3850 = vrot.lane.b32.xlu0 %v2969, 28
      %v3851 = vpop.permute.xlu0 %3850
      %3852 = vrot.lane.b32.xlu0 %v2970, 28
      %v3853 = vpop.permute.xlu0 %3852
      %3854 = vrot.lane.b32.xlu0 %v2971, 28
      %v3855 = vpop.permute.xlu0 %3854
      %3856 = vrot.lane.b32.xlu0 %v2972, 28
      %v3857 = vpop.permute.xlu0 %3856
      %3858 = vrot.lane.b32.xlu0 %v2973, 28
      %v3859 = vpop.permute.xlu0 %3858
      %3860 = vrot.lane.b32.xlu0 %v2974, 28
      %v3861 = vpop.permute.xlu0 %3860
      %3862 = vrot.lane.b32.xlu0 %v2975, 28
      %v3863 = vpop.permute.xlu0 %3862
      %3864 = vrot.lane.b32.xlu0 %v2976, 28
      %v3865 = vpop.permute.xlu0 %3864
      %3866 = vrot.lane.b32.xlu0 %v2977, 28
      %v3867 = vpop.permute.xlu0 %3866
      %3868 = vrot.lane.b32.xlu0 %v2978, 28
      %v3869 = vpop.permute.xlu0 %3868
      %3870 = vrot.lane.b32.xlu0 %v2979, 28
      %v3871 = vpop.permute.xlu0 %3870
      %3872 = vrot.lane.b32.xlu0 %v2980, 28
      %v3873 = vpop.permute.xlu0 %3872
      %3874 = vrot.lane.b32.xlu0 %v2981, 28
      %v3875 = vpop.permute.xlu0 %3874
      %3876 = vrot.lane.b32.xlu0 %v2982, 28
      %v3877 = vpop.permute.xlu0 %3876
      %3878 = vrot.lane.b32.xlu0 %v2983, 28
      %v3879 = vpop.permute.xlu0 %3878
      %3944 = vrot.lane.b32.xlu0 %v2984, 32
      %v3945 = vpop.permute.xlu0 %3944
      %3946 = vrot.lane.b32.xlu0 %v2985, 32
      %v3947 = vpop.permute.xlu0 %3946
      %3948 = vrot.lane.b32.xlu0 %v2986, 32
      %v3949 = vpop.permute.xlu0 %3948
      %3950 = vrot.lane.b32.xlu0 %v2987, 32
      %v3951 = vpop.permute.xlu0 %3950
      %3952 = vrot.lane.b32.xlu0 %v2988, 32
      %v3953 = vpop.permute.xlu0 %3952
      %3954 = vrot.lane.b32.xlu0 %v2989, 32
      %v3955 = vpop.permute.xlu0 %3954
      %3956 = vrot.lane.b32.xlu0 %v2990, 32
      %v3957 = vpop.permute.xlu0 %3956
      %3958 = vrot.lane.b32.xlu0 %v2991, 32
      %v3959 = vpop.permute.xlu0 %3958
      %3960 = vrot.lane.b32.xlu0 %v2992, 32
      %v3961 = vpop.permute.xlu0 %3960
      %3962 = vrot.lane.b32.xlu0 %v2993, 32
      %v3963 = vpop.permute.xlu0 %3962
      %3964 = vrot.lane.b32.xlu0 %v2994, 32
      %v3965 = vpop.permute.xlu0 %3964
      %3966 = vrot.lane.b32.xlu0 %v2995, 32
      %v3967 = vpop.permute.xlu0 %3966
      %3968 = vrot.lane.b32.xlu0 %v2996, 32
      %v3969 = vpop.permute.xlu0 %3968
      %3970 = vrot.lane.b32.xlu0 %v2997, 32
      %v3971 = vpop.permute.xlu0 %3970
      %3972 = vrot.lane.b32.xlu0 %v2998, 32
      %v3973 = vpop.permute.xlu0 %3972
      %3974 = vrot.lane.b32.xlu0 %v2999, 32
      %v3975 = vpop.permute.xlu0 %3974
      %3976 = vrot.lane.b32.xlu0 %v3000, 32
      %v3977 = vpop.permute.xlu0 %3976
      %3978 = vrot.lane.b32.xlu0 %v3001, 32
      %v3979 = vpop.permute.xlu0 %3978
      %3980 = vrot.lane.b32.xlu0 %v3002, 32
      %v3981 = vpop.permute.xlu0 %3980
      %3982 = vrot.lane.b32.xlu0 %v3003, 32
      %v3983 = vpop.permute.xlu0 %3982
      %3984 = vrot.lane.b32.xlu0 %v3004, 32
      %v3985 = vpop.permute.xlu0 %3984
      %3986 = vrot.lane.b32.xlu0 %v3005, 32
      %v3987 = vpop.permute.xlu0 %3986
      %3988 = vrot.lane.b32.xlu0 %v3006, 32
      %v3989 = vpop.permute.xlu0 %3988
      %3990 = vrot.lane.b32.xlu0 %v3007, 32
      %v3991 = vpop.permute.xlu0 %3990
      %3992 = vrot.lane.b32.xlu0 %v3008, 32
      %v3993 = vpop.permute.xlu0 %3992
      %3994 = vrot.lane.b32.xlu0 %v3009, 32
      %v3995 = vpop.permute.xlu0 %3994
      %3996 = vrot.lane.b32.xlu0 %v3010, 32
      %v3997 = vpop.permute.xlu0 %3996
      %3998 = vrot.lane.b32.xlu0 %v3011, 32
      %v3999 = vpop.permute.xlu0 %3998
      %4000 = vrot.lane.b32.xlu0 %v3012, 32
      %v4001 = vpop.permute.xlu0 %4000
      %4002 = vrot.lane.b32.xlu0 %v3013, 32
      %v4003 = vpop.permute.xlu0 %4002
      %4004 = vrot.lane.b32.xlu0 %v3014, 32
      %v4005 = vpop.permute.xlu0 %4004
      %4006 = vrot.lane.b32.xlu0 %v3015, 32
      %v4007 = vpop.permute.xlu0 %4006
      %v4040 = vsel %vm312, %v2728, %v3049
      %v4041 = vsel %vm312, %v2729, %v3051
      %v4042 = vsel %vm312, %v2730, %v3053
      %v4043 = vsel %vm312, %v2731, %v3055
      %v4044 = vsel %vm312, %v2732, %v3057
      %v4045 = vsel %vm312, %v2733, %v3059
      %v4046 = vsel %vm312, %v2734, %v3061
      %v4047 = vsel %vm312, %v2735, %v3063
      %v4048 = vsel %vm312, %v2736, %v3065
      %v4049 = vsel %vm312, %v2737, %v3067
      %v4050 = vsel %vm312, %v2738, %v3069
      %v4051 = vsel %vm312, %v2739, %v3071
      %v4052 = vsel %vm312, %v2740, %v3073
      %v4053 = vsel %vm312, %v2741, %v3075
      %v4054 = vsel %vm312, %v2742, %v3077
      %v4055 = vsel %vm312, %v2743, %v3079
      %v4056 = vsel %vm312, %v2744, %v3081
      %v4057 = vsel %vm312, %v2745, %v3083
      %v4058 = vsel %vm312, %v2746, %v3085
      %v4059 = vsel %vm312, %v2747, %v3087
      %v4060 = vsel %vm312, %v2748, %v3089
      %v4061 = vsel %vm312, %v2749, %v3091
      %v4062 = vsel %vm312, %v2750, %v3093
      %v4063 = vsel %vm312, %v2751, %v3095
      %v4064 = vsel %vm312, %v2752, %v3097
      %v4065 = vsel %vm312, %v2753, %v3099
      %v4066 = vsel %vm312, %v2754, %v3101
      %v4067 = vsel %vm312, %v2755, %v3103
      %v4068 = vsel %vm312, %v2756, %v3105
      %v4069 = vsel %vm312, %v2757, %v3107
      %v4070 = vsel %vm312, %v2758, %v3109
      %v4071 = vsel %vm312, %v2759, %v3111
      %v4072 = vsel %vm1768, %v4040, %v3177
      %v4073 = vsel %vm1768, %v4041, %v3179
      %v4074 = vsel %vm1768, %v4042, %v3181
      %v4075 = vsel %vm1768, %v4043, %v3183
      %v4076 = vsel %vm1768, %v4044, %v3185
      %v4077 = vsel %vm1768, %v4045, %v3187
      %v4078 = vsel %vm1768, %v4046, %v3189
      %v4079 = vsel %vm1768, %v4047, %v3191
      %v4080 = vsel %vm1768, %v4048, %v3193
      %v4081 = vsel %vm1768, %v4049, %v3195
      %v4082 = vsel %vm1768, %v4050, %v3197
      %v4083 = vsel %vm1768, %v4051, %v3199
      %v4084 = vsel %vm1768, %v4052, %v3201
      %v4085 = vsel %vm1768, %v4053, %v3203
      %v4086 = vsel %vm1768, %v4054, %v3205
      %v4087 = vsel %vm1768, %v4055, %v3207
      %v4088 = vsel %vm1768, %v4056, %v3209
      %v4089 = vsel %vm1768, %v4057, %v3211
      %v4090 = vsel %vm1768, %v4058, %v3213
      %v4091 = vsel %vm1768, %v4059, %v3215
      %v4092 = vsel %vm1768, %v4060, %v3217
      %v4093 = vsel %vm1768, %v4061, %v3219
      %v4094 = vsel %vm1768, %v4062, %v3221
      %v4095 = vsel %vm1768, %v4063, %v3223
      %v4096 = vsel %vm1768, %v4064, %v3225
      %v4097 = vsel %vm1768, %v4065, %v3227
      %v4098 = vsel %vm1768, %v4066, %v3229
      %v4099 = vsel %vm1768, %v4067, %v3231
      %v4100 = vsel %vm1768, %v4068, %v3233
      %v4101 = vsel %vm1768, %v4069, %v3235
      %v4102 = vsel %vm1768, %v4070, %v3237
      %v4103 = vsel %vm1768, %v4071, %v3239
      %v4104 = vsel %vm1801, %v4072, %v3305
      %v4105 = vsel %vm1801, %v4073, %v3307
      %v4106 = vsel %vm1801, %v4074, %v3309
      %v4107 = vsel %vm1801, %v4075, %v3311
      %v4108 = vsel %vm1801, %v4076, %v3313
      %v4109 = vsel %vm1801, %v4077, %v3315
      %v4110 = vsel %vm1801, %v4078, %v3317
      %v4111 = vsel %vm1801, %v4079, %v3319
      %v4112 = vsel %vm1801, %v4080, %v3321
      %v4113 = vsel %vm1801, %v4081, %v3323
      %v4114 = vsel %vm1801, %v4082, %v3325
      %v4115 = vsel %vm1801, %v4083, %v3327
      %v4116 = vsel %vm1801, %v4084, %v3329
      %v4117 = vsel %vm1801, %v4085, %v3331
      %v4118 = vsel %vm1801, %v4086, %v3333
      %v4119 = vsel %vm1801, %v4087, %v3335
      %v4120 = vsel %vm1801, %v4088, %v3337
      %v4121 = vsel %vm1801, %v4089, %v3339
      %v4122 = vsel %vm1801, %v4090, %v3341
      %v4123 = vsel %vm1801, %v4091, %v3343
      %v4124 = vsel %vm1801, %v4092, %v3345
      %v4125 = vsel %vm1801, %v4093, %v3347
      %v4126 = vsel %vm1801, %v4094, %v3349
      %v4127 = vsel %vm1801, %v4095, %v3351
      %v4128 = vsel %vm1801, %v4096, %v3353
      %v4129 = vsel %vm1801, %v4097, %v3355
      %v4130 = vsel %vm1801, %v4098, %v3357
      %v4131 = vsel %vm1801, %v4099, %v3359
      %v4132 = vsel %vm1801, %v4100, %v3361
      %v4133 = vsel %vm1801, %v4101, %v3363
      %v4134 = vsel %vm1801, %v4102, %v3365
      %v4135 = vsel %vm1801, %v4103, %v3367
      %v4136 = vsel %vm1834, %v4104, %v3433
      %v4137 = vsel %vm1834, %v4105, %v3435
      %v4138 = vsel %vm1834, %v4106, %v3437
      %v4139 = vsel %vm1834, %v4107, %v3439
      %v4140 = vsel %vm1834, %v4108, %v3441
      %v4141 = vsel %vm1834, %v4109, %v3443
      %v4142 = vsel %vm1834, %v4110, %v3445
      %v4143 = vsel %vm1834, %v4111, %v3447
      %v4144 = vsel %vm1834, %v4112, %v3449
      %v4145 = vsel %vm1834, %v4113, %v3451
      %v4146 = vsel %vm1834, %v4114, %v3453
      %v4147 = vsel %vm1834, %v4115, %v3455
      %v4148 = vsel %vm1834, %v4116, %v3457
      %v4149 = vsel %vm1834, %v4117, %v3459
      %v4150 = vsel %vm1834, %v4118, %v3461
      %v4151 = vsel %vm1834, %v4119, %v3463
      %v4152 = vsel %vm1834, %v4120, %v3465
      %v4153 = vsel %vm1834, %v4121, %v3467
      %v4154 = vsel %vm1834, %v4122, %v3469
      %v4155 = vsel %vm1834, %v4123, %v3471
      %v4156 = vsel %vm1834, %v4124, %v3473
      %v4157 = vsel %vm1834, %v4125, %v3475
      %v4158 = vsel %vm1834, %v4126, %v3477
      %v4159 = vsel %vm1834, %v4127, %v3479
      %v4160 = vsel %vm1834, %v4128, %v3481
      %v4161 = vsel %vm1834, %v4129, %v3483
      %v4162 = vsel %vm1834, %v4130, %v3485
      %v4163 = vsel %vm1834, %v4131, %v3487
      %v4164 = vsel %vm1834, %v4132, %v3489
      %v4165 = vsel %vm1834, %v4133, %v3491
      %v4166 = vsel %vm1834, %v4134, %v3493
      %v4167 = vsel %vm1834, %v4135, %v3495
      %v4168 = vsel %vm1867, %v4136, %v3561
      %v4169 = vsel %vm1867, %v4137, %v3563
      %v4170 = vsel %vm1867, %v4138, %v3565
      %v4171 = vsel %vm1867, %v4139, %v3567
      %v4172 = vsel %vm1867, %v4140, %v3569
      %v4173 = vsel %vm1867, %v4141, %v3571
      %v4174 = vsel %vm1867, %v4142, %v3573
      %v4175 = vsel %vm1867, %v4143, %v3575
      %v4176 = vsel %vm1867, %v4144, %v3577
      %v4177 = vsel %vm1867, %v4145, %v3579
      %v4178 = vsel %vm1867, %v4146, %v3581
      %v4179 = vsel %vm1867, %v4147, %v3583
      %v4180 = vsel %vm1867, %v4148, %v3585
      %v4181 = vsel %vm1867, %v4149, %v3587
      %v4182 = vsel %vm1867, %v4150, %v3589
      %v4183 = vsel %vm1867, %v4151, %v3591
      %v4184 = vsel %vm1867, %v4152, %v3593
      %v4185 = vsel %vm1867, %v4153, %v3595
      %v4186 = vsel %vm1867, %v4154, %v3597
      %v4187 = vsel %vm1867, %v4155, %v3599
      %v4188 = vsel %vm1867, %v4156, %v3601
      %v4189 = vsel %vm1867, %v4157, %v3603
      %v4190 = vsel %vm1867, %v4158, %v3605
      %v4191 = vsel %vm1867, %v4159, %v3607
      %v4192 = vsel %vm1867, %v4160, %v3609
      %v4193 = vsel %vm1867, %v4161, %v3611
      %v4194 = vsel %vm1867, %v4162, %v3613
      %v4195 = vsel %vm1867, %v4163, %v3615
      %v4196 = vsel %vm1867, %v4164, %v3617
      %v4197 = vsel %vm1867, %v4165, %v3619
      %v4198 = vsel %vm1867, %v4166, %v3621
      %v4199 = vsel %vm1867, %v4167, %v3623
      %v4200 = vsel %vm1900, %v4168, %v3689
      %v4201 = vsel %vm1900, %v4169, %v3691
      %v4202 = vsel %vm1900, %v4170, %v3693
      %v4203 = vsel %vm1900, %v4171, %v3695
      %v4204 = vsel %vm1900, %v4172, %v3697
      %v4205 = vsel %vm1900, %v4173, %v3699
      %v4206 = vsel %vm1900, %v4174, %v3701
      %v4207 = vsel %vm1900, %v4175, %v3703
      %v4208 = vsel %vm1900, %v4176, %v3705
      %v4209 = vsel %vm1900, %v4177, %v3707
      %v4210 = vsel %vm1900, %v4178, %v3709
      %v4211 = vsel %vm1900, %v4179, %v3711
      %v4212 = vsel %vm1900, %v4180, %v3713
      %v4213 = vsel %vm1900, %v4181, %v3715
      %v4214 = vsel %vm1900, %v4182, %v3717
      %v4215 = vsel %vm1900, %v4183, %v3719
      %v4216 = vsel %vm1900, %v4184, %v3721
      %v4217 = vsel %vm1900, %v4185, %v3723
      %v4218 = vsel %vm1900, %v4186, %v3725
      %v4219 = vsel %vm1900, %v4187, %v3727
      %v4220 = vsel %vm1900, %v4188, %v3729
      %v4221 = vsel %vm1900, %v4189, %v3731
      %v4222 = vsel %vm1900, %v4190, %v3733
      %v4223 = vsel %vm1900, %v4191, %v3735
      %v4224 = vsel %vm1900, %v4192, %v3737
      %v4225 = vsel %vm1900, %v4193, %v3739
      %v4226 = vsel %vm1900, %v4194, %v3741
      %v4227 = vsel %vm1900, %v4195, %v3743
      %v4228 = vsel %vm1900, %v4196, %v3745
      %v4229 = vsel %vm1900, %v4197, %v3747
      %v4230 = vsel %vm1900, %v4198, %v3749
      %v4231 = vsel %vm1900, %v4199, %v3751
      %v4232 = vsel %vm1933, %v4200, %v3817
      %v4233 = vsel %vm1933, %v4201, %v3819
      %v4234 = vsel %vm1933, %v4202, %v3821
      %v4235 = vsel %vm1933, %v4203, %v3823
      %v4236 = vsel %vm1933, %v4204, %v3825
      %v4237 = vsel %vm1933, %v4205, %v3827
      %v4238 = vsel %vm1933, %v4206, %v3829
      %v4239 = vsel %vm1933, %v4207, %v3831
      %v4240 = vsel %vm1933, %v4208, %v3833
      %v4241 = vsel %vm1933, %v4209, %v3835
      %v4242 = vsel %vm1933, %v4210, %v3837
      %v4243 = vsel %vm1933, %v4211, %v3839
      %v4244 = vsel %vm1933, %v4212, %v3841
      %v4245 = vsel %vm1933, %v4213, %v3843
      %v4246 = vsel %vm1933, %v4214, %v3845
      %v4247 = vsel %vm1933, %v4215, %v3847
      %v4248 = vsel %vm1933, %v4216, %v3849
      %v4249 = vsel %vm1933, %v4217, %v3851
      %v4250 = vsel %vm1933, %v4218, %v3853
      %v4251 = vsel %vm1933, %v4219, %v3855
      %v4252 = vsel %vm1933, %v4220, %v3857
      %v4253 = vsel %vm1933, %v4221, %v3859
      %v4254 = vsel %vm1933, %v4222, %v3861
      %v4255 = vsel %vm1933, %v4223, %v3863
      %v4256 = vsel %vm1933, %v4224, %v3865
      %v4257 = vsel %vm1933, %v4225, %v3867
      %v4258 = vsel %vm1933, %v4226, %v3869
      %v4259 = vsel %vm1933, %v4227, %v3871
      %v4260 = vsel %vm1933, %v4228, %v3873
      %v4261 = vsel %vm1933, %v4229, %v3875
      %v4262 = vsel %vm1933, %v4230, %v3877
      %v4263 = vsel %vm1933, %v4231, %v3879
      %v4264 = vsel %vm1966, %v4232, %v3945
      %v4265 = vsel %vm1966, %v4233, %v3947
      %v4266 = vsel %vm1966, %v4234, %v3949
      %v4267 = vsel %vm1966, %v4235, %v3951
      %v4268 = vsel %vm1966, %v4236, %v3953
      %v4269 = vsel %vm1966, %v4237, %v3955
      %v4270 = vsel %vm1966, %v4238, %v3957
      %v4271 = vsel %vm1966, %v4239, %v3959
      %v4272 = vsel %vm1966, %v4240, %v3961
      %v4273 = vsel %vm1966, %v4241, %v3963
      %v4274 = vsel %vm1966, %v4242, %v3965
      %v4275 = vsel %vm1966, %v4243, %v3967
      %v4276 = vsel %vm1966, %v4244, %v3969
      %v4277 = vsel %vm1966, %v4245, %v3971
      %v4278 = vsel %vm1966, %v4246, %v3973
      %v4279 = vsel %vm1966, %v4247, %v3975
      %v4280 = vsel %vm1966, %v4248, %v3977
      %v4281 = vsel %vm1966, %v4249, %v3979
      %v4282 = vsel %vm1966, %v4250, %v3981
      %v4283 = vsel %vm1966, %v4251, %v3983
      %v4284 = vsel %vm1966, %v4252, %v3985
      %v4285 = vsel %vm1966, %v4253, %v3987
      %v4286 = vsel %vm1966, %v4254, %v3989
      %v4287 = vsel %vm1966, %v4255, %v3991
      %v4288 = vsel %vm1966, %v4256, %v3993
      %v4289 = vsel %vm1966, %v4257, %v3995
      %v4290 = vsel %vm1966, %v4258, %v3997
      %v4291 = vsel %vm1966, %v4259, %v3999
      %v4292 = vsel %vm1966, %v4260, %v4001
      %v4293 = vsel %vm1966, %v4261, %v4003
      %v4294 = vsel %vm1966, %v4262, %v4005
      %v4295 = vsel %vm1966, %v4263, %v4007
      %v4296 = vld [vmem:[%s4] sm:$0xff]
      %v4297 = vld [vmem:[%s4 + $0x8] sm:$0xff]
      %v4298 = vld [vmem:[%s4 + $0x10] sm:$0xff]
      %v4299 = vld [vmem:[%s4 + $0x18] sm:$0xff]
      %v4300 = vld [vmem:[%s4 + $0x20] sm:$0xf]
      %v4302 = vsel %vm2004, %v4264, 0
      %v4305 = vsel %vm2004, %v4265, 0
      %v4308 = vsel %vm2004, %v4266, 0
      %v4311 = vsel %vm2004, %v4267, 0
      %v4314 = vsel %vm2004, %v4268, 0
      %v4317 = vsel %vm2004, %v4269, 0
      %v4320 = vsel %vm2004, %v4270, 0
      %v4323 = vsel %vm2004, %v4271, 0
      %v4326 = vsel %vm2004, %v4272, 0
      %v4329 = vsel %vm2004, %v4273, 0
      %v4332 = vsel %vm2004, %v4274, 0
      %v4335 = vsel %vm2004, %v4275, 0
      %v4338 = vsel %vm2004, %v4276, 0
      %v4341 = vsel %vm2004, %v4277, 0
      %v4344 = vsel %vm2004, %v4278, 0
      %v4347 = vsel %vm2004, %v4279, 0
      %v4350 = vsel %vm2004, %v4280, 0
      %v4353 = vsel %vm2004, %v4281, 0
      %v4356 = vsel %vm2004, %v4282, 0
      %v4359 = vsel %vm2004, %v4283, 0
      %v4362 = vsel %vm2004, %v4284, 0
      %v4365 = vsel %vm2004, %v4285, 0
      %v4368 = vsel %vm2004, %v4286, 0
      %v4371 = vsel %vm2004, %v4287, 0
      %v4374 = vsel %vm2004, %v4288, 0
      %v4377 = vsel %vm2004, %v4289, 0
      %v4380 = vsel %vm2004, %v4290, 0
      %v4383 = vsel %vm2004, %v4291, 0
      %v4386 = vsel %vm2004, %v4292, 0
      %v4389 = vsel %vm2004, %v4293, 0
      %v4392 = vsel %vm2004, %v4294, 0
      %v4395 = vsel %vm2004, %v4295, 0
      %v4398 = vsel %vm2101, %v4300, 0
      %4400 = vmatprep.subr.mxu0 0.0
      %4401 = vmatpush1.msra.mxu0 %v4296
      %4402 = vmatprep.subr.mxu0 0.0
      %4403 = vmatpush1.msra.mxu0 %v4297
      %4404 = vmatprep.subr.mxu0 0.0
      %4405 = vmatpush1.msra.mxu0 %v4298
      %4406 = vmatprep.subr.mxu0 0.0
      %4407 = vmatpush1.msra.mxu0 %v4299
      %4408 = vmatprep.subr.mxu0 0.0
      %4409 = vmatpush1.msra.mxu0 %v4398
      %4410 = vmatprep.subr.mxu0 0.0
      %4411 = vmatpush1.msra.mxu0 0.0
      %4412 = vmatprep.subr.mxu0 0.0
      %4413 = vmatpush1.msra.mxu0 0.0
      %4414 = vmatprep.subr.mxu0 0.0
      %4415 = vmatpush1.msra.mxu0 0.0
      %4416 = vmatprep.subr.mxu0 0.0
      %4417 = vmatpush1.msra.mxu0 0.0
      %4418 = vmatprep.subr.mxu0 0.0
      %4419 = vmatpush1.msra.mxu0 0.0
      %4420 = vmatprep.subr.mxu0 0.0
      %4421 = vmatpush1.msra.mxu0 0.0
      %4422 = vmatprep.subr.mxu0 0.0
      %4423 = vmatpush1.msra.mxu0 0.0
      %4424 = vmatprep.subr.mxu0 0.0
      %4425 = vmatpush1.msra.mxu0 0.0
      %4426 = vmatprep.subr.mxu0 0.0
      %4427 = vmatpush1.msra.mxu0 0.0
      %4428 = vmatprep.subr.mxu0 0.0
      %4429 = vmatpush1.msra.mxu0 0.0
      %4430 = vmatprep.subr.mxu0 0.0
      %4431 = vmatpush1.msra.mxu0 0.0
      %4432 = vmatprep.subr.mxu0 0.0
      %4433 = vmatpush1.msra.mxu0 0.0
      %4434 = vmatprep.subr.mxu0 0.0
      %4435 = vmatpush1.msra.mxu0 0.0
      %4436 = vmatprep.subr.mxu0 0.0
      %4437 = vmatpush1.msra.mxu0 0.0
      %4438 = vmatprep.subr.mxu0 0.0
      %4439 = vmatpush1.msra.mxu0 0.0
      %4440 = vmatprep.subr.mxu0 0.0
      %4441 = vmatpush1.msra.mxu0 0.0
      %4442 = vmatprep.subr.mxu0 0.0
      %4443 = vmatpush1.msra.mxu0 0.0
      %4444 = vmatprep.subr.mxu0 0.0
      %4445 = vmatpush1.msra.mxu0 0.0
      %4446 = vmatprep.subr.mxu0 0.0
      %4447 = vmatpush1.msra.mxu0 0.0
      %4448 = vmatprep.subr.mxu0 0.0
      %4449 = vmatpush1.msra.mxu0 0.0
      %4450 = vmatprep.subr.mxu0 0.0
      %4451 = vmatpush1.msra.mxu0 0.0
      %4452 = vmatprep.subr.mxu0 0.0
      %4453 = vmatpush1.msra.mxu0 0.0
      %4454 = vmatprep.subr.mxu0 0.0
      %4455 = vmatpush1.msra.mxu0 0.0
      %4456 = vmatprep.subr.mxu0 0.0
      %4457 = vmatpush1.msra.mxu0 0.0
      %4458 = vmatprep.subr.mxu0 0.0
      %4459 = vmatpush1.msra.mxu0 0.0
      %4460 = vmatprep.subr.mxu0 0.0
      %4461 = vmatpush1.msra.mxu0 0.0
      %4462 = vmatprep.subr.mxu0 0.0
      %4463 = vmatpush1.msra.mxu0 0.0
      %4464 = vmatprep.mubr.f32.mxu0 0.0
      %4465 = vmatmul.mubr.f32.gmra.mrb[0].mxu0 %v4302
      %v4466 = vpop.f32.mrb[0].mxu0
      %v4467 = vadd.f32 0.0, %v4466
      %v4468 = vpop.f32.mrb[0].mxu0
      %4469 = vmatprep.mubr.f32.mxu0 0.0
      %4470 = vmatmul.mubr.f32.gmra.mrb[0].mxu0 %v4305
      %v4471 = vpop.f32.mrb[0].mxu0
      %v4472 = vadd.f32 0.0, %v4471
      %v4473 = vpop.f32.mrb[0].mxu0
      %4474 = vmatprep.mubr.f32.mxu0 0.0
      %4475 = vmatmul.mubr.f32.gmra.mrb[0].mxu0 %v4308
      %v4476 = vpop.f32.mrb[0].mxu0
      %v4477 = vadd.f32 0.0, %v4476
      %v4478 = vpop.f32.mrb[0].mxu0
      %4479 = vmatprep.mubr.f32.mxu0 0.0
      %4480 = vmatmul.mubr.f32.gmra.mrb[0].mxu0 %v4311
      %v4481 = vpop.f32.mrb[0].mxu0
      %v4482 = vadd.f32 0.0, %v4481
      %v4483 = vpop.f32.mrb[0].mxu0
      %4484 = vmatprep.mubr.f32.mxu0 0.0
      %4485 = vmatmul.mubr.f32.gmra.mrb[0].mxu0 %v4314
      %v4486 = vpop.f32.mrb[0].mxu0
      %v4487 = vadd.f32 0.0, %v4486
      %v4488 = vpop.f32.mrb[0].mxu0
      %4489 = vmatprep.mubr.f32.mxu0 0.0
      %4490 = vmatmul.mubr.f32.gmra.mrb[0].mxu0 %v4317
      %v4491 = vpop.f32.mrb[0].mxu0
      %v4492 = vadd.f32 0.0, %v4491
      %v4493 = vpop.f32.mrb[0].mxu0
      %4494 = vmatprep.mubr.f32.mxu0 0.0
      %4495 = vmatmul.mubr.f32.gmra.mrb[0].mxu0 %v4320
      %v4496 = vpop.f32.mrb[0].mxu0
      %v4497 = vadd.f32 0.0, %v4496
      %v4498 = vpop.f32.mrb[0].mxu0
      %4499 = vmatprep.mubr.f32.mxu0 0.0
      %4500 = vmatmul.mubr.f32.gmra.mrb[0].mxu0 %v4323
      %v4501 = vpop.f32.mrb[0].mxu0
      %v4502 = vadd.f32 0.0, %v4501
      %v4503 = vpop.f32.mrb[0].mxu0
      %4504 = vmatprep.mubr.f32.mxu0 0.0
      %4505 = vmatmul.mubr.f32.gmra.mrb[0].mxu0 %v4326
      %v4506 = vpop.f32.mrb[0].mxu0
      %v4507 = vadd.f32 0.0, %v4506
      %v4508 = vpop.f32.mrb[0].mxu0
      %4509 = vmatprep.mubr.f32.mxu0 0.0
      %4510 = vmatmul.mubr.f32.gmra.mrb[0].mxu0 %v4329
      %v4511 = vpop.f32.mrb[0].mxu0
      %v4512 = vadd.f32 0.0, %v4511
      %v4513 = vpop.f32.mrb[0].mxu0
      %4514 = vmatprep.mubr.f32.mxu0 0.0
      %4515 = vmatmul.mubr.f32.gmra.mrb[0].mxu0 %v4332
      %v4516 = vpop.f32.mrb[0].mxu0
      %v4517 = vadd.f32 0.0, %v4516
      %v4518 = vpop.f32.mrb[0].mxu0
      %4519 = vmatprep.mubr.f32.mxu0 0.0
      %4520 = vmatmul.mubr.f32.gmra.mrb[0].mxu0 %v4335
      %v4521 = vpop.f32.mrb[0].mxu0
      %v4522 = vadd.f32 0.0, %v4521
      %v4523 = vpop.f32.mrb[0].mxu0
      %4524 = vmatprep.mubr.f32.mxu0 0.0
      %4525 = vmatmul.mubr.f32.gmra.mrb[0].mxu0 %v4338
      %v4526 = vpop.f32.mrb[0].mxu0
      %v4527 = vadd.f32 0.0, %v4526
      %v4528 = vpop.f32.mrb[0].mxu0
      %4529 = vmatprep.mubr.f32.mxu0 0.0
      %4530 = vmatmul.mubr.f32.gmra.mrb[0].mxu0 %v4341
      %v4531 = vpop.f32.mrb[0].mxu0
      %v4532 = vadd.f32 0.0, %v4531
      %v4533 = vpop.f32.mrb[0].mxu0
      %4534 = vmatprep.mubr.f32.mxu0 0.0
      %4535 = vmatmul.mubr.f32.gmra.mrb[0].mxu0 %v4344
      %v4536 = vpop.f32.mrb[0].mxu0
      %v4537 = vadd.f32 0.0, %v4536
      %v4538 = vpop.f32.mrb[0].mxu0
      %4539 = vmatprep.mubr.f32.mxu0 0.0
      %4540 = vmatmul.mubr.f32.gmra.mrb[0].mxu0 %v4347
      %v4541 = vpop.f32.mrb[0].mxu0
      %v4542 = vadd.f32 0.0, %v4541
      %v4543 = vpop.f32.mrb[0].mxu0
      %4544 = vmatprep.mubr.f32.mxu0 0.0
      %4545 = vmatmul.mubr.f32.gmra.mrb[0].mxu0 %v4350
      %v4546 = vpop.f32.mrb[0].mxu0
      %v4547 = vadd.f32 0.0, %v4546
      %v4548 = vpop.f32.mrb[0].mxu0
      %4549 = vmatprep.mubr.f32.mxu0 0.0
      %4550 = vmatmul.mubr.f32.gmra.mrb[0].mxu0 %v4353
      %v4551 = vpop.f32.mrb[0].mxu0
      %v4552 = vadd.f32 0.0, %v4551
      %v4553 = vpop.f32.mrb[0].mxu0
      %4554 = vmatprep.mubr.f32.mxu0 0.0
      %4555 = vmatmul.mubr.f32.gmra.mrb[0].mxu0 %v4356
      %v4556 = vpop.f32.mrb[0].mxu0
      %v4557 = vadd.f32 0.0, %v4556
      %v4558 = vpop.f32.mrb[0].mxu0
      %4559 = vmatprep.mubr.f32.mxu0 0.0
      %4560 = vmatmul.mubr.f32.gmra.mrb[0].mxu0 %v4359
      %v4561 = vpop.f32.mrb[0].mxu0
      %v4562 = vadd.f32 0.0, %v4561
      %v4563 = vpop.f32.mrb[0].mxu0
      %4564 = vmatprep.mubr.f32.mxu0 0.0
      %4565 = vmatmul.mubr.f32.gmra.mrb[0].mxu0 %v4362
      %v4566 = vpop.f32.mrb[0].mxu0
      %v4567 = vadd.f32 0.0, %v4566
      %v4568 = vpop.f32.mrb[0].mxu0
      %4569 = vmatprep.mubr.f32.mxu0 0.0
      %4570 = vmatmul.mubr.f32.gmra.mrb[0].mxu0 %v4365
      %v4571 = vpop.f32.mrb[0].mxu0
      %v4572 = vadd.f32 0.0, %v4571
      %v4573 = vpop.f32.mrb[0].mxu0
      %4574 = vmatprep.mubr.f32.mxu0 0.0
      %4575 = vmatmul.mubr.f32.gmra.mrb[0].mxu0 %v4368
      %v4576 = vpop.f32.mrb[0].mxu0
      %v4577 = vadd.f32 0.0, %v4576
      %v4578 = vpop.f32.mrb[0].mxu0
      %4579 = vmatprep.mubr.f32.mxu0 0.0
      %4580 = vmatmul.mubr.f32.gmra.mrb[0].mxu0 %v4371
      %v4581 = vpop.f32.mrb[0].mxu0
      %v4582 = vadd.f32 0.0, %v4581
      %v4583 = vpop.f32.mrb[0].mxu0
      %4584 = vmatprep.mubr.f32.mxu0 0.0
      %4585 = vmatmul.mubr.f32.gmra.mrb[0].mxu0 %v4374
      %v4586 = vpop.f32.mrb[0].mxu0
      %v4587 = vadd.f32 0.0, %v4586
      %v4588 = vpop.f32.mrb[0].mxu0
      %4589 = vmatprep.mubr.f32.mxu0 0.0
      %4590 = vmatmul.mubr.f32.gmra.mrb[0].mxu0 %v4377
      %v4591 = vpop.f32.mrb[0].mxu0
      %v4592 = vadd.f32 0.0, %v4591
      %v4593 = vpop.f32.mrb[0].mxu0
      %4594 = vmatprep.mubr.f32.mxu0 0.0
      %4595 = vmatmul.mubr.f32.gmra.mrb[0].mxu0 %v4380
      %v4596 = vpop.f32.mrb[0].mxu0
      %v4597 = vadd.f32 0.0, %v4596
      %v4598 = vpop.f32.mrb[0].mxu0
      %4599 = vmatprep.mubr.f32.mxu0 0.0
      %4600 = vmatmul.mubr.f32.gmra.mrb[0].mxu0 %v4383
      %v4601 = vpop.f32.mrb[0].mxu0
      %v4602 = vadd.f32 0.0, %v4601
      %v4603 = vpop.f32.mrb[0].mxu0
      %4604 = vmatprep.mubr.f32.mxu0 0.0
      %4605 = vmatmul.mubr.f32.gmra.mrb[0].mxu0 %v4386
      %v4606 = vpop.f32.mrb[0].mxu0
      %v4607 = vadd.f32 0.0, %v4606
      %v4608 = vpop.f32.mrb[0].mxu0
      %4609 = vmatprep.mubr.f32.mxu0 0.0
      %4610 = vmatmul.mubr.f32.gmra.mrb[0].mxu0 %v4389
      %v4611 = vpop.f32.mrb[0].mxu0
      %v4612 = vadd.f32 0.0, %v4611
      %v4613 = vpop.f32.mrb[0].mxu0
      %4614 = vmatprep.mubr.f32.mxu0 0.0
      %4615 = vmatmul.mubr.f32.gmra.mrb[0].mxu0 %v4392
      %v4616 = vpop.f32.mrb[0].mxu0
      %v4617 = vadd.f32 0.0, %v4616
      %v4618 = vpop.f32.mrb[0].mxu0
      %4619 = vmatprep.mubr.f32.mxu0 0.0
      %4620 = vmatmul.mubr.f32.gmra.mrb[0].mxu0 %v4395
      %v4621 = vpop.f32.mrb[0].mxu0
      %v4622 = vadd.f32 0.0, %v4621
      %v4623 = vpop.f32.mrb[0].mxu0
      %4624 = vdwg.mxu0
      %v4625 = vld [vmem:[%s5] sm:$0x1]
      %v4626 = vld [vmem:[%s6] sm:$0x1]
      %v4627 = vsel %vm312, %v4467, 0.0
      %v4628 = vsel %vm312, %v4472, 0.0
      %v4629 = vadd.f32 %v4627, %v4628
      %v4630 = vsel %vm312, %v4477, 0.0
      %v4631 = vadd.f32 %v4629, %v4630
      %v4632 = vsel %vm312, %v4482, 0.0
      %v4633 = vadd.f32 %v4631, %v4632
      %v4634 = vsel %vm312, %v4487, 0.0
      %v4635 = vadd.f32 %v4633, %v4634
      %v4636 = vsel %vm312, %v4492, 0.0
      %v4637 = vadd.f32 %v4635, %v4636
      %v4638 = vsel %vm312, %v4497, 0.0
      %v4639 = vadd.f32 %v4637, %v4638
      %v4640 = vsel %vm312, %v4502, 0.0
      %v4641 = vadd.f32 %v4639, %v4640
      %v4642 = vsel %vm312, %v4507, 0.0
      %v4643 = vadd.f32 %v4641, %v4642
      %v4644 = vsel %vm312, %v4512, 0.0
      %v4645 = vadd.f32 %v4643, %v4644
      %v4646 = vsel %vm312, %v4517, 0.0
      %v4647 = vadd.f32 %v4645, %v4646
      %v4648 = vsel %vm312, %v4522, 0.0
      %v4649 = vadd.f32 %v4647, %v4648
      %v4650 = vsel %vm312, %v4527, 0.0
      %v4651 = vadd.f32 %v4649, %v4650
      %v4652 = vsel %vm312, %v4532, 0.0
      %v4653 = vadd.f32 %v4651, %v4652
      %v4654 = vsel %vm312, %v4537, 0.0
      %v4655 = vadd.f32 %v4653, %v4654
      %v4656 = vsel %vm312, %v4542, 0.0
      %v4657 = vadd.f32 %v4655, %v4656
      %v4658 = vsel %vm312, %v4547, 0.0
      %v4659 = vadd.f32 %v4657, %v4658
      %v4660 = vsel %vm312, %v4552, 0.0
      %v4661 = vadd.f32 %v4659, %v4660
      %v4662 = vsel %vm312, %v4557, 0.0
      %v4663 = vadd.f32 %v4661, %v4662
      %v4664 = vsel %vm312, %v4562, 0.0
      %v4665 = vadd.f32 %v4663, %v4664
      %v4666 = vsel %vm312, %v4567, 0.0
      %v4667 = vadd.f32 %v4665, %v4666
      %v4668 = vsel %vm312, %v4572, 0.0
      %v4669 = vadd.f32 %v4667, %v4668
      %v4670 = vsel %vm312, %v4577, 0.0
      %v4671 = vadd.f32 %v4669, %v4670
      %v4672 = vsel %vm312, %v4582, 0.0
      %v4673 = vadd.f32 %v4671, %v4672
      %v4674 = vsel %vm312, %v4587, 0.0
      %v4675 = vadd.f32 %v4673, %v4674
      %v4676 = vsel %vm312, %v4592, 0.0
      %v4677 = vadd.f32 %v4675, %v4676
      %v4678 = vsel %vm312, %v4597, 0.0
      %v4679 = vadd.f32 %v4677, %v4678
      %v4680 = vsel %vm312, %v4602, 0.0
      %v4681 = vadd.f32 %v4679, %v4680
      %v4682 = vsel %vm312, %v4607, 0.0
      %v4683 = vadd.f32 %v4681, %v4682
      %v4684 = vsel %vm312, %v4612, 0.0
      %v4685 = vadd.f32 %v4683, %v4684
      %v4686 = vsel %vm312, %v4617, 0.0
      %v4687 = vadd.f32 %v4685, %v4686
      %v4688 = vsel %vm312, %v4622, 0.0
      %v4689 = vadd.f32 %v4687, %v4688
      %v4690 = vrot.slane %v4689, 4
      %v4691 = vadd.f32 %v4689, %v4690
      %v4692 = vrot.slane %v4691, 2
      %v4693 = vadd.f32 %v4691, %v4692
      %v4694 = vrot.slane %v4693, 1
      %v4695 = vadd.f32 %v4693, %v4694
      %v4696 = vmul.f32 %v4467, %v4467
      %v4697 = vmul.f32 %v4472, %v4472
      %v4698 = vmul.f32 %v4477, %v4477
      %v4699 = vmul.f32 %v4482, %v4482
      %v4700 = vmul.f32 %v4487, %v4487
      %v4701 = vmul.f32 %v4492, %v4492
      %v4702 = vmul.f32 %v4497, %v4497
      %v4703 = vmul.f32 %v4502, %v4502
      %v4704 = vmul.f32 %v4507, %v4507
      %v4705 = vmul.f32 %v4512, %v4512
      %v4706 = vmul.f32 %v4517, %v4517
      %v4707 = vmul.f32 %v4522, %v4522
      %v4708 = vmul.f32 %v4527, %v4527
      %v4709 = vmul.f32 %v4532, %v4532
      %v4710 = vmul.f32 %v4537, %v4537
      %v4711 = vmul.f32 %v4542, %v4542
      %v4712 = vmul.f32 %v4547, %v4547
      %v4713 = vmul.f32 %v4552, %v4552
      %v4714 = vmul.f32 %v4557, %v4557
      %v4715 = vmul.f32 %v4562, %v4562
      %v4716 = vmul.f32 %v4567, %v4567
      %v4717 = vmul.f32 %v4572, %v4572
      %v4718 = vmul.f32 %v4577, %v4577
      %v4719 = vmul.f32 %v4582, %v4582
      %v4720 = vmul.f32 %v4587, %v4587
      %v4721 = vmul.f32 %v4592, %v4592
      %v4722 = vmul.f32 %v4597, %v4597
      %v4723 = vmul.f32 %v4602, %v4602
      %v4724 = vmul.f32 %v4607, %v4607
      %v4725 = vmul.f32 %v4612, %v4612
      %v4726 = vmul.f32 %v4617, %v4617
      %v4727 = vmul.f32 %v4622, %v4622
      %v4728 = vsel %vm312, %v4696, 0.0
      %v4729 = vsel %vm312, %v4697, 0.0
      %v4730 = vadd.f32 %v4728, %v4729
      %v4731 = vsel %vm312, %v4698, 0.0
      %v4732 = vadd.f32 %v4730, %v4731
      %v4733 = vsel %vm312, %v4699, 0.0
      %v4734 = vadd.f32 %v4732, %v4733
      %v4735 = vsel %vm312, %v4700, 0.0
      %v4736 = vadd.f32 %v4734, %v4735
      %v4737 = vsel %vm312, %v4701, 0.0
      %v4738 = vadd.f32 %v4736, %v4737
      %v4739 = vsel %vm312, %v4702, 0.0
      %v4740 = vadd.f32 %v4738, %v4739
      %v4741 = vsel %vm312, %v4703, 0.0
      %v4742 = vadd.f32 %v4740, %v4741
      %v4743 = vsel %vm312, %v4704, 0.0
      %v4744 = vadd.f32 %v4742, %v4743
      %v4745 = vsel %vm312, %v4705, 0.0
      %v4746 = vadd.f32 %v4744, %v4745
      %v4747 = vsel %vm312, %v4706, 0.0
      %v4748 = vadd.f32 %v4746, %v4747
      %v4749 = vsel %vm312, %v4707, 0.0
      %v4750 = vadd.f32 %v4748, %v4749
      %v4751 = vsel %vm312, %v4708, 0.0
      %v4752 = vadd.f32 %v4750, %v4751
      %v4753 = vsel %vm312, %v4709, 0.0
      %v4754 = vadd.f32 %v4752, %v4753
      %v4755 = vsel %vm312, %v4710, 0.0
      %v4756 = vadd.f32 %v4754, %v4755
      %v4757 = vsel %vm312, %v4711, 0.0
      %v4758 = vadd.f32 %v4756, %v4757
      %v4759 = vsel %vm312, %v4712, 0.0
      %v4760 = vadd.f32 %v4758, %v4759
      %v4761 = vsel %vm312, %v4713, 0.0
      %v4762 = vadd.f32 %v4760, %v4761
      %v4763 = vsel %vm312, %v4714, 0.0
      %v4764 = vadd.f32 %v4762, %v4763
      %v4765 = vsel %vm312, %v4715, 0.0
      %v4766 = vadd.f32 %v4764, %v4765
      %v4767 = vsel %vm312, %v4716, 0.0
      %v4768 = vadd.f32 %v4766, %v4767
      %v4769 = vsel %vm312, %v4717, 0.0
      %v4770 = vadd.f32 %v4768, %v4769
      %v4771 = vsel %vm312, %v4718, 0.0
      %v4772 = vadd.f32 %v4770, %v4771
      %v4773 = vsel %vm312, %v4719, 0.0
      %v4774 = vadd.f32 %v4772, %v4773
      %v4775 = vsel %vm312, %v4720, 0.0
      %v4776 = vadd.f32 %v4774, %v4775
      %v4777 = vsel %vm312, %v4721, 0.0
      %v4778 = vadd.f32 %v4776, %v4777
      %v4779 = vsel %vm312, %v4722, 0.0
      %v4780 = vadd.f32 %v4778, %v4779
      %v4781 = vsel %vm312, %v4723, 0.0
      %v4782 = vadd.f32 %v4780, %v4781
      %v4783 = vsel %vm312, %v4724, 0.0
      %v4784 = vadd.f32 %v4782, %v4783
      %v4785 = vsel %vm312, %v4725, 0.0
      %v4786 = vadd.f32 %v4784, %v4785
      %v4787 = vsel %vm312, %v4726, 0.0
      %v4788 = vadd.f32 %v4786, %v4787
      %v4789 = vsel %vm312, %v4727, 0.0
      %v4790 = vadd.f32 %v4788, %v4789
      %v4791 = vrot.slane %v4790, 4
      %v4792 = vadd.f32 %v4790, %v4791
      %v4793 = vrot.slane %v4792, 2
      %v4794 = vadd.f32 %v4792, %v4793
      %v4795 = vrot.slane %v4794, 1
      %v4796 = vadd.f32 %v4794, %v4795
      %v4797 = vmul.f32 %v4695, 0.00390625
      %v4798 = vmul.f32 %v4796, 0.00390625
      %v4799 = vmul.f32 %v4797, %v4797
      %v4800 = vsub.f32 %v4798, %v4799
      %v4801 = vmax.f32 %v4800, 0.0
      %v4802 = vadd.f32 %v4801, 1e-05
      %v4803 = vrsqrt.pop %v4802
      %v4804 = vmul.f32 %v4625, %v4803
      %v4805 = vmul.f32 %v4797, %v4804
      %v4806 = vsub.f32 %v4626, %v4805
      %v4808 = vlaneseq
      %v4809 = vshrl.u32 %v4808, 7
      %v4810 = vsub.s32 0, %v4809
      %v4811 = vrot.slane %v4804, %v4810
      %v4813 = vmul.f32 %v4467, %v4811
      %v4814 = vmul.f32 %v4472, %v4811
      %v4815 = vmul.f32 %v4477, %v4811
      %v4816 = vmul.f32 %v4482, %v4811
      %v4817 = vmul.f32 %v4487, %v4811
      %v4818 = vmul.f32 %v4492, %v4811
      %v4819 = vmul.f32 %v4497, %v4811
      %v4820 = vmul.f32 %v4502, %v4811
      %v4821 = vmul.f32 %v4507, %v4811
      %v4822 = vmul.f32 %v4512, %v4811
      %v4823 = vmul.f32 %v4517, %v4811
      %v4824 = vmul.f32 %v4522, %v4811
      %v4825 = vmul.f32 %v4527, %v4811
      %v4826 = vmul.f32 %v4532, %v4811
      %v4827 = vmul.f32 %v4537, %v4811
      %v4828 = vmul.f32 %v4542, %v4811
      %v4829 = vmul.f32 %v4547, %v4811
      %v4830 = vmul.f32 %v4552, %v4811
      %v4831 = vmul.f32 %v4557, %v4811
      %v4832 = vmul.f32 %v4562, %v4811
      %v4833 = vmul.f32 %v4567, %v4811
      %v4834 = vmul.f32 %v4572, %v4811
      %v4835 = vmul.f32 %v4577, %v4811
      %v4836 = vmul.f32 %v4582, %v4811
      %v4837 = vmul.f32 %v4587, %v4811
      %v4838 = vmul.f32 %v4592, %v4811
      %v4839 = vmul.f32 %v4597, %v4811
      %v4840 = vmul.f32 %v4602, %v4811
      %v4841 = vmul.f32 %v4607, %v4811
      %v4842 = vmul.f32 %v4612, %v4811
      %v4843 = vmul.f32 %v4617, %v4811
      %v4844 = vmul.f32 %v4622, %v4811
      %v4846 = vlaneseq
      %v4847 = vshrl.u32 %v4846, 7
      %v4848 = vsub.s32 0, %v4847
      %v4849 = vrot.slane %v4806, %v4848
      %v4851 = vadd.f32 %v4813, %v4849
      %v4852 = vadd.f32 %v4814, %v4849
      %v4853 = vadd.f32 %v4815, %v4849
      %v4854 = vadd.f32 %v4816, %v4849
      %v4855 = vadd.f32 %v4817, %v4849
      %v4856 = vadd.f32 %v4818, %v4849
      %v4857 = vadd.f32 %v4819, %v4849
      %v4858 = vadd.f32 %v4820, %v4849
      %v4859 = vadd.f32 %v4821, %v4849
      %v4860 = vadd.f32 %v4822, %v4849
      %v4861 = vadd.f32 %v4823, %v4849
      %v4862 = vadd.f32 %v4824, %v4849
      %v4863 = vadd.f32 %v4825, %v4849
      %v4864 = vadd.f32 %v4826, %v4849
      %v4865 = vadd.f32 %v4827, %v4849
      %v4866 = vadd.f32 %v4828, %v4849
      %v4867 = vadd.f32 %v4829, %v4849
      %v4868 = vadd.f32 %v4830, %v4849
      %v4869 = vadd.f32 %v4831, %v4849
      %v4870 = vadd.f32 %v4832, %v4849
      %v4871 = vadd.f32 %v4833, %v4849
      %v4872 = vadd.f32 %v4834, %v4849
      %v4873 = vadd.f32 %v4835, %v4849
      %v4874 = vadd.f32 %v4836, %v4849
      %v4875 = vadd.f32 %v4837, %v4849
      %v4876 = vadd.f32 %v4838, %v4849
      %v4877 = vadd.f32 %v4839, %v4849
      %v4878 = vadd.f32 %v4840, %v4849
      %v4879 = vadd.f32 %v4841, %v4849
      %v4880 = vadd.f32 %v4842, %v4849
      %v4881 = vadd.f32 %v4843, %v4849
      %v4882 = vadd.f32 %v4844, %v4849
      %v4883 = vld [vmem:[%s273] sm:$0xff]
      %v4884 = vld [vmem:[%s273 + $0x8] sm:$0xff]
      %v4885 = vld [vmem:[%s273 + $0x10] sm:$0xff]
      %v4886 = vld [vmem:[%s273 + $0x18] sm:$0xff]
      %v4887 = vld [vmem:[%s273 + $0x20] sm:$0xff]
      %v4888 = vld [vmem:[%s273 + $0x28] sm:$0xff]
      %v4889 = vld [vmem:[%s273 + $0x30] sm:$0xff]
      %v4890 = vld [vmem:[%s273 + $0x38] sm:$0xff]
      %v4891 = vld [vmem:[%s273 + $0x40] sm:$0xff]
      %v4892 = vld [vmem:[%s273 + $0x48] sm:$0xff]
      %v4893 = vld [vmem:[%s273 + $0x50] sm:$0xff]
      %v4894 = vld [vmem:[%s273 + $0x58] sm:$0xff]
      %v4895 = vld [vmem:[%s273 + $0x60] sm:$0xff]
      %v4896 = vld [vmem:[%s273 + $0x68] sm:$0xff]
      %v4897 = vld [vmem:[%s273 + $0x70] sm:$0xff]
      %v4898 = vld [vmem:[%s273 + $0x78] sm:$0xff]
      %v4899 = vld [vmem:[%s273 + $0x80] sm:$0xff]
      %v4900 = vld [vmem:[%s273 + $0x88] sm:$0xff]
      %v4901 = vld [vmem:[%s273 + $0x90] sm:$0xff]
      %v4902 = vld [vmem:[%s273 + $0x98] sm:$0xff]
      %v4903 = vld [vmem:[%s273 + $0xa0] sm:$0xff]
      %v4904 = vld [vmem:[%s273 + $0xa8] sm:$0xff]
      %v4905 = vld [vmem:[%s273 + $0xb0] sm:$0xff]
      %v4906 = vld [vmem:[%s273 + $0xb8] sm:$0xff]
      %v4907 = vld [vmem:[%s273 + $0xc0] sm:$0xff]
      %v4908 = vld [vmem:[%s273 + $0xc8] sm:$0xff]
      %v4909 = vld [vmem:[%s273 + $0xd0] sm:$0xff]
      %v4910 = vld [vmem:[%s273 + $0xd8] sm:$0xff]
      %v4911 = vld [vmem:[%s273 + $0xe0] sm:$0xff]
      %v4912 = vld [vmem:[%s273 + $0xe8] sm:$0xff]
      %v4913 = vld [vmem:[%s273 + $0xf0] sm:$0xff]
      %v4914 = vld [vmem:[%s273 + $0xf8] sm:$0xff]
      %v4915 = vadd.f32 %v4851, %v4883
      %v4916 = vadd.f32 %v4852, %v4884
      %v4917 = vadd.f32 %v4853, %v4885
      %v4918 = vadd.f32 %v4854, %v4886
      %v4919 = vadd.f32 %v4855, %v4887
      %v4920 = vadd.f32 %v4856, %v4888
      %v4921 = vadd.f32 %v4857, %v4889
      %v4922 = vadd.f32 %v4858, %v4890
      %v4923 = vadd.f32 %v4859, %v4891
      %v4924 = vadd.f32 %v4860, %v4892
      %v4925 = vadd.f32 %v4861, %v4893
      %v4926 = vadd.f32 %v4862, %v4894
      %v4927 = vadd.f32 %v4863, %v4895
      %v4928 = vadd.f32 %v4864, %v4896
      %v4929 = vadd.f32 %v4865, %v4897
      %v4930 = vadd.f32 %v4866, %v4898
      %v4931 = vadd.f32 %v4867, %v4899
      %v4932 = vadd.f32 %v4868, %v4900
      %v4933 = vadd.f32 %v4869, %v4901
      %v4934 = vadd.f32 %v4870, %v4902
      %v4935 = vadd.f32 %v4871, %v4903
      %v4936 = vadd.f32 %v4872, %v4904
      %v4937 = vadd.f32 %v4873, %v4905
      %v4938 = vadd.f32 %v4874, %v4906
      %v4939 = vadd.f32 %v4875, %v4907
      %v4940 = vadd.f32 %v4876, %v4908
      %v4941 = vadd.f32 %v4877, %v4909
      %v4942 = vadd.f32 %v4878, %v4910
      %v4943 = vadd.f32 %v4879, %v4911
      %v4944 = vadd.f32 %v4880, %v4912
      %v4945 = vadd.f32 %v4881, %v4913
      %v4946 = vadd.f32 %v4882, %v4914
      %4947 = vst.msk [vmem:[%s278] sm:$0xff] %vm312, %v4915
      %4948 = vst.msk [vmem:[%s278 + $0x8] sm:$0xff] %vm312, %v4916
      %4949 = vst.msk [vmem:[%s278 + $0x10] sm:$0xff] %vm312, %v4917
      %4950 = vst.msk [vmem:[%s278 + $0x18] sm:$0xff] %vm312, %v4918
      %4951 = vst.msk [vmem:[%s278 + $0x20] sm:$0xff] %vm312, %v4919
      %4952 = vst.msk [vmem:[%s278 + $0x28] sm:$0xff] %vm312, %v4920
      %4953 = vst.msk [vmem:[%s278 + $0x30] sm:$0xff] %vm312, %v4921
      %4954 = vst.msk [vmem:[%s278 + $0x38] sm:$0xff] %vm312, %v4922
      %4955 = vst.msk [vmem:[%s278 + $0x40] sm:$0xff] %vm312, %v4923
      %4956 = vst.msk [vmem:[%s278 + $0x48] sm:$0xff] %vm312, %v4924
      %4957 = vst.msk [vmem:[%s278 + $0x50] sm:$0xff] %vm312, %v4925
      %4958 = vst.msk [vmem:[%s278 + $0x58] sm:$0xff] %vm312, %v4926
      %4959 = vst.msk [vmem:[%s278 + $0x60] sm:$0xff] %vm312, %v4927
      %4960 = vst.msk [vmem:[%s278 + $0x68] sm:$0xff] %vm312, %v4928
      %4961 = vst.msk [vmem:[%s278 + $0x70] sm:$0xff] %vm312, %v4929
      %4962 = vst.msk [vmem:[%s278 + $0x78] sm:$0xff] %vm312, %v4930
      %4963 = vst.msk [vmem:[%s278 + $0x80] sm:$0xff] %vm312, %v4931
      %4964 = vst.msk [vmem:[%s278 + $0x88] sm:$0xff] %vm312, %v4932
      %4965 = vst.msk [vmem:[%s278 + $0x90] sm:$0xff] %vm312, %v4933
      %4966 = vst.msk [vmem:[%s278 + $0x98] sm:$0xff] %vm312, %v4934
      %4967 = vst.msk [vmem:[%s278 + $0xa0] sm:$0xff] %vm312, %v4935
      %4968 = vst.msk [vmem:[%s278 + $0xa8] sm:$0xff] %vm312, %v4936
      %4969 = vst.msk [vmem:[%s278 + $0xb0] sm:$0xff] %vm312, %v4937
      %4970 = vst.msk [vmem:[%s278 + $0xb8] sm:$0xff] %vm312, %v4938
      %4971 = vst.msk [vmem:[%s278 + $0xc0] sm:$0xff] %vm312, %v4939
      %4972 = vst.msk [vmem:[%s278 + $0xc8] sm:$0xff] %vm312, %v4940
      %4973 = vst.msk [vmem:[%s278 + $0xd0] sm:$0xff] %vm312, %v4941
      %4974 = vst.msk [vmem:[%s278 + $0xd8] sm:$0xff] %vm312, %v4942
      %4975 = vst.msk [vmem:[%s278 + $0xe0] sm:$0xff] %vm312, %v4943
      %4976 = vst.msk [vmem:[%s278 + $0xe8] sm:$0xff] %vm312, %v4944
      %4977 = vst.msk [vmem:[%s278 + $0xf0] sm:$0xff] %vm312, %v4945
      %4978 = vst.msk [vmem:[%s278 + $0xf8] sm:$0xff] %vm312, %v4946
      %p4979 = scmp.lt.s32.totalorder %s18, 1
      %s4980 = scalar_select %p4979, %s18, 1
      %s4981 = smul.addr %s4980, 32
      %s4982 = smul.addr %s4981, 8
      %s4983 = scalar_lea.vmem %s7, %s4982
      // Predicated region
      $region49: #{residual_block_forward.1} parent=47 // pred_check
        %p4984 = pneg %p188
      $region50: #{residual_block_forward.1} parent=47 // pred_check_branch
        %4986 = sbr.rel (%p4984) target = $region52
      $region51: #{residual_block_forward.1} parent=47 // pred_region
        _
      $region52: #{residual_block_forward.1} parent=47 // pred_fallthru
        _
    $region48: #{residual_block_forward.1} parent=5 // pred_fallthru
      _
    %p4987 = scmp.le.s32.totalorder 2, %s13
    // Predicated region
    $region53: #{residual_block_forward.1} parent=5 // pred_check
      %p4988 = pneg %p4987
    $region54: #{residual_block_forward.1} parent=5 // pred_check_branch
      %4990 = sbr.rel (%p4988) target = $region56
    $region55: #{residual_block_forward.1} parent=5 // pred_region
      %s4991 = ssub.s32 %s13, 2
      // Predicated region
      $region57: #{residual_block_forward.1} parent=55 // pred_check
        %p4992 = pneg %p194
      $region58: #{residual_block_forward.1} parent=55 // pred_check_branch
        %4994 = sbr.rel (%p4992) target = $region60
      $region59: #{residual_block_forward.1} parent=55 // pred_region
        %p4995 = scmp.lt.s32.totalorder %s19, 1
        %s4996 = scalar_select %p4995, %s19, 1
        %s4997 = smul.addr %s4996, 32
        %s4998 = smul.addr %s4997, 8
        %s4999 = scalar_lea.vmem %s7, %s4998
      $region60: #{residual_block_forward.1} parent=55 // pred_fallthru
        _
    $region56: #{residual_block_forward.1} parent=5 // pred_fallthru
      _
  $region6: #{residual_block_forward.1} parent=0 // loop_footer
    %s17 = sadd.s32 1, %s13
  $region7: #{residual_block_forward.1} parent=0 // loop_footer_branch
    %12 = sbr.rel target = $region3
  $region8: #{residual_block_forward.1} parent=0 // loop_exit
    _

</llo_original>
